<compile_context>
chip_gen: v7x
topology: tpu7x:2x2x1
jax: 0.10.0
libtpu: 0.0.40
codegen_flags: <defaults>
</compile_context>

<pallas_src>
import functools

import jax
import jax.numpy as jnp
from jax.experimental import pallas as pl
from jax.experimental.pallas import tpu as pltpu


def _round_up(x, m):
    return ((x + m - 1) // m) * m


def _pick_tile(n, candidates):
    for c in candidates:
        if n % c == 0:
            return c
    return n


def _pick_block_t(seq_len, preferred=32):
    """Prefer a block size that divides seq_len (no in-kernel masking)."""
    if seq_len <= 8:
        return 8
    preferred = _round_up(max(preferred, 8), 8)
    for cand in (preferred, 64, 32, 16, 8):
        if seq_len % cand == 0:
            return cand
    return preferred        # ragged last block handled in-kernel


def _vmem_limit(est_bytes):
    # Explicit scoped-VMEM budget: at least 32 MiB (above v5e/v6e defaults),
    # capped at 64 MiB so it is valid on v7x as well.
    return int(min(max(2 * est_bytes, 32 << 20), 64 << 20))


# ----------------------------------------------------------------------------
# Kernel 1: hoisted input projection (all timesteps, both directions).
# ----------------------------------------------------------------------------
def _proj_kernel(x_ref, w_ref, b_ref, o_ref):
    acc = jnp.dot(x_ref[...], w_ref[...], preferred_element_type=jnp.float32)
    o_ref[...] = (acc + b_ref[...]).astype(o_ref.dtype)


def _input_projection(x2d, w, b, out_dtype):
    """x2d: (M, E); w: (2, E, G); b: (2, 1, G) f32 -> (2, M, G) out_dtype."""
    M, E = x2d.shape
    G = w.shape[-1]
    tm = _pick_tile(M, (512, 256, 128, 64, 32, 16, 8))
    tn = _pick_tile(G, (512, 256, 128))

    isz = lambda a: jnp.dtype(a).itemsize
    est = 2 * (tm * E * isz(x2d.dtype) + E * tn * isz(w.dtype)
               + tn * 4 + tm * tn * isz(out_dtype))

    return pl.pallas_call(
        _proj_kernel,
        out_shape=jax.ShapeDtypeStruct((2, M, G), out_dtype),
        grid_spec=pltpu.PrefetchScalarGridSpec(
            num_scalar_prefetch=0,
            # dir outer, N middle, M innermost: the weight/bias blocks stay
            # resident across the whole inner M sweep (no re-fetch per M tile).
            grid=(2, G // tn, M // tm),
            in_specs=[
                pl.BlockSpec((tm, E), lambda d, j, i: (i, 0)),
                pl.BlockSpec((None, E, tn), lambda d, j, i: (d, 0, j)),
                pl.BlockSpec((None, 1, tn), lambda d, j, i: (d, 0, j)),
            ],
            out_specs=pl.BlockSpec((None, tm, tn), lambda d, j, i: (d, i, j)),
        ),
        compiler_params=pltpu.CompilerParams(
            dimension_semantics=("parallel", "parallel", "parallel"),
            vmem_limit_bytes=_vmem_limit(est)),
    )(x2d, w, b)


# ----------------------------------------------------------------------------
# Kernel 2: fused bidirectional LSTM recurrence over precomputed gate streams.
# ----------------------------------------------------------------------------
def _bilstm_kernel(gxf_ref, gxb_ref, whhf_ref, whhb_ref,       # inputs
                   outf_ref, outb_ref, cnf_ref, cnb_ref,        # outputs
                   hf_scr, cf_scr, hb_scr, cb_scr,              # VMEM carries
                   *, hidden_pad, block_t, seq_len, ragged):
    s = pl.program_id(0)
    nblk = pl.num_programs(0)
    H = hidden_pad

    @pl.when(s == 0)
    def _init():
        hf_scr[...] = jnp.zeros_like(hf_scr)
        cf_scr[...] = jnp.zeros_like(cf_scr)
        hb_scr[...] = jnp.zeros_like(hb_scr)
        cb_scr[...] = jnp.zeros_like(cb_scr)

    def cell(gx, h_prev, c_prev, whh_ref):
        # gx already holds x @ W_ih^T + (b_ih + b_hh), stored in compute dtype.
        gates = gx.astype(jnp.float32) + jnp.dot(
            h_prev.astype(whh_ref.dtype), whh_ref[...],
            preferred_element_type=jnp.float32)
        # Gate slices are lane-aligned (H is a multiple of 128).
        i_g = jax.nn.sigmoid(gates[:, 0 * H:1 * H])
        f_g = jax.nn.sigmoid(gates[:, 1 * H:2 * H])
        g_g = jnp.tanh(gates[:, 2 * H:3 * H])
        o_g = jax.nn.sigmoid(gates[:, 3 * H:4 * H])
        c_new = f_g * c_prev + i_g * g_g          # f32 element-wise cell math
        h_new = o_g * jnp.tanh(c_new)
        return h_new, c_new

    def step(j, carry):
        h_f, c_f, h_b, c_b = carry
        jb = block_t - 1 - j                      # reversed in-block index (bwd)
        hf_new, cf_new = cell(gxf_ref[j], h_f, c_f, whhf_ref)
        hb_new, cb_new = cell(gxb_ref[jb], h_b, c_b, whhb_ref)
        if ragged:
            # Right-padded time: freeze the carries on padded steps (forward:
            # tail of last block; backward: head of its processing order).
            t_f = s * block_t + j
            t_b = (nblk - 1 - s) * block_t + jb
            vf = t_f < seq_len
            vb = t_b < seq_len
            hf_new = jnp.where(vf, hf_new, h_f)
            cf_new = jnp.where(vf, cf_new, c_f)
            hb_new = jnp.where(vb, hb_new, h_b)
            cb_new = jnp.where(vb, cb_new, c_b)
        outf_ref[j] = hf_new.astype(outf_ref.dtype)
        outb_ref[jb] = hb_new.astype(outb_ref.dtype)
        return (hf_new, cf_new, hb_new, cb_new)

    unroll = min(8, block_t)
    n_outer = block_t // unroll

    def chunk(o, carry):
        for u in range(unroll):                   # static 8-wide unroll
            carry = step(o * unroll + u, carry)
        return carry

    carry0 = (hf_scr[...], cf_scr[...], hb_scr[...], cb_scr[...])
    if n_outer == 1:
        h_f, c_f, h_b, c_b = chunk(0, carry0)     # fully static small block
    else:
        h_f, c_f, h_b, c_b = jax.lax.fori_loop(0, n_outer, chunk, carry0)

    hf_scr[...] = h_f
    cf_scr[...] = c_f
    hb_scr[...] = h_b
    cb_scr[...] = c_b

    @pl.when(s == nblk - 1)
    def _final():
        cnf_ref[...] = c_f
        cnb_ref[...] = c_b


def _bilstm(gx, whh_f, whh_b, *, hidden_pad, block_t, seq_len, out_dtype):
    """gx: (2, S_pad, B_pad, 4*H_pad) gate streams (dir 0 = fwd, 1 = bwd, both
    stored in original time order).  whh_*: (H_pad, 4*H_pad)."""
    _, S_pad, B_pad, G = gx.shape
    H_pad = hidden_pad
    nblk = S_pad // block_t
    ragged = (S_pad != seq_len)

    kern = functools.partial(_bilstm_kernel, hidden_pad=H_pad, block_t=block_t,
                             seq_len=seq_len, ragged=ragged)

    isz = lambda a: jnp.dtype(a).itemsize
    est = (2 * 2 * block_t * B_pad * G * isz(gx.dtype)            # gate streams
           + 2 * 2 * block_t * B_pad * H_pad * isz(out_dtype)     # h outputs
           + 2 * 2 * H_pad * G * isz(whh_f.dtype)                 # W_hh (x2 buf)
           + (2 * 2 + 4) * B_pad * H_pad * 4)                     # c_n + scratch

    return pl.pallas_call(
        kern,
        out_shape=(jax.ShapeDtypeStruct((S_pad, B_pad, H_pad), out_dtype),
                   jax.ShapeDtypeStruct((S_pad, B_pad, H_pad), out_dtype),
                   jax.ShapeDtypeStruct((B_pad, H_pad), jnp.float32),
                   jax.ShapeDtypeStruct((B_pad, H_pad), jnp.float32)),
        grid_spec=pltpu.PrefetchScalarGridSpec(
            num_scalar_prefetch=0,
            grid=(nblk,),
            in_specs=[
                # Forward stream: dir 0, blocks in natural time order.
                pl.BlockSpec((None, block_t, B_pad, G),
                             lambda s: (0, s, 0, 0)),
                # Backward stream: dir 1, blocks read in reverse time order —
                # the time reversal happens here, not via an HBM flip.
                pl.BlockSpec((None, block_t, B_pad, G),
                             lambda s: (1, nblk - 1 - s, 0, 0)),
                pl.BlockSpec((H_pad, G), lambda s: (0, 0)),
                pl.BlockSpec((H_pad, G), lambda s: (0, 0)),
            ],
            out_specs=(
                pl.BlockSpec((block_t, B_pad, H_pad), lambda s: (s, 0, 0)),
                # Backward h written straight into original time order.
                pl.BlockSpec((block_t, B_pad, H_pad),
                             lambda s: (nblk - 1 - s, 0, 0)),
                pl.BlockSpec((B_pad, H_pad), lambda s: (0, 0)),
                pl.BlockSpec((B_pad, H_pad), lambda s: (0, 0)),
            ),
            scratch_shapes=[pltpu.VMEM((B_pad, H_pad), jnp.float32)
                            for _ in range(4)],
        ),
        compiler_params=pltpu.CompilerParams(
            dimension_semantics=("arbitrary",),
            vmem_limit_bytes=_vmem_limit(est)),
    )(gx, gx, whh_f, whh_b)      # same array, two views (fwd / reversed bwd)


# ----------------------------------------------------------------------------
# Parameters + forward
# ----------------------------------------------------------------------------
def init_encoder_params(key, vocab_size, embed_size, hidden_size):
    keys = jax.random.split(key, 9)
    k = 1.0 / jnp.sqrt(hidden_size)
    params = {
        "embedding": jax.random.normal(keys[0], (vocab_size, embed_size),
                                       jnp.float32),
    }
    names = ["w_ih", "w_hh", "b_ih", "b_hh"]
    shapes = [(4 * hidden_size, embed_size), (4 * hidden_size, hidden_size),
              (4 * hidden_size,), (4 * hidden_size,)]
    ki = 1
    for d in range(2):          # 0 = forward, 1 = backward (PyTorch order)
        for name, shape in zip(names, shapes):
            params[f"{name}_{d}"] = jax.random.uniform(
                keys[ki], shape, jnp.float32, minval=-k, maxval=k)
            ki += 1
    return params


def _pad_gate_rows(w, H, H_pad):
    """(4H, X) -> (4*H_pad, X), padding each gate block's rows with zeros."""
    if H == H_pad:
        return w
    w4 = w.reshape(4, H, -1)
    w4 = jnp.pad(w4, ((0, 0), (0, H_pad - H), (0, 0)))
    return w4.reshape(4 * H_pad, -1)


def _pad_gate_vec(b, H, H_pad):
    if H == H_pad:
        return b
    b4 = jnp.pad(b.reshape(4, H), ((0, 0), (0, H_pad - H)))
    return b4.reshape(4 * H_pad)


def encoder_forward(params, x, decoder_embedding=None, *,
                    compute_dtype=jnp.bfloat16, block_t=32):
    """x: (B, S) int32 token ids.  Returns (output (B,S,2H), (h_n, c_n)) with
    h_n, c_n of shape (2, B, H).  `decoder_embedding` is unused, matching the
    reference module's forward."""
    del decoder_embedding
    B, S = x.shape
    E = params["embedding"].shape[1]
    H = params["w_hh_0"].shape[1]
    H_pad = _round_up(H, 128)     # lane-aligned gate slices + lane-dense stores
    B_pad = _round_up(B, 8)
    G = 4 * H_pad

    block_t = _pick_block_t(S, block_t)
    nblk = -(-S // block_t)
    S_pad = nblk * block_t

    # ---- weight prep: pad every gate block H -> H_pad (padded hidden units
    #      stay exactly zero through the recurrence), cast matmul operands ----
    wih_t, whh_t, biases = [], [], []
    for d in range(2):
        wih = _pad_gate_rows(params[f"w_ih_{d}"], H, H_pad)           # (G, E)
        whh = _pad_gate_rows(params[f"w_hh_{d}"], H, H_pad)           # (G, H)
        whh = jnp.pad(whh, ((0, 0), (0, H_pad - H)))                  # (G, Hp)
        b = _pad_gate_vec(params[f"b_ih_{d}"] + params[f"b_hh_{d}"], H, H_pad)
        wih_t.append(wih.T)                                           # (E, G)
        whh_t.append(whh.T.astype(compute_dtype))                     # (Hp, G)
        biases.append(b[None, :])                                     # (1, G)
    w_ih_all = jnp.stack(wih_t, axis=0).astype(compute_dtype)         # (2,E,G)
    bias_all = jnp.stack(biases, axis=0).astype(jnp.float32)          # (2,1,G)

    # ---- embedding lookup (XLA gather glue), time-major, padded (small) ----
    emb = jnp.take(params["embedding"], x, axis=0)                    # (B,S,E)
    x_tm = jnp.transpose(emb, (1, 0, 2))                              # (S,B,E)
    x_tm = jnp.pad(x_tm, ((0, S_pad - S), (0, B_pad - B), (0, 0)))

    # ---- hoisted input projection (both directions, compute-dtype stream) ----
    gx = _input_projection(
        x_tm.reshape(S_pad * B_pad, E).astype(compute_dtype),
        w_ih_all, bias_all, out_dtype=compute_dtype)                  # (2,M,G)
    gx = gx.reshape(2, S_pad, B_pad, G)            # free reshape, no HBM copy

    # ---- fused bidirectional recurrence ----
    out_f, out_b, cn_f, cn_b = _bilstm(
        gx, whh_t[0], whh_t[1], hidden_pad=H_pad, block_t=block_t,
        seq_len=S, out_dtype=compute_dtype)

    out_f = out_f[:S, :B, :H]                      # (S,B,H) original time order
    out_b = out_b[:S, :B, :H]                      # (S,B,H) original time order

    output = jnp.concatenate([out_f, out_b], axis=-1)                 # (S,B,2H)
    output = jnp.transpose(output, (1, 0, 2)).astype(jnp.float32)     # (B,S,2H)
    h_n = jnp.stack([out_f[S - 1], out_b[0]], axis=0).astype(jnp.float32)
    c_n = jnp.stack([cn_f[:B, :H], cn_b[:B, :H]], axis=0)             # (2,B,H)
    return output, (h_n, c_n)


# ----------------------------------------------------------------------------
# Pure-JAX reference (lax.scan) for correctness checking
# ----------------------------------------------------------------------------
def _lstm_ref_dir(emb, w_ih, w_hh, b_ih, b_hh, reverse):
    B, S, E = emb.shape
    H = w_hh.shape[1]

    def step(carry, x_t):
        h, c = carry
        gates = x_t @ w_ih.T + h @ w_hh.T + b_ih + b_hh
        i, f, g, o = jnp.split(gates, 4, axis=-1)
        i, f, o = jax.nn.sigmoid(i), jax.nn.sigmoid(f), jax.nn.sigmoid(o)
        g = jnp.tanh(g)
        c = f * c + i * g
        h = o * jnp.tanh(c)
        return (h, c), h

    xs = jnp.transpose(emb, (1, 0, 2))
    if reverse:
        xs = xs[::-1]
    init = (jnp.zeros((B, H), jnp.float32), jnp.zeros((B, H), jnp.float32))
    (h, c), ys = jax.lax.scan(step, init, xs)
    if reverse:
        ys = ys[::-1]
    return jnp.transpose(ys, (1, 0, 2)), h, c


def encoder_ref(params, x):
    emb = params["embedding"][x]
    outs, hns, cns = [], [], []
    for d, rev in ((0, False), (1, True)):
        o, h, c = _lstm_ref_dir(emb, params[f"w_ih_{d}"], params[f"w_hh_{d}"],
                                params[f"b_ih_{d}"], params[f"b_hh_{d}"], rev)
        outs.append(o); hns.append(h); cns.append(c)
    return (jnp.concatenate(outs, axis=-1),
            (jnp.stack(hns, 0), jnp.stack(cns, 0)))


# ----------------------------------------------------------------------------
if __name__ == "__main__":
    VOCAB, EMBED, HIDDEN = 50, 16, 32
    BATCH, SEQ = 2, 8

    key = jax.random.PRNGKey(0)
    pkey, xkey = jax.random.split(key)
    params = init_encoder_params(pkey, VOCAB, EMBED, HIDDEN)
    x = jax.random.randint(xkey, (BATCH, SEQ), 0, VOCAB, dtype=jnp.int32)

    fwd_bf16 = jax.jit(functools.partial(encoder_forward,
                                         compute_dtype=jnp.bfloat16))
    fwd_f32 = jax.jit(functools.partial(encoder_forward,
                                        compute_dtype=jnp.float32))

    output, (h_n, c_n) = fwd_bf16(params, x)
    jax.block_until_ready((output, h_n, c_n))

    assert output.shape == (BATCH, SEQ, 2 * HIDDEN)
    assert h_n.shape == (2, BATCH, HIDDEN)
    assert c_n.shape == (2, BATCH, HIDDEN)

    ref_out, (ref_h, ref_c) = encoder_ref(params, x)

    # bf16 gate streams / matmul operands (f32 accumulation + f32 cell math):
    # loose tolerance.
    assert jnp.allclose(output, ref_out, atol=5e-2, rtol=5e-2)
    assert jnp.allclose(h_n, ref_h, atol=5e-2, rtol=5e-2)
    assert jnp.allclose(c_n, ref_c, atol=5e-2, rtol=5e-2)

    # Full-f32 path: tight tolerance.
    out32, (h32, c32) = fwd_f32(params, x)
    jax.block_until_ready((out32, h32, c32))
    assert jnp.allclose(out32, ref_out, atol=1e-5, rtol=1e-5)
    assert jnp.allclose(h32, ref_h, atol=1e-5, rtol=1e-5)
    assert jnp.allclose(c32, ref_c, atol=1e-5, rtol=1e-5)

    print("KERNEL_OK")
</pallas_src>

<mosaic_0001>
module attributes {stable_mosaic.version = 11 : i64} {
  func.func @_proj_kernel(%arg0: i32, %arg1: i32, %arg2: i32, %arg3: memref<64x16xbf16, #tpu.memory_space<vmem>>, %arg4: memref<1x16x512xbf16, #tpu.memory_space<vmem>>, %arg5: memref<1x1x512xf32, #tpu.memory_space<vmem>>, %arg6: memref<1x64x512xbf16, #tpu.memory_space<vmem>>) attributes {dimension_semantics = [#tpu.dimension_semantics<parallel>, #tpu.dimension_semantics<parallel>, #tpu.dimension_semantics<parallel>], iteration_bounds = array<i64: 2, 1, 1>, scalar_prefetch = 0 : i64, scratch_operands = 0 : i64, tpu.core_type = #tpu.core_type<tc>, window_params = [{transform_indices = @transform_0, window_bounds = array<i64: 64, 16>}, {transform_indices = @transform_1, window_bounds = array<i64: 1, 16, 512>}, {transform_indices = @transform_2, window_bounds = array<i64: 1, 1, 512>}, {transform_indices = @transform_3, window_bounds = array<i64: 1, 64, 512>}]} {
    %c0 = arith.constant 0 : index
    %c0_0 = arith.constant 0 : index
    %0 = vector.load %arg3[%c0, %c0_0] : memref<64x16xbf16, #tpu.memory_space<vmem>>, vector<64x16xbf16>
    %c0_1 = arith.constant 0 : index
    %c0_2 = arith.constant 0 : index
    %c0_3 = arith.constant 0 : index
    %1 = vector.load %arg4[%c0_1, %c0_2, %c0_3] : memref<1x16x512xbf16, #tpu.memory_space<vmem>>, vector<1x16x512xbf16>
    %2 = vector.shape_cast %1 : vector<1x16x512xbf16> to vector<16x512xbf16>
    %cst = arith.constant dense<0.000000e+00> : vector<64x512xf32>
    %3 = tpu.matmul %0, %2, %cst {dimension_numbers = #tpu.dot_dimension_numbers<[1], [0], [0], [1], [0, 0, 1, 1], [], []>} : vector<64x16xbf16>, vector<16x512xbf16>, vector<64x512xf32> -> vector<64x512xf32>
    %c0_4 = arith.constant 0 : index
    %c0_5 = arith.constant 0 : index
    %c0_6 = arith.constant 0 : index
    %4 = vector.load %arg5[%c0_4, %c0_5, %c0_6] : memref<1x1x512xf32, #tpu.memory_space<vmem>>, vector<1x1x512xf32>
    %5 = vector.shape_cast %4 : vector<1x1x512xf32> to vector<1x512xf32>
    %6 = vector.broadcast %5 : vector<1x512xf32> to vector<64x512xf32>
    %7 = arith.addf %3, %6 : vector<64x512xf32>
    %8 = arith.truncf %7 : vector<64x512xf32> to vector<64x512xbf16>
    %c0_7 = arith.constant 0 : index
    %c0_8 = arith.constant 0 : index
    %c0_9 = arith.constant 0 : index
    %9 = vector.load %arg6[%c0_7, %c0_8, %c0_9] : memref<1x64x512xbf16, #tpu.memory_space<vmem>>, vector<1x64x512xbf16>
    %10 = vector.shape_cast %9 : vector<1x64x512xbf16> to vector<64x512xbf16>
    %11 = vector.shape_cast %8 : vector<64x512xbf16> to vector<1x64x512xbf16>
    tpu.vector_store %arg6[%c0_7, %c0_8, %c0_9], %11 {strides = array<i32>} : memref<1x64x512xbf16, #tpu.memory_space<vmem>>, vector<1x64x512xbf16>,
    return
  }
  func.func @transform_0(%arg0: i32, %arg1: i32, %arg2: i32) -> (i32, i32) {
    %c0_i32 = arith.constant 0 : i32
    %c0_i32_0 = arith.constant 0 : i32
    return %arg2, %c0_i32 : i32, i32
  }
  func.func @transform_1(%arg0: i32, %arg1: i32, %arg2: i32) -> (i32, i32, i32) {
    %c0_i32 = arith.constant 0 : i32
    %c0_i32_0 = arith.constant 0 : i32
    return %arg0, %c0_i32, %arg1 : i32, i32, i32
  }
  func.func @transform_2(%arg0: i32, %arg1: i32, %arg2: i32) -> (i32, i32, i32) {
    %c0_i32 = arith.constant 0 : i32
    %c0_i32_0 = arith.constant 0 : i32
    return %arg0, %c0_i32, %arg1 : i32, i32, i32
  }
  func.func @transform_3(%arg0: i32, %arg1: i32, %arg2: i32) -> (i32, i32, i32) {
    %c0_i32 = arith.constant 0 : i32
    return %arg0, %arg2, %arg1 : i32, i32, i32
  }
}

module attributes {stable_mosaic.version = 11 : i64} {
  func.func @_bilstm_kernel(%arg0: i32, %arg1: memref<1x8x8x512xbf16, #tpu.memory_space<vmem>>, %arg2: memref<1x8x8x512xbf16, #tpu.memory_space<vmem>>, %arg3: memref<128x512xbf16, #tpu.memory_space<vmem>>, %arg4: memref<128x512xbf16, #tpu.memory_space<vmem>>, %arg5: memref<8x8x128xbf16, #tpu.memory_space<vmem>>, %arg6: memref<8x8x128xbf16, #tpu.memory_space<vmem>>, %arg7: memref<8x128xf32, #tpu.memory_space<vmem>>, %arg8: memref<8x128xf32, #tpu.memory_space<vmem>>, %arg9: memref<8x128xf32, #tpu.memory_space<vmem>>, %arg10: memref<8x128xf32, #tpu.memory_space<vmem>>, %arg11: memref<8x128xf32, #tpu.memory_space<vmem>>, %arg12: memref<8x128xf32, #tpu.memory_space<vmem>>) attributes {dimension_semantics = [#tpu.dimension_semantics<arbitrary>], iteration_bounds = array<i64: 1>, scalar_prefetch = 0 : i64, scratch_operands = 4 : i64, tpu.core_type = #tpu.core_type<tc>, window_params = [{transform_indices = @transform_0, window_bounds = array<i64: 1, 8, 8, 512>}, {transform_indices = @transform_1, window_bounds = array<i64: 1, 8, 8, 512>}, {pipeline_mode = #tpu.pipeline_mode<synchronous>, transform_indices = @transform_2, window_bounds = array<i64: 128, 512>}, {pipeline_mode = #tpu.pipeline_mode<synchronous>, transform_indices = @transform_3, window_bounds = array<i64: 128, 512>}, {transform_indices = @transform_4, window_bounds = array<i64: 8, 8, 128>}, {transform_indices = @transform_5, window_bounds = array<i64: 8, 8, 128>}, {pipeline_mode = #tpu.pipeline_mode<synchronous>, transform_indices = @transform_6, window_bounds = array<i64: 8, 128>}, {pipeline_mode = #tpu.pipeline_mode<synchronous>, transform_indices = @transform_7, window_bounds = array<i64: 8, 128>}]} {
    %c0_i32 = arith.constant 0 : i32
    %0 = arith.cmpi eq, %arg0, %c0_i32 : i32
    %1 = arith.extui %0 : i1 to i32
    %c0_i32_0 = arith.constant 0 : i32
    %2 = arith.cmpi ne, %1, %c0_i32_0 : i32
    scf.if %2 {
      %cst_218 = arith.constant 0.000000e+00 : f32
      %590 = vector.broadcast %cst_218 : f32 to vector<8x128xf32>
      %c0_219 = arith.constant 0 : index
      %c0_220 = arith.constant 0 : index
      %591 = vector.load %arg9[%c0_219, %c0_220] : memref<8x128xf32, #tpu.memory_space<vmem>>, vector<8x128xf32>
      tpu.vector_store %arg9[%c0_219, %c0_220], %590 {strides = array<i32>} : memref<8x128xf32, #tpu.memory_space<vmem>>, vector<8x128xf32>,
      %cst_221 = arith.constant 0.000000e+00 : f32
      %592 = vector.broadcast %cst_221 : f32 to vector<8x128xf32>
      %c0_222 = arith.constant 0 : index
      %c0_223 = arith.constant 0 : index
      %593 = vector.load %arg10[%c0_222, %c0_223] : memref<8x128xf32, #tpu.memory_space<vmem>>, vector<8x128xf32>
      tpu.vector_store %arg10[%c0_222, %c0_223], %592 {strides = array<i32>} : memref<8x128xf32, #tpu.memory_space<vmem>>, vector<8x128xf32>,
      %cst_224 = arith.constant 0.000000e+00 : f32
      %594 = vector.broadcast %cst_224 : f32 to vector<8x128xf32>
      %c0_225 = arith.constant 0 : index
      %c0_226 = arith.constant 0 : index
      %595 = vector.load %arg11[%c0_225, %c0_226] : memref<8x128xf32, #tpu.memory_space<vmem>>, vector<8x128xf32>
      tpu.vector_store %arg11[%c0_225, %c0_226], %594 {strides = array<i32>} : memref<8x128xf32, #tpu.memory_space<vmem>>, vector<8x128xf32>,
      %cst_227 = arith.constant 0.000000e+00 : f32
      %596 = vector.broadcast %cst_227 : f32 to vector<8x128xf32>
      %c0_228 = arith.constant 0 : index
      %c0_229 = arith.constant 0 : index
      %597 = vector.load %arg12[%c0_228, %c0_229] : memref<8x128xf32, #tpu.memory_space<vmem>>, vector<8x128xf32>
      tpu.vector_store %arg12[%c0_228, %c0_229], %596 {strides = array<i32>} : memref<8x128xf32, #tpu.memory_space<vmem>>, vector<8x128xf32>,
    } else {
    }
    %c0 = arith.constant 0 : index
    %c0_1 = arith.constant 0 : index
    %3 = vector.load %arg9[%c0, %c0_1] : memref<8x128xf32, #tpu.memory_space<vmem>>, vector<8x128xf32>
    %c0_2 = arith.constant 0 : index
    %c0_3 = arith.constant 0 : index
    %4 = vector.load %arg10[%c0_2, %c0_3] : memref<8x128xf32, #tpu.memory_space<vmem>>, vector<8x128xf32>
    %c0_4 = arith.constant 0 : index
    %c0_5 = arith.constant 0 : index
    %5 = vector.load %arg11[%c0_4, %c0_5] : memref<8x128xf32, #tpu.memory_space<vmem>>, vector<8x128xf32>
    %c0_6 = arith.constant 0 : index
    %c0_7 = arith.constant 0 : index
    %6 = vector.load %arg12[%c0_6, %c0_7] : memref<8x128xf32, #tpu.memory_space<vmem>>, vector<8x128xf32>
    %c0_8 = arith.constant 0 : index
    %c0_9 = arith.constant 0 : index
    %c0_10 = arith.constant 0 : index
    %c0_11 = arith.constant 0 : index
    %7 = vector.load %arg1[%c0_8, %c0_9, %c0_10, %c0_11] : memref<1x8x8x512xbf16, #tpu.memory_space<vmem>>, vector<1x1x8x512xbf16>
    %8 = vector.shape_cast %7 : vector<1x1x8x512xbf16> to vector<8x512xbf16>
    %9 = arith.extf %8 : vector<8x512xbf16> to vector<8x512xf32>
    %10 = arith.truncf %3 : vector<8x128xf32> to vector<8x128xbf16>
    %c0_12 = arith.constant 0 : index
    %c0_13 = arith.constant 0 : index
    %11 = vector.load %arg3[%c0_12, %c0_13] : memref<128x512xbf16, #tpu.memory_space<vmem>>, vector<128x512xbf16>
    %cst = arith.constant dense<0.000000e+00> : vector<8x512xf32>
    %12 = tpu.matmul %10, %11, %cst {dimension_numbers = #tpu.dot_dimension_numbers<[1], [0], [0], [1], [0, 0, 1, 1], [], []>} : vector<8x128xbf16>, vector<128x512xbf16>, vector<8x512xf32> -> vector<8x512xf32>
    %13 = arith.addf %9, %12 : vector<8x512xf32>
    %14 = vector.extract_strided_slice %13 {offsets = [0, 0], sizes = [8, 128], strides = [1, 1]} : vector<8x512xf32> to vector<8x128xf32>
    %15 = arith.negf %14 : vector<8x128xf32>
    %16 = math.exp %15 : vector<8x128xf32>
    %cst_14 = arith.constant 1.000000e+00 : f32
    %17 = vector.broadcast %cst_14 : f32 to vector<8x128xf32>
    %18 = arith.addf %17, %16 : vector<8x128xf32>
    %19 = arith.divf %17, %18 : vector<8x128xf32>
    %20 = vector.extract_strided_slice %13 {offsets = [0, 128], sizes = [8, 128], strides = [1, 1]} : vector<8x512xf32> to vector<8x128xf32>
    %21 = arith.negf %20 : vector<8x128xf32>
    %22 = math.exp %21 : vector<8x128xf32>
    %cst_15 = arith.constant 1.000000e+00 : f32
    %23 = vector.broadcast %cst_15 : f32 to vector<8x128xf32>
    %24 = arith.addf %23, %22 : vector<8x128xf32>
    %25 = arith.divf %23, %24 : vector<8x128xf32>
    %26 = vector.extract_strided_slice %13 {offsets = [0, 256], sizes = [8, 128], strides = [1, 1]} : vector<8x512xf32> to vector<8x128xf32>
    %27 = math.tanh %26 : vector<8x128xf32>
    %28 = vector.extract_strided_slice %13 {offsets = [0, 384], sizes = [8, 128], strides = [1, 1]} : vector<8x512xf32> to vector<8x128xf32>
    %29 = arith.negf %28 : vector<8x128xf32>
    %30 = math.exp %29 : vector<8x128xf32>
    %cst_16 = arith.constant 1.000000e+00 : f32
    %31 = vector.broadcast %cst_16 : f32 to vector<8x128xf32>
    %32 = arith.addf %31, %30 : vector<8x128xf32>
    %33 = arith.divf %31, %32 : vector<8x128xf32>
    %34 = arith.mulf %25, %4 : vector<8x128xf32>
    %35 = arith.mulf %19, %27 : vector<8x128xf32>
    %36 = arith.addf %34, %35 : vector<8x128xf32>
    %37 = math.tanh %36 : vector<8x128xf32>
    %38 = arith.mulf %33, %37 : vector<8x128xf32>
    %c0_17 = arith.constant 0 : index
    %c7 = arith.constant 7 : index
    %c0_18 = arith.constant 0 : index
    %c0_19 = arith.constant 0 : index
    %39 = vector.load %arg2[%c0_17, %c7, %c0_18, %c0_19] : memref<1x8x8x512xbf16, #tpu.memory_space<vmem>>, vector<1x1x8x512xbf16>
    %40 = vector.shape_cast %39 : vector<1x1x8x512xbf16> to vector<8x512xbf16>
    %41 = arith.extf %40 : vector<8x512xbf16> to vector<8x512xf32>
    %42 = arith.truncf %5 : vector<8x128xf32> to vector<8x128xbf16>
    %c0_20 = arith.constant 0 : index
    %c0_21 = arith.constant 0 : index
    %43 = vector.load %arg4[%c0_20, %c0_21] : memref<128x512xbf16, #tpu.memory_space<vmem>>, vector<128x512xbf16>
    %cst_22 = arith.constant dense<0.000000e+00> : vector<8x512xf32>
    %44 = tpu.matmul %42, %43, %cst_22 {dimension_numbers = #tpu.dot_dimension_numbers<[1], [0], [0], [1], [0, 0, 1, 1], [], []>} : vector<8x128xbf16>, vector<128x512xbf16>, vector<8x512xf32> -> vector<8x512xf32>
    %45 = arith.addf %41, %44 : vector<8x512xf32>
    %46 = vector.extract_strided_slice %45 {offsets = [0, 0], sizes = [8, 128], strides = [1, 1]} : vector<8x512xf32> to vector<8x128xf32>
    %47 = arith.negf %46 : vector<8x128xf32>
    %48 = math.exp %47 : vector<8x128xf32>
    %cst_23 = arith.constant 1.000000e+00 : f32
    %49 = vector.broadcast %cst_23 : f32 to vector<8x128xf32>
    %50 = arith.addf %49, %48 : vector<8x128xf32>
    %51 = arith.divf %49, %50 : vector<8x128xf32>
    %52 = vector.extract_strided_slice %45 {offsets = [0, 128], sizes = [8, 128], strides = [1, 1]} : vector<8x512xf32> to vector<8x128xf32>
    %53 = arith.negf %52 : vector<8x128xf32>
    %54 = math.exp %53 : vector<8x128xf32>
    %cst_24 = arith.constant 1.000000e+00 : f32
    %55 = vector.broadcast %cst_24 : f32 to vector<8x128xf32>
    %56 = arith.addf %55, %54 : vector<8x128xf32>
    %57 = arith.divf %55, %56 : vector<8x128xf32>
    %58 = vector.extract_strided_slice %45 {offsets = [0, 256], sizes = [8, 128], strides = [1, 1]} : vector<8x512xf32> to vector<8x128xf32>
    %59 = math.tanh %58 : vector<8x128xf32>
    %60 = vector.extract_strided_slice %45 {offsets = [0, 384], sizes = [8, 128], strides = [1, 1]} : vector<8x512xf32> to vector<8x128xf32>
    %61 = arith.negf %60 : vector<8x128xf32>
    %62 = math.exp %61 : vector<8x128xf32>
    %cst_25 = arith.constant 1.000000e+00 : f32
    %63 = vector.broadcast %cst_25 : f32 to vector<8x128xf32>
    %64 = arith.addf %63, %62 : vector<8x128xf32>
    %65 = arith.divf %63, %64 : vector<8x128xf32>
    %66 = arith.mulf %57, %6 : vector<8x128xf32>
    %67 = arith.mulf %51, %59 : vector<8x128xf32>
    %68 = arith.addf %66, %67 : vector<8x128xf32>
    %69 = math.tanh %68 : vector<8x128xf32>
    %70 = arith.mulf %65, %69 : vector<8x128xf32>
    %71 = arith.truncf %38 : vector<8x128xf32> to vector<8x128xbf16>
    %c0_26 = arith.constant 0 : index
    %c0_27 = arith.constant 0 : index
    %c0_28 = arith.constant 0 : index
    %72 = vector.load %arg5[%c0_26, %c0_27, %c0_28] : memref<8x8x128xbf16, #tpu.memory_space<vmem>>, vector<1x8x128xbf16>
    %73 = vector.shape_cast %72 : vector<1x8x128xbf16> to vector<8x128xbf16>
    %74 = vector.shape_cast %71 : vector<8x128xbf16> to vector<1x8x128xbf16>
    tpu.vector_store %arg5[%c0_26, %c0_27, %c0_28], %74 {strides = array<i32>} : memref<8x8x128xbf16, #tpu.memory_space<vmem>>, vector<1x8x128xbf16>,
    %75 = arith.truncf %70 : vector<8x128xf32> to vector<8x128xbf16>
    %c7_29 = arith.constant 7 : index
    %c0_30 = arith.constant 0 : index
    %c0_31 = arith.constant 0 : index
    %76 = vector.load %arg6[%c7_29, %c0_30, %c0_31] : memref<8x8x128xbf16, #tpu.memory_space<vmem>>, vector<1x8x128xbf16>
    %77 = vector.shape_cast %76 : vector<1x8x128xbf16> to vector<8x128xbf16>
    %78 = vector.shape_cast %75 : vector<8x128xbf16> to vector<1x8x128xbf16>
    tpu.vector_store %arg6[%c7_29, %c0_30, %c0_31], %78 {strides = array<i32>} : memref<8x8x128xbf16, #tpu.memory_space<vmem>>, vector<1x8x128xbf16>,
    %c0_32 = arith.constant 0 : index
    %c1 = arith.constant 1 : index
    %c0_33 = arith.constant 0 : index
    %c0_34 = arith.constant 0 : index
    %79 = vector.load %arg1[%c0_32, %c1, %c0_33, %c0_34] : memref<1x8x8x512xbf16, #tpu.memory_space<vmem>>, vector<1x1x8x512xbf16>
    %80 = vector.shape_cast %79 : vector<1x1x8x512xbf16> to vector<8x512xbf16>
    %81 = arith.extf %80 : vector<8x512xbf16> to vector<8x512xf32>
    %82 = arith.truncf %38 : vector<8x128xf32> to vector<8x128xbf16>
    %c0_35 = arith.constant 0 : index
    %c0_36 = arith.constant 0 : index
    %83 = vector.load %arg3[%c0_35, %c0_36] : memref<128x512xbf16, #tpu.memory_space<vmem>>, vector<128x512xbf16>
    %cst_37 = arith.constant dense<0.000000e+00> : vector<8x512xf32>
    %84 = tpu.matmul %82, %83, %cst_37 {dimension_numbers = #tpu.dot_dimension_numbers<[1], [0], [0], [1], [0, 0, 1, 1], [], []>} : vector<8x128xbf16>, vector<128x512xbf16>, vector<8x512xf32> -> vector<8x512xf32>
    %85 = arith.addf %81, %84 : vector<8x512xf32>
    %86 = vector.extract_strided_slice %85 {offsets = [0, 0], sizes = [8, 128], strides = [1, 1]} : vector<8x512xf32> to vector<8x128xf32>
    %87 = arith.negf %86 : vector<8x128xf32>
    %88 = math.exp %87 : vector<8x128xf32>
    %cst_38 = arith.constant 1.000000e+00 : f32
    %89 = vector.broadcast %cst_38 : f32 to vector<8x128xf32>
    %90 = arith.addf %89, %88 : vector<8x128xf32>
    %91 = arith.divf %89, %90 : vector<8x128xf32>
    %92 = vector.extract_strided_slice %85 {offsets = [0, 128], sizes = [8, 128], strides = [1, 1]} : vector<8x512xf32> to vector<8x128xf32>
    %93 = arith.negf %92 : vector<8x128xf32>
    %94 = math.exp %93 : vector<8x128xf32>
    %cst_39 = arith.constant 1.000000e+00 : f32
    %95 = vector.broadcast %cst_39 : f32 to vector<8x128xf32>
    %96 = arith.addf %95, %94 : vector<8x128xf32>
    %97 = arith.divf %95, %96 : vector<8x128xf32>
    %98 = vector.extract_strided_slice %85 {offsets = [0, 256], sizes = [8, 128], strides = [1, 1]} : vector<8x512xf32> to vector<8x128xf32>
    %99 = math.tanh %98 : vector<8x128xf32>
    %100 = vector.extract_strided_slice %85 {offsets = [0, 384], sizes = [8, 128], strides = [1, 1]} : vector<8x512xf32> to vector<8x128xf32>
    %101 = arith.negf %100 : vector<8x128xf32>
    %102 = math.exp %101 : vector<8x128xf32>
    %cst_40 = arith.constant 1.000000e+00 : f32
    %103 = vector.broadcast %cst_40 : f32 to vector<8x128xf32>
    %104 = arith.addf %103, %102 : vector<8x128xf32>
    %105 = arith.divf %103, %104 : vector<8x128xf32>
    %106 = arith.mulf %97, %36 : vector<8x128xf32>
    %107 = arith.mulf %91, %99 : vector<8x128xf32>
    %108 = arith.addf %106, %107 : vector<8x128xf32>
    %109 = math.tanh %108 : vector<8x128xf32>
    %110 = arith.mulf %105, %109 : vector<8x128xf32>
    %c0_41 = arith.constant 0 : index
    %c6 = arith.constant 6 : index
    %c0_42 = arith.constant 0 : index
    %c0_43 = arith.constant 0 : index
    %111 = vector.load %arg2[%c0_41, %c6, %c0_42, %c0_43] : memref<1x8x8x512xbf16, #tpu.memory_space<vmem>>, vector<1x1x8x512xbf16>
    %112 = vector.shape_cast %111 : vector<1x1x8x512xbf16> to vector<8x512xbf16>
    %113 = arith.extf %112 : vector<8x512xbf16> to vector<8x512xf32>
    %114 = arith.truncf %70 : vector<8x128xf32> to vector<8x128xbf16>
    %c0_44 = arith.constant 0 : index
    %c0_45 = arith.constant 0 : index
    %115 = vector.load %arg4[%c0_44, %c0_45] : memref<128x512xbf16, #tpu.memory_space<vmem>>, vector<128x512xbf16>
    %cst_46 = arith.constant dense<0.000000e+00> : vector<8x512xf32>
    %116 = tpu.matmul %114, %115, %cst_46 {dimension_numbers = #tpu.dot_dimension_numbers<[1], [0], [0], [1], [0, 0, 1, 1], [], []>} : vector<8x128xbf16>, vector<128x512xbf16>, vector<8x512xf32> -> vector<8x512xf32>
    %117 = arith.addf %113, %116 : vector<8x512xf32>
    %118 = vector.extract_strided_slice %117 {offsets = [0, 0], sizes = [8, 128], strides = [1, 1]} : vector<8x512xf32> to vector<8x128xf32>
    %119 = arith.negf %118 : vector<8x128xf32>
    %120 = math.exp %119 : vector<8x128xf32>
    %cst_47 = arith.constant 1.000000e+00 : f32
    %121 = vector.broadcast %cst_47 : f32 to vector<8x128xf32>
    %122 = arith.addf %121, %120 : vector<8x128xf32>
    %123 = arith.divf %121, %122 : vector<8x128xf32>
    %124 = vector.extract_strided_slice %117 {offsets = [0, 128], sizes = [8, 128], strides = [1, 1]} : vector<8x512xf32> to vector<8x128xf32>
    %125 = arith.negf %124 : vector<8x128xf32>
    %126 = math.exp %125 : vector<8x128xf32>
    %cst_48 = arith.constant 1.000000e+00 : f32
    %127 = vector.broadcast %cst_48 : f32 to vector<8x128xf32>
    %128 = arith.addf %127, %126 : vector<8x128xf32>
    %129 = arith.divf %127, %128 : vector<8x128xf32>
    %130 = vector.extract_strided_slice %117 {offsets = [0, 256], sizes = [8, 128], strides = [1, 1]} : vector<8x512xf32> to vector<8x128xf32>
    %131 = math.tanh %130 : vector<8x128xf32>
    %132 = vector.extract_strided_slice %117 {offsets = [0, 384], sizes = [8, 128], strides = [1, 1]} : vector<8x512xf32> to vector<8x128xf32>
    %133 = arith.negf %132 : vector<8x128xf32>
    %134 = math.exp %133 : vector<8x128xf32>
    %cst_49 = arith.constant 1.000000e+00 : f32
    %135 = vector.broadcast %cst_49 : f32 to vector<8x128xf32>
    %136 = arith.addf %135, %134 : vector<8x128xf32>
    %137 = arith.divf %135, %136 : vector<8x128xf32>
    %138 = arith.mulf %129, %68 : vector<8x128xf32>
    %139 = arith.mulf %123, %131 : vector<8x128xf32>
    %140 = arith.addf %138, %139 : vector<8x128xf32>
    %141 = math.tanh %140 : vector<8x128xf32>
    %142 = arith.mulf %137, %141 : vector<8x128xf32>
    %143 = arith.truncf %110 : vector<8x128xf32> to vector<8x128xbf16>
    %c1_50 = arith.constant 1 : index
    %c0_51 = arith.constant 0 : index
    %c0_52 = arith.constant 0 : index
    %144 = vector.load %arg5[%c1_50, %c0_51, %c0_52] : memref<8x8x128xbf16, #tpu.memory_space<vmem>>, vector<1x8x128xbf16>
    %145 = vector.shape_cast %144 : vector<1x8x128xbf16> to vector<8x128xbf16>
    %146 = vector.shape_cast %143 : vector<8x128xbf16> to vector<1x8x128xbf16>
    tpu.vector_store %arg5[%c1_50, %c0_51, %c0_52], %146 {strides = array<i32>} : memref<8x8x128xbf16, #tpu.memory_space<vmem>>, vector<1x8x128xbf16>,
    %147 = arith.truncf %142 : vector<8x128xf32> to vector<8x128xbf16>
    %c6_53 = arith.constant 6 : index
    %c0_54 = arith.constant 0 : index
    %c0_55 = arith.constant 0 : index
    %148 = vector.load %arg6[%c6_53, %c0_54, %c0_55] : memref<8x8x128xbf16, #tpu.memory_space<vmem>>, vector<1x8x128xbf16>
    %149 = vector.shape_cast %148 : vector<1x8x128xbf16> to vector<8x128xbf16>
    %150 = vector.shape_cast %147 : vector<8x128xbf16> to vector<1x8x128xbf16>
    tpu.vector_store %arg6[%c6_53, %c0_54, %c0_55], %150 {strides = array<i32>} : memref<8x8x128xbf16, #tpu.memory_space<vmem>>, vector<1x8x128xbf16>,
    %c0_56 = arith.constant 0 : index
    %c2 = arith.constant 2 : index
    %c0_57 = arith.constant 0 : index
    %c0_58 = arith.constant 0 : index
    %151 = vector.load %arg1[%c0_56, %c2, %c0_57, %c0_58] : memref<1x8x8x512xbf16, #tpu.memory_space<vmem>>, vector<1x1x8x512xbf16>
    %152 = vector.shape_cast %151 : vector<1x1x8x512xbf16> to vector<8x512xbf16>
    %153 = arith.extf %152 : vector<8x512xbf16> to vector<8x512xf32>
    %154 = arith.truncf %110 : vector<8x128xf32> to vector<8x128xbf16>
    %c0_59 = arith.constant 0 : index
    %c0_60 = arith.constant 0 : index
    %155 = vector.load %arg3[%c0_59, %c0_60] : memref<128x512xbf16, #tpu.memory_space<vmem>>, vector<128x512xbf16>
    %cst_61 = arith.constant dense<0.000000e+00> : vector<8x512xf32>
    %156 = tpu.matmul %154, %155, %cst_61 {dimension_numbers = #tpu.dot_dimension_numbers<[1], [0], [0], [1], [0, 0, 1, 1], [], []>} : vector<8x128xbf16>, vector<128x512xbf16>, vector<8x512xf32> -> vector<8x512xf32>
    %157 = arith.addf %153, %156 : vector<8x512xf32>
    %158 = vector.extract_strided_slice %157 {offsets = [0, 0], sizes = [8, 128], strides = [1, 1]} : vector<8x512xf32> to vector<8x128xf32>
    %159 = arith.negf %158 : vector<8x128xf32>
    %160 = math.exp %159 : vector<8x128xf32>
    %cst_62 = arith.constant 1.000000e+00 : f32
    %161 = vector.broadcast %cst_62 : f32 to vector<8x128xf32>
    %162 = arith.addf %161, %160 : vector<8x128xf32>
    %163 = arith.divf %161, %162 : vector<8x128xf32>
    %164 = vector.extract_strided_slice %157 {offsets = [0, 128], sizes = [8, 128], strides = [1, 1]} : vector<8x512xf32> to vector<8x128xf32>
    %165 = arith.negf %164 : vector<8x128xf32>
    %166 = math.exp %165 : vector<8x128xf32>
    %cst_63 = arith.constant 1.000000e+00 : f32
    %167 = vector.broadcast %cst_63 : f32 to vector<8x128xf32>
    %168 = arith.addf %167, %166 : vector<8x128xf32>
    %169 = arith.divf %167, %168 : vector<8x128xf32>
    %170 = vector.extract_strided_slice %157 {offsets = [0, 256], sizes = [8, 128], strides = [1, 1]} : vector<8x512xf32> to vector<8x128xf32>
    %171 = math.tanh %170 : vector<8x128xf32>
    %172 = vector.extract_strided_slice %157 {offsets = [0, 384], sizes = [8, 128], strides = [1, 1]} : vector<8x512xf32> to vector<8x128xf32>
    %173 = arith.negf %172 : vector<8x128xf32>
    %174 = math.exp %173 : vector<8x128xf32>
    %cst_64 = arith.constant 1.000000e+00 : f32
    %175 = vector.broadcast %cst_64 : f32 to vector<8x128xf32>
    %176 = arith.addf %175, %174 : vector<8x128xf32>
    %177 = arith.divf %175, %176 : vector<8x128xf32>
    %178 = arith.mulf %169, %108 : vector<8x128xf32>
    %179 = arith.mulf %163, %171 : vector<8x128xf32>
    %180 = arith.addf %178, %179 : vector<8x128xf32>
    %181 = math.tanh %180 : vector<8x128xf32>
    %182 = arith.mulf %177, %181 : vector<8x128xf32>
    %c0_65 = arith.constant 0 : index
    %c5 = arith.constant 5 : index
    %c0_66 = arith.constant 0 : index
    %c0_67 = arith.constant 0 : index
    %183 = vector.load %arg2[%c0_65, %c5, %c0_66, %c0_67] : memref<1x8x8x512xbf16, #tpu.memory_space<vmem>>, vector<1x1x8x512xbf16>
    %184 = vector.shape_cast %183 : vector<1x1x8x512xbf16> to vector<8x512xbf16>
    %185 = arith.extf %184 : vector<8x512xbf16> to vector<8x512xf32>
    %186 = arith.truncf %142 : vector<8x128xf32> to vector<8x128xbf16>
    %c0_68 = arith.constant 0 : index
    %c0_69 = arith.constant 0 : index
    %187 = vector.load %arg4[%c0_68, %c0_69] : memref<128x512xbf16, #tpu.memory_space<vmem>>, vector<128x512xbf16>
    %cst_70 = arith.constant dense<0.000000e+00> : vector<8x512xf32>
    %188 = tpu.matmul %186, %187, %cst_70 {dimension_numbers = #tpu.dot_dimension_numbers<[1], [0], [0], [1], [0, 0, 1, 1], [], []>} : vector<8x128xbf16>, vector<128x512xbf16>, vector<8x512xf32> -> vector<8x512xf32>
    %189 = arith.addf %185, %188 : vector<8x512xf32>
    %190 = vector.extract_strided_slice %189 {offsets = [0, 0], sizes = [8, 128], strides = [1, 1]} : vector<8x512xf32> to vector<8x128xf32>
    %191 = arith.negf %190 : vector<8x128xf32>
    %192 = math.exp %191 : vector<8x128xf32>
    %cst_71 = arith.constant 1.000000e+00 : f32
    %193 = vector.broadcast %cst_71 : f32 to vector<8x128xf32>
    %194 = arith.addf %193, %192 : vector<8x128xf32>
    %195 = arith.divf %193, %194 : vector<8x128xf32>
    %196 = vector.extract_strided_slice %189 {offsets = [0, 128], sizes = [8, 128], strides = [1, 1]} : vector<8x512xf32> to vector<8x128xf32>
    %197 = arith.negf %196 : vector<8x128xf32>
    %198 = math.exp %197 : vector<8x128xf32>
    %cst_72 = arith.constant 1.000000e+00 : f32
    %199 = vector.broadcast %cst_72 : f32 to vector<8x128xf32>
    %200 = arith.addf %199, %198 : vector<8x128xf32>
    %201 = arith.divf %199, %200 : vector<8x128xf32>
    %202 = vector.extract_strided_slice %189 {offsets = [0, 256], sizes = [8, 128], strides = [1, 1]} : vector<8x512xf32> to vector<8x128xf32>
    %203 = math.tanh %202 : vector<8x128xf32>
    %204 = vector.extract_strided_slice %189 {offsets = [0, 384], sizes = [8, 128], strides = [1, 1]} : vector<8x512xf32> to vector<8x128xf32>
    %205 = arith.negf %204 : vector<8x128xf32>
    %206 = math.exp %205 : vector<8x128xf32>
    %cst_73 = arith.constant 1.000000e+00 : f32
    %207 = vector.broadcast %cst_73 : f32 to vector<8x128xf32>
    %208 = arith.addf %207, %206 : vector<8x128xf32>
    %209 = arith.divf %207, %208 : vector<8x128xf32>
    %210 = arith.mulf %201, %140 : vector<8x128xf32>
    %211 = arith.mulf %195, %203 : vector<8x128xf32>
    %212 = arith.addf %210, %211 : vector<8x128xf32>
    %213 = math.tanh %212 : vector<8x128xf32>
    %214 = arith.mulf %209, %213 : vector<8x128xf32>
    %215 = arith.truncf %182 : vector<8x128xf32> to vector<8x128xbf16>
    %c2_74 = arith.constant 2 : index
    %c0_75 = arith.constant 0 : index
    %c0_76 = arith.constant 0 : index
    %216 = vector.load %arg5[%c2_74, %c0_75, %c0_76] : memref<8x8x128xbf16, #tpu.memory_space<vmem>>, vector<1x8x128xbf16>
    %217 = vector.shape_cast %216 : vector<1x8x128xbf16> to vector<8x128xbf16>
    %218 = vector.shape_cast %215 : vector<8x128xbf16> to vector<1x8x128xbf16>
    tpu.vector_store %arg5[%c2_74, %c0_75, %c0_76], %218 {strides = array<i32>} : memref<8x8x128xbf16, #tpu.memory_space<vmem>>, vector<1x8x128xbf16>,
    %219 = arith.truncf %214 : vector<8x128xf32> to vector<8x128xbf16>
    %c5_77 = arith.constant 5 : index
    %c0_78 = arith.constant 0 : index
    %c0_79 = arith.constant 0 : index
    %220 = vector.load %arg6[%c5_77, %c0_78, %c0_79] : memref<8x8x128xbf16, #tpu.memory_space<vmem>>, vector<1x8x128xbf16>
    %221 = vector.shape_cast %220 : vector<1x8x128xbf16> to vector<8x128xbf16>
    %222 = vector.shape_cast %219 : vector<8x128xbf16> to vector<1x8x128xbf16>
    tpu.vector_store %arg6[%c5_77, %c0_78, %c0_79], %222 {strides = array<i32>} : memref<8x8x128xbf16, #tpu.memory_space<vmem>>, vector<1x8x128xbf16>,
    %c0_80 = arith.constant 0 : index
    %c3 = arith.constant 3 : index
    %c0_81 = arith.constant 0 : index
    %c0_82 = arith.constant 0 : index
    %223 = vector.load %arg1[%c0_80, %c3, %c0_81, %c0_82] : memref<1x8x8x512xbf16, #tpu.memory_space<vmem>>, vector<1x1x8x512xbf16>
    %224 = vector.shape_cast %223 : vector<1x1x8x512xbf16> to vector<8x512xbf16>
    %225 = arith.extf %224 : vector<8x512xbf16> to vector<8x512xf32>
    %226 = arith.truncf %182 : vector<8x128xf32> to vector<8x128xbf16>
    %c0_83 = arith.constant 0 : index
    %c0_84 = arith.constant 0 : index
    %227 = vector.load %arg3[%c0_83, %c0_84] : memref<128x512xbf16, #tpu.memory_space<vmem>>, vector<128x512xbf16>
    %cst_85 = arith.constant dense<0.000000e+00> : vector<8x512xf32>
    %228 = tpu.matmul %226, %227, %cst_85 {dimension_numbers = #tpu.dot_dimension_numbers<[1], [0], [0], [1], [0, 0, 1, 1], [], []>} : vector<8x128xbf16>, vector<128x512xbf16>, vector<8x512xf32> -> vector<8x512xf32>
    %229 = arith.addf %225, %228 : vector<8x512xf32>
    %230 = vector.extract_strided_slice %229 {offsets = [0, 0], sizes = [8, 128], strides = [1, 1]} : vector<8x512xf32> to vector<8x128xf32>
    %231 = arith.negf %230 : vector<8x128xf32>
    %232 = math.exp %231 : vector<8x128xf32>
    %cst_86 = arith.constant 1.000000e+00 : f32
    %233 = vector.broadcast %cst_86 : f32 to vector<8x128xf32>
    %234 = arith.addf %233, %232 : vector<8x128xf32>
    %235 = arith.divf %233, %234 : vector<8x128xf32>
    %236 = vector.extract_strided_slice %229 {offsets = [0, 128], sizes = [8, 128], strides = [1, 1]} : vector<8x512xf32> to vector<8x128xf32>
    %237 = arith.negf %236 : vector<8x128xf32>
    %238 = math.exp %237 : vector<8x128xf32>
    %cst_87 = arith.constant 1.000000e+00 : f32
    %239 = vector.broadcast %cst_87 : f32 to vector<8x128xf32>
    %240 = arith.addf %239, %238 : vector<8x128xf32>
    %241 = arith.divf %239, %240 : vector<8x128xf32>
    %242 = vector.extract_strided_slice %229 {offsets = [0, 256], sizes = [8, 128], strides = [1, 1]} : vector<8x512xf32> to vector<8x128xf32>
    %243 = math.tanh %242 : vector<8x128xf32>
    %244 = vector.extract_strided_slice %229 {offsets = [0, 384], sizes = [8, 128], strides = [1, 1]} : vector<8x512xf32> to vector<8x128xf32>
    %245 = arith.negf %244 : vector<8x128xf32>
    %246 = math.exp %245 : vector<8x128xf32>
    %cst_88 = arith.constant 1.000000e+00 : f32
    %247 = vector.broadcast %cst_88 : f32 to vector<8x128xf32>
    %248 = arith.addf %247, %246 : vector<8x128xf32>
    %249 = arith.divf %247, %248 : vector<8x128xf32>
    %250 = arith.mulf %241, %180 : vector<8x128xf32>
    %251 = arith.mulf %235, %243 : vector<8x128xf32>
    %252 = arith.addf %250, %251 : vector<8x128xf32>
    %253 = math.tanh %252 : vector<8x128xf32>
    %254 = arith.mulf %249, %253 : vector<8x128xf32>
    %c0_89 = arith.constant 0 : index
    %c4 = arith.constant 4 : index
    %c0_90 = arith.constant 0 : index
    %c0_91 = arith.constant 0 : index
    %255 = vector.load %arg2[%c0_89, %c4, %c0_90, %c0_91] : memref<1x8x8x512xbf16, #tpu.memory_space<vmem>>, vector<1x1x8x512xbf16>
    %256 = vector.shape_cast %255 : vector<1x1x8x512xbf16> to vector<8x512xbf16>
    %257 = arith.extf %256 : vector<8x512xbf16> to vector<8x512xf32>
    %258 = arith.truncf %214 : vector<8x128xf32> to vector<8x128xbf16>
    %c0_92 = arith.constant 0 : index
    %c0_93 = arith.constant 0 : index
    %259 = vector.load %arg4[%c0_92, %c0_93] : memref<128x512xbf16, #tpu.memory_space<vmem>>, vector<128x512xbf16>
    %cst_94 = arith.constant dense<0.000000e+00> : vector<8x512xf32>
    %260 = tpu.matmul %258, %259, %cst_94 {dimension_numbers = #tpu.dot_dimension_numbers<[1], [0], [0], [1], [0, 0, 1, 1], [], []>} : vector<8x128xbf16>, vector<128x512xbf16>, vector<8x512xf32> -> vector<8x512xf32>
    %261 = arith.addf %257, %260 : vector<8x512xf32>
    %262 = vector.extract_strided_slice %261 {offsets = [0, 0], sizes = [8, 128], strides = [1, 1]} : vector<8x512xf32> to vector<8x128xf32>
    %263 = arith.negf %262 : vector<8x128xf32>
    %264 = math.exp %263 : vector<8x128xf32>
    %cst_95 = arith.constant 1.000000e+00 : f32
    %265 = vector.broadcast %cst_95 : f32 to vector<8x128xf32>
    %266 = arith.addf %265, %264 : vector<8x128xf32>
    %267 = arith.divf %265, %266 : vector<8x128xf32>
    %268 = vector.extract_strided_slice %261 {offsets = [0, 128], sizes = [8, 128], strides = [1, 1]} : vector<8x512xf32> to vector<8x128xf32>
    %269 = arith.negf %268 : vector<8x128xf32>
    %270 = math.exp %269 : vector<8x128xf32>
    %cst_96 = arith.constant 1.000000e+00 : f32
    %271 = vector.broadcast %cst_96 : f32 to vector<8x128xf32>
    %272 = arith.addf %271, %270 : vector<8x128xf32>
    %273 = arith.divf %271, %272 : vector<8x128xf32>
    %274 = vector.extract_strided_slice %261 {offsets = [0, 256], sizes = [8, 128], strides = [1, 1]} : vector<8x512xf32> to vector<8x128xf32>
    %275 = math.tanh %274 : vector<8x128xf32>
    %276 = vector.extract_strided_slice %261 {offsets = [0, 384], sizes = [8, 128], strides = [1, 1]} : vector<8x512xf32> to vector<8x128xf32>
    %277 = arith.negf %276 : vector<8x128xf32>
    %278 = math.exp %277 : vector<8x128xf32>
    %cst_97 = arith.constant 1.000000e+00 : f32
    %279 = vector.broadcast %cst_97 : f32 to vector<8x128xf32>
    %280 = arith.addf %279, %278 : vector<8x128xf32>
    %281 = arith.divf %279, %280 : vector<8x128xf32>
    %282 = arith.mulf %273, %212 : vector<8x128xf32>
    %283 = arith.mulf %267, %275 : vector<8x128xf32>
    %284 = arith.addf %282, %283 : vector<8x128xf32>
    %285 = math.tanh %284 : vector<8x128xf32>
    %286 = arith.mulf %281, %285 : vector<8x128xf32>
    %287 = arith.truncf %254 : vector<8x128xf32> to vector<8x128xbf16>
    %c3_98 = arith.constant 3 : index
    %c0_99 = arith.constant 0 : index
    %c0_100 = arith.constant 0 : index
    %288 = vector.load %arg5[%c3_98, %c0_99, %c0_100] : memref<8x8x128xbf16, #tpu.memory_space<vmem>>, vector<1x8x128xbf16>
    %289 = vector.shape_cast %288 : vector<1x8x128xbf16> to vector<8x128xbf16>
    %290 = vector.shape_cast %287 : vector<8x128xbf16> to vector<1x8x128xbf16>
    tpu.vector_store %arg5[%c3_98, %c0_99, %c0_100], %290 {strides = array<i32>} : memref<8x8x128xbf16, #tpu.memory_space<vmem>>, vector<1x8x128xbf16>,
    %291 = arith.truncf %286 : vector<8x128xf32> to vector<8x128xbf16>
    %c4_101 = arith.constant 4 : index
    %c0_102 = arith.constant 0 : index
    %c0_103 = arith.constant 0 : index
    %292 = vector.load %arg6[%c4_101, %c0_102, %c0_103] : memref<8x8x128xbf16, #tpu.memory_space<vmem>>, vector<1x8x128xbf16>
    %293 = vector.shape_cast %292 : vector<1x8x128xbf16> to vector<8x128xbf16>
    %294 = vector.shape_cast %291 : vector<8x128xbf16> to vector<1x8x128xbf16>
    tpu.vector_store %arg6[%c4_101, %c0_102, %c0_103], %294 {strides = array<i32>} : memref<8x8x128xbf16, #tpu.memory_space<vmem>>, vector<1x8x128xbf16>,
    %c0_104 = arith.constant 0 : index
    %c4_105 = arith.constant 4 : index
    %c0_106 = arith.constant 0 : index
    %c0_107 = arith.constant 0 : index
    %295 = vector.load %arg1[%c0_104, %c4_105, %c0_106, %c0_107] : memref<1x8x8x512xbf16, #tpu.memory_space<vmem>>, vector<1x1x8x512xbf16>
    %296 = vector.shape_cast %295 : vector<1x1x8x512xbf16> to vector<8x512xbf16>
    %297 = arith.extf %296 : vector<8x512xbf16> to vector<8x512xf32>
    %298 = arith.truncf %254 : vector<8x128xf32> to vector<8x128xbf16>
    %c0_108 = arith.constant 0 : index
    %c0_109 = arith.constant 0 : index
    %299 = vector.load %arg3[%c0_108, %c0_109] : memref<128x512xbf16, #tpu.memory_space<vmem>>, vector<128x512xbf16>
    %cst_110 = arith.constant dense<0.000000e+00> : vector<8x512xf32>
    %300 = tpu.matmul %298, %299, %cst_110 {dimension_numbers = #tpu.dot_dimension_numbers<[1], [0], [0], [1], [0, 0, 1, 1], [], []>} : vector<8x128xbf16>, vector<128x512xbf16>, vector<8x512xf32> -> vector<8x512xf32>
    %301 = arith.addf %297, %300 : vector<8x512xf32>
    %302 = vector.extract_strided_slice %301 {offsets = [0, 0], sizes = [8, 128], strides = [1, 1]} : vector<8x512xf32> to vector<8x128xf32>
    %303 = arith.negf %302 : vector<8x128xf32>
    %304 = math.exp %303 : vector<8x128xf32>
    %cst_111 = arith.constant 1.000000e+00 : f32
    %305 = vector.broadcast %cst_111 : f32 to vector<8x128xf32>
    %306 = arith.addf %305, %304 : vector<8x128xf32>
    %307 = arith.divf %305, %306 : vector<8x128xf32>
    %308 = vector.extract_strided_slice %301 {offsets = [0, 128], sizes = [8, 128], strides = [1, 1]} : vector<8x512xf32> to vector<8x128xf32>
    %309 = arith.negf %308 : vector<8x128xf32>
    %310 = math.exp %309 : vector<8x128xf32>
    %cst_112 = arith.constant 1.000000e+00 : f32
    %311 = vector.broadcast %cst_112 : f32 to vector<8x128xf32>
    %312 = arith.addf %311, %310 : vector<8x128xf32>
    %313 = arith.divf %311, %312 : vector<8x128xf32>
    %314 = vector.extract_strided_slice %301 {offsets = [0, 256], sizes = [8, 128], strides = [1, 1]} : vector<8x512xf32> to vector<8x128xf32>
    %315 = math.tanh %314 : vector<8x128xf32>
    %316 = vector.extract_strided_slice %301 {offsets = [0, 384], sizes = [8, 128], strides = [1, 1]} : vector<8x512xf32> to vector<8x128xf32>
    %317 = arith.negf %316 : vector<8x128xf32>
    %318 = math.exp %317 : vector<8x128xf32>
    %cst_113 = arith.constant 1.000000e+00 : f32
    %319 = vector.broadcast %cst_113 : f32 to vector<8x128xf32>
    %320 = arith.addf %319, %318 : vector<8x128xf32>
    %321 = arith.divf %319, %320 : vector<8x128xf32>
    %322 = arith.mulf %313, %252 : vector<8x128xf32>
    %323 = arith.mulf %307, %315 : vector<8x128xf32>
    %324 = arith.addf %322, %323 : vector<8x128xf32>
    %325 = math.tanh %324 : vector<8x128xf32>
    %326 = arith.mulf %321, %325 : vector<8x128xf32>
    %c0_114 = arith.constant 0 : index
    %c3_115 = arith.constant 3 : index
    %c0_116 = arith.constant 0 : index
    %c0_117 = arith.constant 0 : index
    %327 = vector.load %arg2[%c0_114, %c3_115, %c0_116, %c0_117] : memref<1x8x8x512xbf16, #tpu.memory_space<vmem>>, vector<1x1x8x512xbf16>
    %328 = vector.shape_cast %327 : vector<1x1x8x512xbf16> to vector<8x512xbf16>
    %329 = arith.extf %328 : vector<8x512xbf16> to vector<8x512xf32>
    %330 = arith.truncf %286 : vector<8x128xf32> to vector<8x128xbf16>
    %c0_118 = arith.constant 0 : index
    %c0_119 = arith.constant 0 : index
    %331 = vector.load %arg4[%c0_118, %c0_119] : memref<128x512xbf16, #tpu.memory_space<vmem>>, vector<128x512xbf16>
    %cst_120 = arith.constant dense<0.000000e+00> : vector<8x512xf32>
    %332 = tpu.matmul %330, %331, %cst_120 {dimension_numbers = #tpu.dot_dimension_numbers<[1], [0], [0], [1], [0, 0, 1, 1], [], []>} : vector<8x128xbf16>, vector<128x512xbf16>, vector<8x512xf32> -> vector<8x512xf32>
    %333 = arith.addf %329, %332 : vector<8x512xf32>
    %334 = vector.extract_strided_slice %333 {offsets = [0, 0], sizes = [8, 128], strides = [1, 1]} : vector<8x512xf32> to vector<8x128xf32>
    %335 = arith.negf %334 : vector<8x128xf32>
    %336 = math.exp %335 : vector<8x128xf32>
    %cst_121 = arith.constant 1.000000e+00 : f32
    %337 = vector.broadcast %cst_121 : f32 to vector<8x128xf32>
    %338 = arith.addf %337, %336 : vector<8x128xf32>
    %339 = arith.divf %337, %338 : vector<8x128xf32>
    %340 = vector.extract_strided_slice %333 {offsets = [0, 128], sizes = [8, 128], strides = [1, 1]} : vector<8x512xf32> to vector<8x128xf32>
    %341 = arith.negf %340 : vector<8x128xf32>
    %342 = math.exp %341 : vector<8x128xf32>
    %cst_122 = arith.constant 1.000000e+00 : f32
    %343 = vector.broadcast %cst_122 : f32 to vector<8x128xf32>
    %344 = arith.addf %343, %342 : vector<8x128xf32>
    %345 = arith.divf %343, %344 : vector<8x128xf32>
    %346 = vector.extract_strided_slice %333 {offsets = [0, 256], sizes = [8, 128], strides = [1, 1]} : vector<8x512xf32> to vector<8x128xf32>
    %347 = math.tanh %346 : vector<8x128xf32>
    %348 = vector.extract_strided_slice %333 {offsets = [0, 384], sizes = [8, 128], strides = [1, 1]} : vector<8x512xf32> to vector<8x128xf32>
    %349 = arith.negf %348 : vector<8x128xf32>
    %350 = math.exp %349 : vector<8x128xf32>
    %cst_123 = arith.constant 1.000000e+00 : f32
    %351 = vector.broadcast %cst_123 : f32 to vector<8x128xf32>
    %352 = arith.addf %351, %350 : vector<8x128xf32>
    %353 = arith.divf %351, %352 : vector<8x128xf32>
    %354 = arith.mulf %345, %284 : vector<8x128xf32>
    %355 = arith.mulf %339, %347 : vector<8x128xf32>
    %356 = arith.addf %354, %355 : vector<8x128xf32>
    %357 = math.tanh %356 : vector<8x128xf32>
    %358 = arith.mulf %353, %357 : vector<8x128xf32>
    %359 = arith.truncf %326 : vector<8x128xf32> to vector<8x128xbf16>
    %c4_124 = arith.constant 4 : index
    %c0_125 = arith.constant 0 : index
    %c0_126 = arith.constant 0 : index
    %360 = vector.load %arg5[%c4_124, %c0_125, %c0_126] : memref<8x8x128xbf16, #tpu.memory_space<vmem>>, vector<1x8x128xbf16>
    %361 = vector.shape_cast %360 : vector<1x8x128xbf16> to vector<8x128xbf16>
    %362 = vector.shape_cast %359 : vector<8x128xbf16> to vector<1x8x128xbf16>
    tpu.vector_store %arg5[%c4_124, %c0_125, %c0_126], %362 {strides = array<i32>} : memref<8x8x128xbf16, #tpu.memory_space<vmem>>, vector<1x8x128xbf16>,
    %363 = arith.truncf %358 : vector<8x128xf32> to vector<8x128xbf16>
    %c3_127 = arith.constant 3 : index
    %c0_128 = arith.constant 0 : index
    %c0_129 = arith.constant 0 : index
    %364 = vector.load %arg6[%c3_127, %c0_128, %c0_129] : memref<8x8x128xbf16, #tpu.memory_space<vmem>>, vector<1x8x128xbf16>
    %365 = vector.shape_cast %364 : vector<1x8x128xbf16> to vector<8x128xbf16>
    %366 = vector.shape_cast %363 : vector<8x128xbf16> to vector<1x8x128xbf16>
    tpu.vector_store %arg6[%c3_127, %c0_128, %c0_129], %366 {strides = array<i32>} : memref<8x8x128xbf16, #tpu.memory_space<vmem>>, vector<1x8x128xbf16>,
    %c0_130 = arith.constant 0 : index
    %c5_131 = arith.constant 5 : index
    %c0_132 = arith.constant 0 : index
    %c0_133 = arith.constant 0 : index
    %367 = vector.load %arg1[%c0_130, %c5_131, %c0_132, %c0_133] : memref<1x8x8x512xbf16, #tpu.memory_space<vmem>>, vector<1x1x8x512xbf16>
    %368 = vector.shape_cast %367 : vector<1x1x8x512xbf16> to vector<8x512xbf16>
    %369 = arith.extf %368 : vector<8x512xbf16> to vector<8x512xf32>
    %370 = arith.truncf %326 : vector<8x128xf32> to vector<8x128xbf16>
    %c0_134 = arith.constant 0 : index
    %c0_135 = arith.constant 0 : index
    %371 = vector.load %arg3[%c0_134, %c0_135] : memref<128x512xbf16, #tpu.memory_space<vmem>>, vector<128x512xbf16>
    %cst_136 = arith.constant dense<0.000000e+00> : vector<8x512xf32>
    %372 = tpu.matmul %370, %371, %cst_136 {dimension_numbers = #tpu.dot_dimension_numbers<[1], [0], [0], [1], [0, 0, 1, 1], [], []>} : vector<8x128xbf16>, vector<128x512xbf16>, vector<8x512xf32> -> vector<8x512xf32>
    %373 = arith.addf %369, %372 : vector<8x512xf32>
    %374 = vector.extract_strided_slice %373 {offsets = [0, 0], sizes = [8, 128], strides = [1, 1]} : vector<8x512xf32> to vector<8x128xf32>
    %375 = arith.negf %374 : vector<8x128xf32>
    %376 = math.exp %375 : vector<8x128xf32>
    %cst_137 = arith.constant 1.000000e+00 : f32
    %377 = vector.broadcast %cst_137 : f32 to vector<8x128xf32>
    %378 = arith.addf %377, %376 : vector<8x128xf32>
    %379 = arith.divf %377, %378 : vector<8x128xf32>
    %380 = vector.extract_strided_slice %373 {offsets = [0, 128], sizes = [8, 128], strides = [1, 1]} : vector<8x512xf32> to vector<8x128xf32>
    %381 = arith.negf %380 : vector<8x128xf32>
    %382 = math.exp %381 : vector<8x128xf32>
    %cst_138 = arith.constant 1.000000e+00 : f32
    %383 = vector.broadcast %cst_138 : f32 to vector<8x128xf32>
    %384 = arith.addf %383, %382 : vector<8x128xf32>
    %385 = arith.divf %383, %384 : vector<8x128xf32>
    %386 = vector.extract_strided_slice %373 {offsets = [0, 256], sizes = [8, 128], strides = [1, 1]} : vector<8x512xf32> to vector<8x128xf32>
    %387 = math.tanh %386 : vector<8x128xf32>
    %388 = vector.extract_strided_slice %373 {offsets = [0, 384], sizes = [8, 128], strides = [1, 1]} : vector<8x512xf32> to vector<8x128xf32>
    %389 = arith.negf %388 : vector<8x128xf32>
    %390 = math.exp %389 : vector<8x128xf32>
    %cst_139 = arith.constant 1.000000e+00 : f32
    %391 = vector.broadcast %cst_139 : f32 to vector<8x128xf32>
    %392 = arith.addf %391, %390 : vector<8x128xf32>
    %393 = arith.divf %391, %392 : vector<8x128xf32>
    %394 = arith.mulf %385, %324 : vector<8x128xf32>
    %395 = arith.mulf %379, %387 : vector<8x128xf32>
    %396 = arith.addf %394, %395 : vector<8x128xf32>
    %397 = math.tanh %396 : vector<8x128xf32>
    %398 = arith.mulf %393, %397 : vector<8x128xf32>
    %c0_140 = arith.constant 0 : index
    %c2_141 = arith.constant 2 : index
    %c0_142 = arith.constant 0 : index
    %c0_143 = arith.constant 0 : index
    %399 = vector.load %arg2[%c0_140, %c2_141, %c0_142, %c0_143] : memref<1x8x8x512xbf16, #tpu.memory_space<vmem>>, vector<1x1x8x512xbf16>
    %400 = vector.shape_cast %399 : vector<1x1x8x512xbf16> to vector<8x512xbf16>
    %401 = arith.extf %400 : vector<8x512xbf16> to vector<8x512xf32>
    %402 = arith.truncf %358 : vector<8x128xf32> to vector<8x128xbf16>
    %c0_144 = arith.constant 0 : index
    %c0_145 = arith.constant 0 : index
    %403 = vector.load %arg4[%c0_144, %c0_145] : memref<128x512xbf16, #tpu.memory_space<vmem>>, vector<128x512xbf16>
    %cst_146 = arith.constant dense<0.000000e+00> : vector<8x512xf32>
    %404 = tpu.matmul %402, %403, %cst_146 {dimension_numbers = #tpu.dot_dimension_numbers<[1], [0], [0], [1], [0, 0, 1, 1], [], []>} : vector<8x128xbf16>, vector<128x512xbf16>, vector<8x512xf32> -> vector<8x512xf32>
    %405 = arith.addf %401, %404 : vector<8x512xf32>
    %406 = vector.extract_strided_slice %405 {offsets = [0, 0], sizes = [8, 128], strides = [1, 1]} : vector<8x512xf32> to vector<8x128xf32>
    %407 = arith.negf %406 : vector<8x128xf32>
    %408 = math.exp %407 : vector<8x128xf32>
    %cst_147 = arith.constant 1.000000e+00 : f32
    %409 = vector.broadcast %cst_147 : f32 to vector<8x128xf32>
    %410 = arith.addf %409, %408 : vector<8x128xf32>
    %411 = arith.divf %409, %410 : vector<8x128xf32>
    %412 = vector.extract_strided_slice %405 {offsets = [0, 128], sizes = [8, 128], strides = [1, 1]} : vector<8x512xf32> to vector<8x128xf32>
    %413 = arith.negf %412 : vector<8x128xf32>
    %414 = math.exp %413 : vector<8x128xf32>
    %cst_148 = arith.constant 1.000000e+00 : f32
    %415 = vector.broadcast %cst_148 : f32 to vector<8x128xf32>
    %416 = arith.addf %415, %414 : vector<8x128xf32>
    %417 = arith.divf %415, %416 : vector<8x128xf32>
    %418 = vector.extract_strided_slice %405 {offsets = [0, 256], sizes = [8, 128], strides = [1, 1]} : vector<8x512xf32> to vector<8x128xf32>
    %419 = math.tanh %418 : vector<8x128xf32>
    %420 = vector.extract_strided_slice %405 {offsets = [0, 384], sizes = [8, 128], strides = [1, 1]} : vector<8x512xf32> to vector<8x128xf32>
    %421 = arith.negf %420 : vector<8x128xf32>
    %422 = math.exp %421 : vector<8x128xf32>
    %cst_149 = arith.constant 1.000000e+00 : f32
    %423 = vector.broadcast %cst_149 : f32 to vector<8x128xf32>
    %424 = arith.addf %423, %422 : vector<8x128xf32>
    %425 = arith.divf %423, %424 : vector<8x128xf32>
    %426 = arith.mulf %417, %356 : vector<8x128xf32>
    %427 = arith.mulf %411, %419 : vector<8x128xf32>
    %428 = arith.addf %426, %427 : vector<8x128xf32>
    %429 = math.tanh %428 : vector<8x128xf32>
    %430 = arith.mulf %425, %429 : vector<8x128xf32>
    %431 = arith.truncf %398 : vector<8x128xf32> to vector<8x128xbf16>
    %c5_150 = arith.constant 5 : index
    %c0_151 = arith.constant 0 : index
    %c0_152 = arith.constant 0 : index
    %432 = vector.load %arg5[%c5_150, %c0_151, %c0_152] : memref<8x8x128xbf16, #tpu.memory_space<vmem>>, vector<1x8x128xbf16>
    %433 = vector.shape_cast %432 : vector<1x8x128xbf16> to vector<8x128xbf16>
    %434 = vector.shape_cast %431 : vector<8x128xbf16> to vector<1x8x128xbf16>
    tpu.vector_store %arg5[%c5_150, %c0_151, %c0_152], %434 {strides = array<i32>} : memref<8x8x128xbf16, #tpu.memory_space<vmem>>, vector<1x8x128xbf16>,
    %435 = arith.truncf %430 : vector<8x128xf32> to vector<8x128xbf16>
    %c2_153 = arith.constant 2 : index
    %c0_154 = arith.constant 0 : index
    %c0_155 = arith.constant 0 : index
    %436 = vector.load %arg6[%c2_153, %c0_154, %c0_155] : memref<8x8x128xbf16, #tpu.memory_space<vmem>>, vector<1x8x128xbf16>
    %437 = vector.shape_cast %436 : vector<1x8x128xbf16> to vector<8x128xbf16>
    %438 = vector.shape_cast %435 : vector<8x128xbf16> to vector<1x8x128xbf16>
    tpu.vector_store %arg6[%c2_153, %c0_154, %c0_155], %438 {strides = array<i32>} : memref<8x8x128xbf16, #tpu.memory_space<vmem>>, vector<1x8x128xbf16>,
    %c0_156 = arith.constant 0 : index
    %c6_157 = arith.constant 6 : index
    %c0_158 = arith.constant 0 : index
    %c0_159 = arith.constant 0 : index
    %439 = vector.load %arg1[%c0_156, %c6_157, %c0_158, %c0_159] : memref<1x8x8x512xbf16, #tpu.memory_space<vmem>>, vector<1x1x8x512xbf16>
    %440 = vector.shape_cast %439 : vector<1x1x8x512xbf16> to vector<8x512xbf16>
    %441 = arith.extf %440 : vector<8x512xbf16> to vector<8x512xf32>
    %442 = arith.truncf %398 : vector<8x128xf32> to vector<8x128xbf16>
    %c0_160 = arith.constant 0 : index
    %c0_161 = arith.constant 0 : index
    %443 = vector.load %arg3[%c0_160, %c0_161] : memref<128x512xbf16, #tpu.memory_space<vmem>>, vector<128x512xbf16>
    %cst_162 = arith.constant dense<0.000000e+00> : vector<8x512xf32>
    %444 = tpu.matmul %442, %443, %cst_162 {dimension_numbers = #tpu.dot_dimension_numbers<[1], [0], [0], [1], [0, 0, 1, 1], [], []>} : vector<8x128xbf16>, vector<128x512xbf16>, vector<8x512xf32> -> vector<8x512xf32>
    %445 = arith.addf %441, %444 : vector<8x512xf32>
    %446 = vector.extract_strided_slice %445 {offsets = [0, 0], sizes = [8, 128], strides = [1, 1]} : vector<8x512xf32> to vector<8x128xf32>
    %447 = arith.negf %446 : vector<8x128xf32>
    %448 = math.exp %447 : vector<8x128xf32>
    %cst_163 = arith.constant 1.000000e+00 : f32
    %449 = vector.broadcast %cst_163 : f32 to vector<8x128xf32>
    %450 = arith.addf %449, %448 : vector<8x128xf32>
    %451 = arith.divf %449, %450 : vector<8x128xf32>
    %452 = vector.extract_strided_slice %445 {offsets = [0, 128], sizes = [8, 128], strides = [1, 1]} : vector<8x512xf32> to vector<8x128xf32>
    %453 = arith.negf %452 : vector<8x128xf32>
    %454 = math.exp %453 : vector<8x128xf32>
    %cst_164 = arith.constant 1.000000e+00 : f32
    %455 = vector.broadcast %cst_164 : f32 to vector<8x128xf32>
    %456 = arith.addf %455, %454 : vector<8x128xf32>
    %457 = arith.divf %455, %456 : vector<8x128xf32>
    %458 = vector.extract_strided_slice %445 {offsets = [0, 256], sizes = [8, 128], strides = [1, 1]} : vector<8x512xf32> to vector<8x128xf32>
    %459 = math.tanh %458 : vector<8x128xf32>
    %460 = vector.extract_strided_slice %445 {offsets = [0, 384], sizes = [8, 128], strides = [1, 1]} : vector<8x512xf32> to vector<8x128xf32>
    %461 = arith.negf %460 : vector<8x128xf32>
    %462 = math.exp %461 : vector<8x128xf32>
    %cst_165 = arith.constant 1.000000e+00 : f32
    %463 = vector.broadcast %cst_165 : f32 to vector<8x128xf32>
    %464 = arith.addf %463, %462 : vector<8x128xf32>
    %465 = arith.divf %463, %464 : vector<8x128xf32>
    %466 = arith.mulf %457, %396 : vector<8x128xf32>
    %467 = arith.mulf %451, %459 : vector<8x128xf32>
    %468 = arith.addf %466, %467 : vector<8x128xf32>
    %469 = math.tanh %468 : vector<8x128xf32>
    %470 = arith.mulf %465, %469 : vector<8x128xf32>
    %c0_166 = arith.constant 0 : index
    %c1_167 = arith.constant 1 : index
    %c0_168 = arith.constant 0 : index
    %c0_169 = arith.constant 0 : index
    %471 = vector.load %arg2[%c0_166, %c1_167, %c0_168, %c0_169] : memref<1x8x8x512xbf16, #tpu.memory_space<vmem>>, vector<1x1x8x512xbf16>
    %472 = vector.shape_cast %471 : vector<1x1x8x512xbf16> to vector<8x512xbf16>
    %473 = arith.extf %472 : vector<8x512xbf16> to vector<8x512xf32>
    %474 = arith.truncf %430 : vector<8x128xf32> to vector<8x128xbf16>
    %c0_170 = arith.constant 0 : index
    %c0_171 = arith.constant 0 : index
    %475 = vector.load %arg4[%c0_170, %c0_171] : memref<128x512xbf16, #tpu.memory_space<vmem>>, vector<128x512xbf16>
    %cst_172 = arith.constant dense<0.000000e+00> : vector<8x512xf32>
    %476 = tpu.matmul %474, %475, %cst_172 {dimension_numbers = #tpu.dot_dimension_numbers<[1], [0], [0], [1], [0, 0, 1, 1], [], []>} : vector<8x128xbf16>, vector<128x512xbf16>, vector<8x512xf32> -> vector<8x512xf32>
    %477 = arith.addf %473, %476 : vector<8x512xf32>
    %478 = vector.extract_strided_slice %477 {offsets = [0, 0], sizes = [8, 128], strides = [1, 1]} : vector<8x512xf32> to vector<8x128xf32>
    %479 = arith.negf %478 : vector<8x128xf32>
    %480 = math.exp %479 : vector<8x128xf32>
    %cst_173 = arith.constant 1.000000e+00 : f32
    %481 = vector.broadcast %cst_173 : f32 to vector<8x128xf32>
    %482 = arith.addf %481, %480 : vector<8x128xf32>
    %483 = arith.divf %481, %482 : vector<8x128xf32>
    %484 = vector.extract_strided_slice %477 {offsets = [0, 128], sizes = [8, 128], strides = [1, 1]} : vector<8x512xf32> to vector<8x128xf32>
    %485 = arith.negf %484 : vector<8x128xf32>
    %486 = math.exp %485 : vector<8x128xf32>
    %cst_174 = arith.constant 1.000000e+00 : f32
    %487 = vector.broadcast %cst_174 : f32 to vector<8x128xf32>
    %488 = arith.addf %487, %486 : vector<8x128xf32>
    %489 = arith.divf %487, %488 : vector<8x128xf32>
    %490 = vector.extract_strided_slice %477 {offsets = [0, 256], sizes = [8, 128], strides = [1, 1]} : vector<8x512xf32> to vector<8x128xf32>
    %491 = math.tanh %490 : vector<8x128xf32>
    %492 = vector.extract_strided_slice %477 {offsets = [0, 384], sizes = [8, 128], strides = [1, 1]} : vector<8x512xf32> to vector<8x128xf32>
    %493 = arith.negf %492 : vector<8x128xf32>
    %494 = math.exp %493 : vector<8x128xf32>
    %cst_175 = arith.constant 1.000000e+00 : f32
    %495 = vector.broadcast %cst_175 : f32 to vector<8x128xf32>
    %496 = arith.addf %495, %494 : vector<8x128xf32>
    %497 = arith.divf %495, %496 : vector<8x128xf32>
    %498 = arith.mulf %489, %428 : vector<8x128xf32>
    %499 = arith.mulf %483, %491 : vector<8x128xf32>
    %500 = arith.addf %498, %499 : vector<8x128xf32>
    %501 = math.tanh %500 : vector<8x128xf32>
    %502 = arith.mulf %497, %501 : vector<8x128xf32>
    %503 = arith.truncf %470 : vector<8x128xf32> to vector<8x128xbf16>
    %c6_176 = arith.constant 6 : index
    %c0_177 = arith.constant 0 : index
    %c0_178 = arith.constant 0 : index
    %504 = vector.load %arg5[%c6_176, %c0_177, %c0_178] : memref<8x8x128xbf16, #tpu.memory_space<vmem>>, vector<1x8x128xbf16>
    %505 = vector.shape_cast %504 : vector<1x8x128xbf16> to vector<8x128xbf16>
    %506 = vector.shape_cast %503 : vector<8x128xbf16> to vector<1x8x128xbf16>
    tpu.vector_store %arg5[%c6_176, %c0_177, %c0_178], %506 {strides = array<i32>} : memref<8x8x128xbf16, #tpu.memory_space<vmem>>, vector<1x8x128xbf16>,
    %507 = arith.truncf %502 : vector<8x128xf32> to vector<8x128xbf16>
    %c1_179 = arith.constant 1 : index
    %c0_180 = arith.constant 0 : index
    %c0_181 = arith.constant 0 : index
    %508 = vector.load %arg6[%c1_179, %c0_180, %c0_181] : memref<8x8x128xbf16, #tpu.memory_space<vmem>>, vector<1x8x128xbf16>
    %509 = vector.shape_cast %508 : vector<1x8x128xbf16> to vector<8x128xbf16>
    %510 = vector.shape_cast %507 : vector<8x128xbf16> to vector<1x8x128xbf16>
    tpu.vector_store %arg6[%c1_179, %c0_180, %c0_181], %510 {strides = array<i32>} : memref<8x8x128xbf16, #tpu.memory_space<vmem>>, vector<1x8x128xbf16>,
    %c0_182 = arith.constant 0 : index
    %c7_183 = arith.constant 7 : index
    %c0_184 = arith.constant 0 : index
    %c0_185 = arith.constant 0 : index
    %511 = vector.load %arg1[%c0_182, %c7_183, %c0_184, %c0_185] : memref<1x8x8x512xbf16, #tpu.memory_space<vmem>>, vector<1x1x8x512xbf16>
    %512 = vector.shape_cast %511 : vector<1x1x8x512xbf16> to vector<8x512xbf16>
    %513 = arith.extf %512 : vector<8x512xbf16> to vector<8x512xf32>
    %514 = arith.truncf %470 : vector<8x128xf32> to vector<8x128xbf16>
    %c0_186 = arith.constant 0 : index
    %c0_187 = arith.constant 0 : index
    %515 = vector.load %arg3[%c0_186, %c0_187] : memref<128x512xbf16, #tpu.memory_space<vmem>>, vector<128x512xbf16>
    %cst_188 = arith.constant dense<0.000000e+00> : vector<8x512xf32>
    %516 = tpu.matmul %514, %515, %cst_188 {dimension_numbers = #tpu.dot_dimension_numbers<[1], [0], [0], [1], [0, 0, 1, 1], [], []>} : vector<8x128xbf16>, vector<128x512xbf16>, vector<8x512xf32> -> vector<8x512xf32>
    %517 = arith.addf %513, %516 : vector<8x512xf32>
    %518 = vector.extract_strided_slice %517 {offsets = [0, 0], sizes = [8, 128], strides = [1, 1]} : vector<8x512xf32> to vector<8x128xf32>
    %519 = arith.negf %518 : vector<8x128xf32>
    %520 = math.exp %519 : vector<8x128xf32>
    %cst_189 = arith.constant 1.000000e+00 : f32
    %521 = vector.broadcast %cst_189 : f32 to vector<8x128xf32>
    %522 = arith.addf %521, %520 : vector<8x128xf32>
    %523 = arith.divf %521, %522 : vector<8x128xf32>
    %524 = vector.extract_strided_slice %517 {offsets = [0, 128], sizes = [8, 128], strides = [1, 1]} : vector<8x512xf32> to vector<8x128xf32>
    %525 = arith.negf %524 : vector<8x128xf32>
    %526 = math.exp %525 : vector<8x128xf32>
    %cst_190 = arith.constant 1.000000e+00 : f32
    %527 = vector.broadcast %cst_190 : f32 to vector<8x128xf32>
    %528 = arith.addf %527, %526 : vector<8x128xf32>
    %529 = arith.divf %527, %528 : vector<8x128xf32>
    %530 = vector.extract_strided_slice %517 {offsets = [0, 256], sizes = [8, 128], strides = [1, 1]} : vector<8x512xf32> to vector<8x128xf32>
    %531 = math.tanh %530 : vector<8x128xf32>
    %532 = vector.extract_strided_slice %517 {offsets = [0, 384], sizes = [8, 128], strides = [1, 1]} : vector<8x512xf32> to vector<8x128xf32>
    %533 = arith.negf %532 : vector<8x128xf32>
    %534 = math.exp %533 : vector<8x128xf32>
    %cst_191 = arith.constant 1.000000e+00 : f32
    %535 = vector.broadcast %cst_191 : f32 to vector<8x128xf32>
    %536 = arith.addf %535, %534 : vector<8x128xf32>
    %537 = arith.divf %535, %536 : vector<8x128xf32>
    %538 = arith.mulf %529, %468 : vector<8x128xf32>
    %539 = arith.mulf %523, %531 : vector<8x128xf32>
    %540 = arith.addf %538, %539 : vector<8x128xf32>
    %541 = math.tanh %540 : vector<8x128xf32>
    %542 = arith.mulf %537, %541 : vector<8x128xf32>
    %c0_192 = arith.constant 0 : index
    %c0_193 = arith.constant 0 : index
    %c0_194 = arith.constant 0 : index
    %c0_195 = arith.constant 0 : index
    %543 = vector.load %arg2[%c0_192, %c0_193, %c0_194, %c0_195] : memref<1x8x8x512xbf16, #tpu.memory_space<vmem>>, vector<1x1x8x512xbf16>
    %544 = vector.shape_cast %543 : vector<1x1x8x512xbf16> to vector<8x512xbf16>
    %545 = arith.extf %544 : vector<8x512xbf16> to vector<8x512xf32>
    %546 = arith.truncf %502 : vector<8x128xf32> to vector<8x128xbf16>
    %c0_196 = arith.constant 0 : index
    %c0_197 = arith.constant 0 : index
    %547 = vector.load %arg4[%c0_196, %c0_197] : memref<128x512xbf16, #tpu.memory_space<vmem>>, vector<128x512xbf16>
    %cst_198 = arith.constant dense<0.000000e+00> : vector<8x512xf32>
    %548 = tpu.matmul %546, %547, %cst_198 {dimension_numbers = #tpu.dot_dimension_numbers<[1], [0], [0], [1], [0, 0, 1, 1], [], []>} : vector<8x128xbf16>, vector<128x512xbf16>, vector<8x512xf32> -> vector<8x512xf32>
    %549 = arith.addf %545, %548 : vector<8x512xf32>
    %550 = vector.extract_strided_slice %549 {offsets = [0, 0], sizes = [8, 128], strides = [1, 1]} : vector<8x512xf32> to vector<8x128xf32>
    %551 = arith.negf %550 : vector<8x128xf32>
    %552 = math.exp %551 : vector<8x128xf32>
    %cst_199 = arith.constant 1.000000e+00 : f32
    %553 = vector.broadcast %cst_199 : f32 to vector<8x128xf32>
    %554 = arith.addf %553, %552 : vector<8x128xf32>
    %555 = arith.divf %553, %554 : vector<8x128xf32>
    %556 = vector.extract_strided_slice %549 {offsets = [0, 128], sizes = [8, 128], strides = [1, 1]} : vector<8x512xf32> to vector<8x128xf32>
    %557 = arith.negf %556 : vector<8x128xf32>
    %558 = math.exp %557 : vector<8x128xf32>
    %cst_200 = arith.constant 1.000000e+00 : f32
    %559 = vector.broadcast %cst_200 : f32 to vector<8x128xf32>
    %560 = arith.addf %559, %558 : vector<8x128xf32>
    %561 = arith.divf %559, %560 : vector<8x128xf32>
    %562 = vector.extract_strided_slice %549 {offsets = [0, 256], sizes = [8, 128], strides = [1, 1]} : vector<8x512xf32> to vector<8x128xf32>
    %563 = math.tanh %562 : vector<8x128xf32>
    %564 = vector.extract_strided_slice %549 {offsets = [0, 384], sizes = [8, 128], strides = [1, 1]} : vector<8x512xf32> to vector<8x128xf32>
    %565 = arith.negf %564 : vector<8x128xf32>
    %566 = math.exp %565 : vector<8x128xf32>
    %cst_201 = arith.constant 1.000000e+00 : f32
    %567 = vector.broadcast %cst_201 : f32 to vector<8x128xf32>
    %568 = arith.addf %567, %566 : vector<8x128xf32>
    %569 = arith.divf %567, %568 : vector<8x128xf32>
    %570 = arith.mulf %561, %500 : vector<8x128xf32>
    %571 = arith.mulf %555, %563 : vector<8x128xf32>
    %572 = arith.addf %570, %571 : vector<8x128xf32>
    %573 = math.tanh %572 : vector<8x128xf32>
    %574 = arith.mulf %569, %573 : vector<8x128xf32>
    %575 = arith.truncf %542 : vector<8x128xf32> to vector<8x128xbf16>
    %c7_202 = arith.constant 7 : index
    %c0_203 = arith.constant 0 : index
    %c0_204 = arith.constant 0 : index
    %576 = vector.load %arg5[%c7_202, %c0_203, %c0_204] : memref<8x8x128xbf16, #tpu.memory_space<vmem>>, vector<1x8x128xbf16>
    %577 = vector.shape_cast %576 : vector<1x8x128xbf16> to vector<8x128xbf16>
    %578 = vector.shape_cast %575 : vector<8x128xbf16> to vector<1x8x128xbf16>
    tpu.vector_store %arg5[%c7_202, %c0_203, %c0_204], %578 {strides = array<i32>} : memref<8x8x128xbf16, #tpu.memory_space<vmem>>, vector<1x8x128xbf16>,
    %579 = arith.truncf %574 : vector<8x128xf32> to vector<8x128xbf16>
    %c0_205 = arith.constant 0 : index
    %c0_206 = arith.constant 0 : index
    %c0_207 = arith.constant 0 : index
    %580 = vector.load %arg6[%c0_205, %c0_206, %c0_207] : memref<8x8x128xbf16, #tpu.memory_space<vmem>>, vector<1x8x128xbf16>
    %581 = vector.shape_cast %580 : vector<1x8x128xbf16> to vector<8x128xbf16>
    %582 = vector.shape_cast %579 : vector<8x128xbf16> to vector<1x8x128xbf16>
    tpu.vector_store %arg6[%c0_205, %c0_206, %c0_207], %582 {strides = array<i32>} : memref<8x8x128xbf16, #tpu.memory_space<vmem>>, vector<1x8x128xbf16>,
    %c0_208 = arith.constant 0 : index
    %c0_209 = arith.constant 0 : index
    %583 = vector.load %arg9[%c0_208, %c0_209] : memref<8x128xf32, #tpu.memory_space<vmem>>, vector<8x128xf32>
    tpu.vector_store %arg9[%c0_208, %c0_209], %542 {strides = array<i32>} : memref<8x128xf32, #tpu.memory_space<vmem>>, vector<8x128xf32>,
    %c0_210 = arith.constant 0 : index
    %c0_211 = arith.constant 0 : index
    %584 = vector.load %arg10[%c0_210, %c0_211] : memref<8x128xf32, #tpu.memory_space<vmem>>, vector<8x128xf32>
    tpu.vector_store %arg10[%c0_210, %c0_211], %540 {strides = array<i32>} : memref<8x128xf32, #tpu.memory_space<vmem>>, vector<8x128xf32>,
    %c0_212 = arith.constant 0 : index
    %c0_213 = arith.constant 0 : index
    %585 = vector.load %arg11[%c0_212, %c0_213] : memref<8x128xf32, #tpu.memory_space<vmem>>, vector<8x128xf32>
    tpu.vector_store %arg11[%c0_212, %c0_213], %574 {strides = array<i32>} : memref<8x128xf32, #tpu.memory_space<vmem>>, vector<8x128xf32>,
    %c0_214 = arith.constant 0 : index
    %c0_215 = arith.constant 0 : index
    %586 = vector.load %arg12[%c0_214, %c0_215] : memref<8x128xf32, #tpu.memory_space<vmem>>, vector<8x128xf32>
    tpu.vector_store %arg12[%c0_214, %c0_215], %572 {strides = array<i32>} : memref<8x128xf32, #tpu.memory_space<vmem>>, vector<8x128xf32>,
    %c0_i32_216 = arith.constant 0 : i32
    %587 = arith.cmpi eq, %arg0, %c0_i32_216 : i32
    %588 = arith.extui %587 : i1 to i32
    %c0_i32_217 = arith.constant 0 : i32
    %589 = arith.cmpi ne, %588, %c0_i32_217 : i32
    scf.if %589 {
      %c0_218 = arith.constant 0 : index
      %c0_219 = arith.constant 0 : index
      %590 = vector.load %arg7[%c0_218, %c0_219] : memref<8x128xf32, #tpu.memory_space<vmem>>, vector<8x128xf32>
      tpu.vector_store %arg7[%c0_218, %c0_219], %540 {strides = array<i32>} : memref<8x128xf32, #tpu.memory_space<vmem>>, vector<8x128xf32>,
      %c0_220 = arith.constant 0 : index
      %c0_221 = arith.constant 0 : index
      %591 = vector.load %arg8[%c0_220, %c0_221] : memref<8x128xf32, #tpu.memory_space<vmem>>, vector<8x128xf32>
      tpu.vector_store %arg8[%c0_220, %c0_221], %572 {strides = array<i32>} : memref<8x128xf32, #tpu.memory_space<vmem>>, vector<8x128xf32>,
    } else {
    }
    return
  }
  func.func @transform_0(%arg0: i32) -> (i32, i32, i32, i32) {
    %c0_i32 = arith.constant 0 : i32
    %c0_i32_0 = arith.constant 0 : i32
    %c0_i32_1 = arith.constant 0 : i32
    %c0_i32_2 = arith.constant 0 : i32
    return %c0_i32, %arg0, %c0_i32_0, %c0_i32_1 : i32, i32, i32, i32
  }
  func.func @transform_1(%arg0: i32) -> (i32, i32, i32, i32) {
    %c0_i32 = arith.constant 0 : i32
    %0 = arith.subi %c0_i32, %arg0 : i32
    %c1_i32 = arith.constant 1 : i32
    %c0_i32_0 = arith.constant 0 : i32
    %c0_i32_1 = arith.constant 0 : i32
    %c0_i32_2 = arith.constant 0 : i32
    return %c1_i32, %0, %c0_i32_0, %c0_i32_1 : i32, i32, i32, i32
  }
  func.func @transform_2(%arg0: i32) -> (i32, i32) {
    %c0_i32 = arith.constant 0 : i32
    %c0_i32_0 = arith.constant 0 : i32
    %c0_i32_1 = arith.constant 0 : i32
    return %c0_i32, %c0_i32_0 : i32, i32
  }
  func.func @transform_3(%arg0: i32) -> (i32, i32) {
    %c0_i32 = arith.constant 0 : i32
    %c0_i32_0 = arith.constant 0 : i32
    %c0_i32_1 = arith.constant 0 : i32
    return %c0_i32, %c0_i32_0 : i32, i32
  }
  func.func @transform_4(%arg0: i32) -> (i32, i32, i32) {
    %c0_i32 = arith.constant 0 : i32
    %c0_i32_0 = arith.constant 0 : i32
    %c0_i32_1 = arith.constant 0 : i32
    return %arg0, %c0_i32, %c0_i32_0 : i32, i32, i32
  }
  func.func @transform_5(%arg0: i32) -> (i32, i32, i32) {
    %c0_i32 = arith.constant 0 : i32
    %0 = arith.subi %c0_i32, %arg0 : i32
    %c0_i32_0 = arith.constant 0 : i32
    %c0_i32_1 = arith.constant 0 : i32
    %c0_i32_2 = arith.constant 0 : i32
    return %0, %c0_i32_0, %c0_i32_1 : i32, i32, i32
  }
  func.func @transform_6(%arg0: i32) -> (i32, i32) {
    %c0_i32 = arith.constant 0 : i32
    %c0_i32_0 = arith.constant 0 : i32
    %c0_i32_1 = arith.constant 0 : i32
    return %c0_i32, %c0_i32_0 : i32, i32
  }
  func.func @transform_7(%arg0: i32) -> (i32, i32) {
    %c0_i32 = arith.constant 0 : i32
    %c0_i32_0 = arith.constant 0 : i32
    %c0_i32_1 = arith.constant 0 : i32
    return %c0_i32, %c0_i32_0 : i32, i32
  }
}

</mosaic_0001>

<llo_original>
// kernel: encoder_forward.2
$region0: #{encoder_forward.2}
  #allocation0 [shape = 'u32[]', space=smem, size = 0x4, offset = 0x4, fixed_abs, tag = 'smem constant byte address 0x4 - core index']
  #allocation1 [shape = 'u32[144,128]{1,0:T(1,128)}', space=vmem, size = 0x12000, scoped, tag = 'internal scratch']
  %s0 = inlined_call_operand.vmem [shape: bf16[64,16], index: 0, kind: input, shape index: {}]
  %s1 = inlined_call_operand.vmem [shape: bf16[2,16,512], index: 1, kind: input, shape index: {}]
  %s2 = inlined_call_operand.vmem [shape: f32[2,1,512], index: 2, kind: input, shape index: {}]
  %s3 = inlined_call_operand.vmem [shape: bf16[2,64,512], index: 3, kind: output, shape index: {}]
  %s4 = sld [smem:[#allocation0]]
  $region45: #{encoder_forward.2} parent=0
    _
  %s6 = ssub.s32 1, %s4
  %s7 = scalar_select 0, %s6, %s4
  loop: start=0, step=1, limit=4
  $region2: #{encoder_forward.2} parent=0 // loop_pre_header
    _
  $region3: #{encoder_forward.2} parent=0 // loop_header
    %s9 = sphi 0, %s13
    %p10 = scmp.ge.s32.totalorder %s9, 4
    %s16 = sphi 0, %s35
    %s17 = sphi 0, %s31
    %s18 = sphi 0, %s27
    %s19 = sphi 0, %s16
    %s20 = sphi 0, %s17
    %s21 = sphi 0, %s18
    %s22 = sphi 0, %s19
    %s23 = sphi 0, %s20
    %s24 = sphi 0, %s21
    %s38 = sphi 0, %s40
    %s41 = sphi 0, %s38
    %s42 = sphi 0, %s41
    %s58 = sphi 0, %s42
    %s66 = sphi 0, %s68
    %s69 = sphi 0, %s66
    %s70 = sphi 0, %s69
    %s86 = sphi 0, %s70
    %s94 = sphi 0, %s96
    %s97 = sphi 0, %s94
    %s98 = sphi 0, %s97
    %s114 = sphi 0, %s98
    %s124 = sphi 0, %s126
    %s127 = sphi 0, %s124
    %s128 = sphi 0, %s127
    %s144 = sphi 0, %s128
  $region4: #{encoder_forward.2} parent=0 // loop_header_branch
    %12 = sbr.rel (%p10) target = $region8
  $region5: #{encoder_forward.2} parent=0 // loop_body
    %s14 = ssub.s32 %s9, 1
    %s15 = ssub.s32 %s9, 2
    %s25 = sadd.s32 1, %s18
    %p26 = scmp.ge.s32.totalorder %s25, 1
    %s27 = scalar_select %p26, 0, %s25
    %s28 = sadd.s32 1, %s17
    %s29 = scalar_select %p26, %s28, %s17
    %p30 = scmp.ge.s32.totalorder %s29, 1
    %s31 = scalar_select %p30, 0, %s29
    %s32 = sadd.s32 1, %s16
    %s33 = scalar_select %p30, %s32, %s16
    %p34 = scmp.ge.s32.totalorder %s33, 2
    %s35 = scalar_select %p34, 0, %s33
    %s36 = ssub.s32 %s18, %s27
    %p37 = scmp.eq.s32.totalorder %s36, 0
    %s39 = sadd.s32 %s38, 1
    %s40 = scalar_select %p37, %s38, %s39
    %p43 = pneg %p37
    %p44 = scmp.eq.s32.totalorder %s9, 1
    %p45 = por %p43, %p44
    %p46 = scmp.ne.s32.totalorder %s38, %s41
    %p47 = scmp.eq.s32.totalorder %s9, 0
    %p48 = por %p46, %p47
    %p49 = scmp.ne.s32.totalorder %s38, %s41
    %p50 = scmp.eq.s32.totalorder %s14, 1
    %p51 = por %p49, %p50
    %p52 = scmp.ne.s32.totalorder %s41, %s42
    %p53 = scmp.eq.s32.totalorder %s14, 0
    %p54 = por %p52, %p53
    %p55 = scmp.ne.s32.totalorder %s41, %s42
    %p56 = scmp.eq.s32.totalorder %s15, 1
    %p57 = por %p55, %p56
    %p59 = scmp.ne.s32.totalorder %s42, %s58
    %p60 = scmp.eq.s32.totalorder %s15, 0
    %p61 = por %p59, %p60
    %s62 = ssub.s32 %s16, %s35
    %s63 = ssub.s32 %s17, %s31
    %s64 = sor.u32 %s62, %s63
    %p65 = scmp.eq.s32.totalorder %s64, 0
    %s67 = sadd.s32 %s66, 1
    %s68 = scalar_select %p65, %s66, %s67
    %p71 = pneg %p65
    %p72 = scmp.eq.s32.totalorder %s9, 1
    %p73 = por %p71, %p72
    %p74 = scmp.ne.s32.totalorder %s66, %s69
    %p75 = scmp.eq.s32.totalorder %s9, 0
    %p76 = por %p74, %p75
    %p77 = scmp.ne.s32.totalorder %s66, %s69
    %p78 = scmp.eq.s32.totalorder %s14, 1
    %p79 = por %p77, %p78
    %p80 = scmp.ne.s32.totalorder %s69, %s70
    %p81 = scmp.eq.s32.totalorder %s14, 0
    %p82 = por %p80, %p81
    %p83 = scmp.ne.s32.totalorder %s69, %s70
    %p84 = scmp.eq.s32.totalorder %s15, 1
    %p85 = por %p83, %p84
    %p87 = scmp.ne.s32.totalorder %s70, %s86
    %p88 = scmp.eq.s32.totalorder %s15, 0
    %p89 = por %p87, %p88
    %s90 = ssub.s32 %s16, %s35
    %s91 = ssub.s32 %s17, %s31
    %s92 = sor.u32 %s90, %s91
    %p93 = scmp.eq.s32.totalorder %s92, 0
    %s95 = sadd.s32 %s94, 1
    %s96 = scalar_select %p93, %s94, %s95
    %p99 = pneg %p93
    %p100 = scmp.eq.s32.totalorder %s9, 1
    %p101 = por %p99, %p100
    %p102 = scmp.ne.s32.totalorder %s94, %s97
    %p103 = scmp.eq.s32.totalorder %s9, 0
    %p104 = por %p102, %p103
    %p105 = scmp.ne.s32.totalorder %s94, %s97
    %p106 = scmp.eq.s32.totalorder %s14, 1
    %p107 = por %p105, %p106
    %p108 = scmp.ne.s32.totalorder %s97, %s98
    %p109 = scmp.eq.s32.totalorder %s14, 0
    %p110 = por %p108, %p109
    %p111 = scmp.ne.s32.totalorder %s97, %s98
    %p112 = scmp.eq.s32.totalorder %s15, 1
    %p113 = por %p111, %p112
    %p115 = scmp.ne.s32.totalorder %s98, %s114
    %p116 = scmp.eq.s32.totalorder %s15, 0
    %p117 = por %p115, %p116
    %s118 = ssub.s32 %s16, %s35
    %s119 = ssub.s32 %s18, %s27
    %s120 = sor.u32 %s118, %s119
    %s121 = ssub.s32 %s17, %s31
    %s122 = sor.u32 %s120, %s121
    %p123 = scmp.eq.s32.totalorder %s122, 0
    %s125 = sadd.s32 %s124, 1
    %s126 = scalar_select %p123, %s124, %s125
    %p129 = pneg %p123
    %p130 = scmp.eq.s32.totalorder %s9, 1
    %p131 = por %p129, %p130
    %p132 = scmp.ne.s32.totalorder %s124, %s127
    %p133 = scmp.eq.s32.totalorder %s9, 0
    %p134 = por %p132, %p133
    %p135 = scmp.ne.s32.totalorder %s124, %s127
    %p136 = scmp.eq.s32.totalorder %s14, 1
    %p137 = por %p135, %p136
    %p138 = scmp.ne.s32.totalorder %s127, %s128
    %p139 = scmp.eq.s32.totalorder %s14, 0
    %p140 = por %p138, %p139
    %p141 = scmp.ne.s32.totalorder %s127, %s128
    %p142 = scmp.eq.s32.totalorder %s15, 1
    %p143 = por %p141, %p142
    %p145 = scmp.ne.s32.totalorder %s128, %s144
    %p146 = scmp.eq.s32.totalorder %s15, 0
    %p147 = por %p145, %p146
    %p148 = scmp.le.s32.totalorder 1, %s9
    %p149 = scmp.lt.s32.totalorder %s9, 3
    %p150 = pnand %p148, %p149
    %p151 = pneg %p150
    // Predicated region
    $region9: #{encoder_forward.2} parent=5 // pred_check
      _
    $region10: #{encoder_forward.2} parent=5 // pred_check_branch
      %153 = sbr.rel (%p150) target = $region12
    $region11: #{encoder_forward.2} parent=5 // pred_region
      %s154 = ssub.s32 %s9, 1
      // Predicated region
      $region13: #{encoder_forward.2} parent=11 // pred_check
        %p155 = pneg %p54
      $region14: #{encoder_forward.2} parent=11 // pred_check_branch
        %157 = sbr.rel (%p155) target = $region16
      $region15: #{encoder_forward.2} parent=11 // pred_region
        %s158 = smul.u32 8, %s21
        %p159 = scmp.lt.s32.totalorder %s158, 7
        %s160 = scalar_select %p159, %s158, 7
        %s161 = smul.addr %s160, 4
        %s162 = scalar_lea.vmem %s0, %s161
        %s163 = smul.u32 8, %s21
      $region16: #{encoder_forward.2} parent=11 // pred_fallthru
        _
    $region12: #{encoder_forward.2} parent=5 // pred_fallthru
      _
    %p164 = scmp.lt.s32.totalorder %s9, 2
    // Predicated region
    $region17: #{encoder_forward.2} parent=5 // pred_check
      %p165 = pneg %p164
    $region18: #{encoder_forward.2} parent=5 // pred_check_branch
      %167 = sbr.rel (%p165) target = $region20
    $region19: #{encoder_forward.2} parent=5 // pred_region
      // Predicated region
      $region21: #{encoder_forward.2} parent=19 // pred_check
        %p168 = pneg %p76
      $region22: #{encoder_forward.2} parent=19 // pred_check_branch
        %170 = sbr.rel (%p168) target = $region24
      $region23: #{encoder_forward.2} parent=19 // pred_region
        %s171 = smul.u32 4, %s17
        %p172 = scmp.lt.s32.totalorder %s16, 1
        %s173 = scalar_select %p172, %s16, 1
        %p174 = scmp.lt.s32.totalorder %s171, 3
        %s175 = scalar_select %p174, %s171, 3
        %s176 = smul.addr %s173, 8
        %s177 = sadd.s32 %s175, %s176
        %s178 = smul.addr %s177, 4
        %s179 = scalar_lea.vmem %s1, %s178
        %s180 = smul.u32 4, %s17
      $region24: #{encoder_forward.2} parent=19 // pred_fallthru
        _
      // Predicated region
      $region25: #{encoder_forward.2} parent=19 // pred_check
        %p181 = pneg %p104
      $region26: #{encoder_forward.2} parent=19 // pred_check_branch
        %183 = sbr.rel (%p181) target = $region28
      $region27: #{encoder_forward.2} parent=19 // pred_region
        %s184 = smul.u32 4, %s17
        %p185 = scmp.lt.s32.totalorder %s16, 1
        %s186 = scalar_select %p185, %s16, 1
        %p187 = scmp.lt.s32.totalorder %s184, 3
        %s188 = scalar_select %p187, %s184, 3
        %s189 = smul.addr %s186, 4
        %s190 = sadd.s32 %s188, %s189
        %s191 = scalar_lea.vmem %s2, %s190
        %s192 = smul.u32 4, %s17
      $region28: #{encoder_forward.2} parent=19 // pred_fallthru
        _
    $region20: #{encoder_forward.2} parent=5 // pred_fallthru
      _
    %p193 = scmp.le.s32.totalorder 1, %s9
    %p194 = scmp.lt.s32.totalorder %s9, 3
    %p195 = pnand %p193, %p194
    %p196 = pneg %p195
    // Predicated region
    $region29: #{encoder_forward.2} parent=5 // pred_check
      _
    $region30: #{encoder_forward.2} parent=5 // pred_check_branch
      %198 = sbr.rel (%p195) target = $region32
    $region31: #{encoder_forward.2} parent=5 // pred_region
      %s199 = ssub.s32 %s9, 1
      %s200 = smul.u32 8, %s21
      %p201 = scmp.lt.s32.totalorder %s200, 7
      %s202 = scalar_select %p201, %s200, 7
      %s203 = smul.addr %s202, 4
      %s204 = scalar_lea.vmem %s0, %s203
      %p205 = pneg %p54
      %p206 = pneg %p51
      %s207 = smul.u32 4, %s20
      %p208 = scmp.lt.s32.totalorder %s19, 1
      %s209 = scalar_select %p208, %s19, 1
      %p210 = scmp.lt.s32.totalorder %s207, 3
      %s211 = scalar_select %p210, %s207, 3
      %s212 = smul.addr %s209, 8
      %s213 = sadd.s32 %s211, %s212
      %s214 = smul.addr %s213, 4
      %s215 = scalar_lea.vmem %s1, %s214
      %p216 = pneg %p82
      %p217 = pneg %p79
      %s218 = smul.u32 4, %s20
      %p219 = scmp.lt.s32.totalorder %s19, 1
      %s220 = scalar_select %p219, %s19, 1
      %p221 = scmp.lt.s32.totalorder %s218, 3
      %s222 = scalar_select %p221, %s218, 3
      %s223 = smul.addr %s220, 4
      %s224 = sadd.s32 %s222, %s223
      %s225 = scalar_lea.vmem %s2, %s224
      %p226 = pneg %p110
      %p227 = pneg %p107
      %p228 = pneg %p140
      %p229 = pneg %p137
      %s230 = smul.u32 8, %s21
      %s231 = smul.u32 4, %s20
      %p232 = scmp.lt.s32.totalorder %s19, 1
      %s233 = scalar_select %p232, %s19, 1
      %p234 = scmp.lt.s32.totalorder %s230, 7
      %s235 = scalar_select %p234, %s230, 7
      %p236 = scmp.lt.s32.totalorder %s231, 3
      %s237 = scalar_select %p236, %s231, 3
      %s238 = smul.addr %s235, 4
      %s239 = sadd.s32 %s237, %s238
      %s240 = smul.addr %s233, 32
      %s241 = sadd.s32 %s239, %s240
      %s242 = smul.addr %s241, 4
      %s243 = scalar_lea.vmem %s3, %s242
      %s244 = smul.u32 8, %s21
      %p245 = scmp.lt.s32.totalorder %s244, 7
      %s246 = scalar_select %p245, %s244, 7
      %s247 = smul.addr %s246, 4
      %s248 = scalar_lea.vmem %s0, %s247
      %s249 = smul.u32 8, %s21
      %s250 = smul.u32 4, %s20
      %p251 = scmp.lt.s32.totalorder %s19, 1
      %s252 = scalar_select %p251, %s19, 1
      %p253 = scmp.lt.s32.totalorder %s250, 3
      %s254 = scalar_select %p253, %s250, 3
      %s255 = smul.addr %s252, 8
      %s256 = sadd.s32 %s254, %s255
      %s257 = smul.addr %s256, 4
      %s258 = scalar_lea.vmem %s1, %s257
      %s259 = smul.u32 4, %s20
      %s260 = smul.u32 4, %s20
      %p261 = scmp.lt.s32.totalorder %s19, 1
      %s262 = scalar_select %p261, %s19, 1
      %p263 = scmp.lt.s32.totalorder %s260, 3
      %s264 = scalar_select %p263, %s260, 3
      %s265 = smul.addr %s262, 4
      %s266 = sadd.s32 %s264, %s265
      %s267 = scalar_lea.vmem %s2, %s266
      %s268 = smul.u32 4, %s20
      %s269 = smul.u32 8, %s21
      %s270 = smul.u32 4, %s20
      %p271 = scmp.lt.s32.totalorder %s19, 1
      %s272 = scalar_select %p271, %s19, 1
      %p273 = scmp.lt.s32.totalorder %s269, 7
      %s274 = scalar_select %p273, %s269, 7
      %p275 = scmp.lt.s32.totalorder %s270, 3
      %s276 = scalar_select %p275, %s270, 3
      %s277 = smul.addr %s274, 4
      %s278 = sadd.s32 %s276, %s277
      %s279 = smul.addr %s272, 32
      %s280 = sadd.s32 %s278, %s279
      %s281 = smul.addr %s280, 4
      %s282 = scalar_lea.vmem %s3, %s281
      %s283 = smul.u32 8, %s21
      %s284 = smul.u32 4, %s20
      %v286 = vld [vmem:[%s248] sm:$0xf]
      %v287 = vld [vmem:[%s248 + $0x4] sm:$0xf]
      %v288 = vld [vmem:[%s248 + $0x8] sm:$0xf]
      %v289 = vld [vmem:[%s248 + $0xc] sm:$0xf]
      %v290 = vld [vmem:[%s248 + $0x10] sm:$0xf]
      %v291 = vld [vmem:[%s248 + $0x14] sm:$0xf]
      %v292 = vld [vmem:[%s248 + $0x18] sm:$0xf]
      %v293 = vld [vmem:[%s248 + $0x1c] sm:$0xf]
      %v294 = vld [vmem:[%s258] sm:$0xff]
      %v295 = vld [vmem:[%s258 + $0x8] sm:$0xff]
      %v296 = vld [vmem:[%s258 + $0x10] sm:$0xff]
      %v297 = vld [vmem:[%s258 + $0x18] sm:$0xff]
      %v298 = vld [vmem:[%s267] sm:$0xf]
      %v300 = vlaneseq
      %v301 = vshrl.u32 %v300, 7
      %v302 = vsub.s32 0, %v301
      %v303 = vrot.slane %v298, %v302
      %v304 = vlaneseq
      %v305 = vshrl.u32 %v304, 7
      %v306 = vsub.s32 1, %v305
      %v307 = vrot.slane %v298, %v306
      %v308 = vlaneseq
      %v309 = vshrl.u32 %v308, 7
      %v310 = vsub.s32 2, %v309
      %v311 = vrot.slane %v298, %v310
      %v312 = vlaneseq
      %v313 = vshrl.u32 %v312, 7
      %v314 = vsub.s32 3, %v313
      %v315 = vrot.slane %v298, %v314
      %v328 = vunpack.c.l.b16 %v286
      %v329 = vunpack.c.l.b16 %v287
      %v330 = vunpack.c.l.b16 %v288
      %v331 = vunpack.c.l.b16 %v289
      %v332 = vunpack.c.l.b16 %v290
      %v333 = vunpack.c.l.b16 %v291
      %v334 = vunpack.c.l.b16 %v292
      %v335 = vunpack.c.l.b16 %v293
      %v336 = vpack.c.b16 %v329, %v328
      %v337 = vpack.c.b16 %v331, %v330
      %v338 = vpack.c.b16 %v333, %v332
      %v339 = vpack.c.b16 %v335, %v334
      %v344 = vunpack.c.l.b16 %v294
      %v345 = vunpack.c.h.b16 %v294
      %v346 = vunpack.c.l.b16 %v295
      %v347 = vunpack.c.h.b16 %v295
      %v348 = vunpack.c.l.b16 %v296
      %v349 = vunpack.c.h.b16 %v296
      %v350 = vunpack.c.l.b16 %v297
      %v351 = vunpack.c.h.b16 %v297
      %v352 = vpack.c.b16 %v348, %v344
      %v353 = vpack.c.b16 %v349, %v345
      %v354 = vpack.c.b16 %v350, %v346
      %v355 = vpack.c.b16 %v351, %v347
      %vm360 = vcmask 130048
      %v362 = vsel %vm360, %v336, 0
      %v365 = vsel %vm360, %v337, 0
      %v368 = vsel %vm360, %v338, 0
      %v371 = vsel %vm360, %v339, 0
      %373 = vmatprep.subr.bf16.mxu0 %v353
      %374 = vmatpush1.bf16.msra.mxu0 %v352
      %375 = vmatprep.subr.bf16.mxu0 0
      %376 = vmatpush1.bf16.msra.mxu0 0
      %377 = vmatprep.subr.bf16.mxu0 0
      %378 = vmatpush1.bf16.msra.mxu0 0
      %379 = vmatprep.subr.bf16.mxu0 0
      %380 = vmatpush1.bf16.msra.mxu0 0
      %381 = vmatprep.subr.bf16.mxu0 0
      %382 = vmatpush1.bf16.msra.mxu0 0
      %383 = vmatprep.subr.bf16.mxu0 0
      %384 = vmatpush1.bf16.msra.mxu0 0
      %385 = vmatprep.subr.bf16.mxu0 0
      %386 = vmatpush1.bf16.msra.mxu0 0
      %387 = vmatprep.subr.bf16.mxu0 0
      %388 = vmatpush1.bf16.msra.mxu0 0
      %389 = vmatprep.subr.bf16.mxu0 0
      %390 = vmatpush1.bf16.msra.mxu0 0
      %391 = vmatprep.subr.bf16.mxu0 0
      %392 = vmatpush1.bf16.msra.mxu0 0
      %393 = vmatprep.subr.bf16.mxu0 0
      %394 = vmatpush1.bf16.msra.mxu0 0
      %395 = vmatprep.subr.bf16.mxu0 0
      %396 = vmatpush1.bf16.msra.mxu0 0
      %397 = vmatprep.subr.bf16.mxu0 0
      %398 = vmatpush1.bf16.msra.mxu0 0
      %399 = vmatprep.subr.bf16.mxu0 0
      %400 = vmatpush1.bf16.msra.mxu0 0
      %401 = vmatprep.subr.bf16.mxu0 0
      %402 = vmatpush1.bf16.msra.mxu0 0
      %403 = vmatprep.subr.bf16.mxu0 0
      %404 = vmatpush1.bf16.msra.mxu0 0
      %405 = vmatprep.mubr.bf16.mxu0 0
      %406 = vmatmul.mubr.bf16.gmra.mrb[0].mxu0 %v362
      %v407 = vpop.f32.mrb[0].mxu0
      %v408 = vadd.f32 %v303, %v407
      %v409 = vpop.f32.mrb[0].mxu0
      %v410 = vadd.f32 %v307, %v409
      %v411 = vpop.f32.mrb[0].mxu0
      %v412 = vadd.f32 %v303, %v411
      %v413 = vpop.f32.mrb[0].mxu0
      %v414 = vadd.f32 %v307, %v413
      %415 = vmatprep.mubr.bf16.mxu0 0
      %416 = vmatmul.mubr.bf16.gmra.mrb[0].mxu0 %v365
      %v417 = vpop.f32.mrb[0].mxu0
      %v418 = vadd.f32 %v303, %v417
      %v419 = vpop.f32.mrb[0].mxu0
      %v420 = vadd.f32 %v307, %v419
      %v421 = vpop.f32.mrb[0].mxu0
      %v422 = vadd.f32 %v303, %v421
      %v423 = vpop.f32.mrb[0].mxu0
      %v424 = vadd.f32 %v307, %v423
      %425 = vmatprep.mubr.bf16.mxu0 0
      %426 = vmatmul.mubr.bf16.gmra.mrb[0].mxu0 %v368
      %v427 = vpop.f32.mrb[0].mxu0
      %v428 = vadd.f32 %v303, %v427
      %v429 = vpop.f32.mrb[0].mxu0
      %v430 = vadd.f32 %v307, %v429
      %v431 = vpop.f32.mrb[0].mxu0
      %v432 = vadd.f32 %v303, %v431
      %v433 = vpop.f32.mrb[0].mxu0
      %v434 = vadd.f32 %v307, %v433
      %435 = vmatprep.mubr.bf16.mxu0 0
      %436 = vmatmul.mubr.bf16.gmra.mrb[0].mxu0 %v371
      %v437 = vpop.f32.mrb[0].mxu0
      %v438 = vadd.f32 %v303, %v437
      %v439 = vpop.f32.mrb[0].mxu0
      %v440 = vadd.f32 %v307, %v439
      %v441 = vpop.f32.mrb[0].mxu0
      %v442 = vadd.f32 %v303, %v441
      %v443 = vpop.f32.mrb[0].mxu0
      %v444 = vadd.f32 %v307, %v443
      %445 = vdwg.mxu0
      %446 = vmatprep.subr.bf16.mxu0 %v355
      %447 = vmatpush1.bf16.msra.mxu0 %v354
      %448 = vmatprep.subr.bf16.mxu0 0
      %449 = vmatpush1.bf16.msra.mxu0 0
      %450 = vmatprep.subr.bf16.mxu0 0
      %451 = vmatpush1.bf16.msra.mxu0 0
      %452 = vmatprep.subr.bf16.mxu0 0
      %453 = vmatpush1.bf16.msra.mxu0 0
      %454 = vmatprep.subr.bf16.mxu0 0
      %455 = vmatpush1.bf16.msra.mxu0 0
      %456 = vmatprep.subr.bf16.mxu0 0
      %457 = vmatpush1.bf16.msra.mxu0 0
      %458 = vmatprep.subr.bf16.mxu0 0
      %459 = vmatpush1.bf16.msra.mxu0 0
      %460 = vmatprep.subr.bf16.mxu0 0
      %461 = vmatpush1.bf16.msra.mxu0 0
      %462 = vmatprep.subr.bf16.mxu0 0
      %463 = vmatpush1.bf16.msra.mxu0 0
      %464 = vmatprep.subr.bf16.mxu0 0
      %465 = vmatpush1.bf16.msra.mxu0 0
      %466 = vmatprep.subr.bf16.mxu0 0
      %467 = vmatpush1.bf16.msra.mxu0 0
      %468 = vmatprep.subr.bf16.mxu0 0
      %469 = vmatpush1.bf16.msra.mxu0 0
      %470 = vmatprep.subr.bf16.mxu0 0
      %471 = vmatpush1.bf16.msra.mxu0 0
      %472 = vmatprep.subr.bf16.mxu0 0
      %473 = vmatpush1.bf16.msra.mxu0 0
      %474 = vmatprep.subr.bf16.mxu0 0
      %475 = vmatpush1.bf16.msra.mxu0 0
      %476 = vmatprep.subr.bf16.mxu0 0
      %477 = vmatpush1.bf16.msra.mxu0 0
      %478 = vmatprep.mubr.bf16.mxu0 0
      %479 = vmatmul.mubr.bf16.gmra.mrb[0].mxu0 %v362
      %v480 = vpop.f32.mrb[0].mxu0
      %v481 = vadd.f32 %v311, %v480
      %v482 = vpop.f32.mrb[0].mxu0
      %v483 = vadd.f32 %v315, %v482
      %v484 = vpop.f32.mrb[0].mxu0
      %v485 = vadd.f32 %v311, %v484
      %v486 = vpop.f32.mrb[0].mxu0
      %v487 = vadd.f32 %v315, %v486
      %488 = vmatprep.mubr.bf16.mxu0 0
      %489 = vmatmul.mubr.bf16.gmra.mrb[0].mxu0 %v365
      %v490 = vpop.f32.mrb[0].mxu0
      %v491 = vadd.f32 %v311, %v490
      %v492 = vpop.f32.mrb[0].mxu0
      %v493 = vadd.f32 %v315, %v492
      %v494 = vpop.f32.mrb[0].mxu0
      %v495 = vadd.f32 %v311, %v494
      %v496 = vpop.f32.mrb[0].mxu0
      %v497 = vadd.f32 %v315, %v496
      %498 = vmatprep.mubr.bf16.mxu0 0
      %499 = vmatmul.mubr.bf16.gmra.mrb[0].mxu0 %v368
      %v500 = vpop.f32.mrb[0].mxu0
      %v501 = vadd.f32 %v311, %v500
      %v502 = vpop.f32.mrb[0].mxu0
      %v503 = vadd.f32 %v315, %v502
      %v504 = vpop.f32.mrb[0].mxu0
      %v505 = vadd.f32 %v311, %v504
      %v506 = vpop.f32.mrb[0].mxu0
      %v507 = vadd.f32 %v315, %v506
      %508 = vmatprep.mubr.bf16.mxu0 0
      %509 = vmatmul.mubr.bf16.gmra.mrb[0].mxu0 %v371
      %v510 = vpop.f32.mrb[0].mxu0
      %v511 = vadd.f32 %v311, %v510
      %v512 = vpop.f32.mrb[0].mxu0
      %v513 = vadd.f32 %v315, %v512
      %v514 = vpop.f32.mrb[0].mxu0
      %v515 = vadd.f32 %v311, %v514
      %v516 = vpop.f32.mrb[0].mxu0
      %v517 = vadd.f32 %v315, %v516
      %518 = vdwg.mxu0
      %v519 = vpack.c.bf16 %v412, %v408
      %v520 = vpack.c.bf16 %v414, %v410
      %v521 = vpack.c.bf16 %v485, %v481
      %v522 = vpack.c.bf16 %v487, %v483
      %v523 = vpack.c.bf16 %v422, %v418
      %v524 = vpack.c.bf16 %v424, %v420
      %v525 = vpack.c.bf16 %v495, %v491
      %v526 = vpack.c.bf16 %v497, %v493
      %v527 = vpack.c.bf16 %v432, %v428
      %v528 = vpack.c.bf16 %v434, %v430
      %v529 = vpack.c.bf16 %v505, %v501
      %v530 = vpack.c.bf16 %v507, %v503
      %v531 = vpack.c.bf16 %v442, %v438
      %v532 = vpack.c.bf16 %v444, %v440
      %v533 = vpack.c.bf16 %v515, %v511
      %v534 = vpack.c.bf16 %v517, %v513
      %v551 = vunpack.c.l.b16 %v519
      %v552 = vunpack.c.l.b16 %v520
      %v553 = vunpack.c.l.b16 %v521
      %v554 = vunpack.c.l.b16 %v522
      %v555 = vunpack.c.h.b16 %v519
      %v556 = vunpack.c.h.b16 %v520
      %v557 = vunpack.c.h.b16 %v521
      %v558 = vunpack.c.h.b16 %v522
      %v559 = vunpack.c.l.b16 %v523
      %v560 = vunpack.c.l.b16 %v524
      %v561 = vunpack.c.l.b16 %v525
      %v562 = vunpack.c.l.b16 %v526
      %v563 = vunpack.c.h.b16 %v523
      %v564 = vunpack.c.h.b16 %v524
      %v565 = vunpack.c.h.b16 %v525
      %v566 = vunpack.c.h.b16 %v526
      %v567 = vunpack.c.l.b16 %v527
      %v568 = vunpack.c.l.b16 %v528
      %v569 = vunpack.c.l.b16 %v529
      %v570 = vunpack.c.l.b16 %v530
      %v571 = vunpack.c.h.b16 %v527
      %v572 = vunpack.c.h.b16 %v528
      %v573 = vunpack.c.h.b16 %v529
      %v574 = vunpack.c.h.b16 %v530
      %v575 = vunpack.c.l.b16 %v531
      %v576 = vunpack.c.l.b16 %v532
      %v577 = vunpack.c.l.b16 %v533
      %v578 = vunpack.c.l.b16 %v534
      %v579 = vunpack.c.h.b16 %v531
      %v580 = vunpack.c.h.b16 %v532
      %v581 = vunpack.c.h.b16 %v533
      %v582 = vunpack.c.h.b16 %v534
      %v583 = vpack.c.b16 %v552, %v551
      %v584 = vpack.c.b16 %v554, %v553
      %v585 = vpack.c.b16 %v556, %v555
      %v586 = vpack.c.b16 %v558, %v557
      %v587 = vpack.c.b16 %v560, %v559
      %v588 = vpack.c.b16 %v562, %v561
      %v589 = vpack.c.b16 %v564, %v563
      %v590 = vpack.c.b16 %v566, %v565
      %v591 = vpack.c.b16 %v568, %v567
      %v592 = vpack.c.b16 %v570, %v569
      %v593 = vpack.c.b16 %v572, %v571
      %v594 = vpack.c.b16 %v574, %v573
      %v595 = vpack.c.b16 %v576, %v575
      %v596 = vpack.c.b16 %v578, %v577
      %v597 = vpack.c.b16 %v580, %v579
      %v598 = vpack.c.b16 %v582, %v581
      %615 = vst [vmem:[%s282] sm:$0xff] %v583
      %616 = vst [vmem:[%s282 + $0x8] sm:$0xff] %v584
      %617 = vst [vmem:[%s282 + $0x10] sm:$0xff] %v585
      %618 = vst [vmem:[%s282 + $0x18] sm:$0xff] %v586
      %619 = vst [vmem:[%s282 + $0x20] sm:$0xff] %v587
      %620 = vst [vmem:[%s282 + $0x28] sm:$0xff] %v588
      %621 = vst [vmem:[%s282 + $0x30] sm:$0xff] %v589
      %622 = vst [vmem:[%s282 + $0x38] sm:$0xff] %v590
      %623 = vst [vmem:[%s282 + $0x40] sm:$0xff] %v591
      %624 = vst [vmem:[%s282 + $0x48] sm:$0xff] %v592
      %625 = vst [vmem:[%s282 + $0x50] sm:$0xff] %v593
      %626 = vst [vmem:[%s282 + $0x58] sm:$0xff] %v594
      %627 = vst [vmem:[%s282 + $0x60] sm:$0xff] %v595
      %628 = vst [vmem:[%s282 + $0x68] sm:$0xff] %v596
      %629 = vst [vmem:[%s282 + $0x70] sm:$0xff] %v597
      %630 = vst [vmem:[%s282 + $0x78] sm:$0xff] %v598
      %s631 = smul.u32 8, %s21
      %s632 = smul.u32 4, %s20
      %p633 = scmp.lt.s32.totalorder %s19, 1
      %s634 = scalar_select %p633, %s19, 1
      %p635 = scmp.lt.s32.totalorder %s631, 7
      %s636 = scalar_select %p635, %s631, 7
      %p637 = scmp.lt.s32.totalorder %s632, 3
      %s638 = scalar_select %p637, %s632, 3
      %s639 = smul.addr %s636, 4
      %s640 = sadd.s32 %s638, %s639
      %s641 = smul.addr %s634, 32
      %s642 = sadd.s32 %s640, %s641
      %s643 = smul.addr %s642, 4
      %s644 = scalar_lea.vmem %s3, %s643
      // Predicated region
      $region33: #{encoder_forward.2} parent=31 // pred_check
        %p645 = pneg %p137
      $region34: #{encoder_forward.2} parent=31 // pred_check_branch
        %647 = sbr.rel (%p645) target = $region36
      $region35: #{encoder_forward.2} parent=31 // pred_region
        %s648 = smul.u32 8, %s21
        %s649 = smul.u32 4, %s20
      $region36: #{encoder_forward.2} parent=31 // pred_fallthru
        _
    $region32: #{encoder_forward.2} parent=5 // pred_fallthru
      _
    %p650 = scmp.le.s32.totalorder 2, %s9
    // Predicated region
    $region37: #{encoder_forward.2} parent=5 // pred_check
      %p651 = pneg %p650
    $region38: #{encoder_forward.2} parent=5 // pred_check_branch
      %653 = sbr.rel (%p651) target = $region40
    $region39: #{encoder_forward.2} parent=5 // pred_region
      %s654 = ssub.s32 %s9, 2
      // Predicated region
      $region41: #{encoder_forward.2} parent=39 // pred_check
        %p655 = pneg %p143
      $region42: #{encoder_forward.2} parent=39 // pred_check_branch
        %657 = sbr.rel (%p655) target = $region44
      $region43: #{encoder_forward.2} parent=39 // pred_region
        %s658 = smul.u32 8, %s24
        %s659 = smul.u32 4, %s23
        %p660 = scmp.lt.s32.totalorder %s22, 1
        %s661 = scalar_select %p660, %s22, 1
        %p662 = scmp.lt.s32.totalorder %s658, 7
        %s663 = scalar_select %p662, %s658, 7
        %p664 = scmp.lt.s32.totalorder %s659, 3
        %s665 = scalar_select %p664, %s659, 3
        %s666 = smul.addr %s663, 4
        %s667 = sadd.s32 %s665, %s666
        %s668 = smul.addr %s661, 32
        %s669 = sadd.s32 %s667, %s668
        %s670 = smul.addr %s669, 4
        %s671 = scalar_lea.vmem %s3, %s670
      $region44: #{encoder_forward.2} parent=39 // pred_fallthru
        _
    $region40: #{encoder_forward.2} parent=5 // pred_fallthru
      _
  $region6: #{encoder_forward.2} parent=0 // loop_footer
    %s13 = sadd.s32 1, %s9
  $region7: #{encoder_forward.2} parent=0 // loop_footer_branch
    %8 = sbr.rel target = $region3
  $region8: #{encoder_forward.2} parent=0 // loop_exit
    _

// kernel: encoder_forward.3
$region0: #{encoder_forward.3}
  #allocation0 [shape = 'u32[]', space=smem, size = 0x4, offset = 0x4, fixed_abs, tag = 'smem constant byte address 0x4 - core index']
  #allocation1 [shape = 'u32[144,128]{1,0:T(1,128)}', space=vmem, size = 0x12000, scoped, tag = 'internal scratch']
  #allocation2 [shape = 'f32[8,128]{1,0:T(8,128)}', space=vmem, size = 0x1000, scoped, tag = 'scratch operand']
  #allocation3 [shape = 'f32[8,128]{1,0:T(8,128)}', space=vmem, size = 0x1000, scoped, tag = 'scratch operand']
  #allocation4 [shape = 'f32[8,128]{1,0:T(8,128)}', space=vmem, size = 0x1000, scoped, tag = 'scratch operand']
  #allocation5 [shape = 'f32[8,128]{1,0:T(8,128)}', space=vmem, size = 0x1000, scoped, tag = 'scratch operand']
  %s0 = inlined_call_operand.vmem [shape: bf16[2,8,8,512], index: 0, kind: input, shape index: {}, may-alias: {0,1}]
  %s1 = inlined_call_operand.vmem [shape: bf16[2,8,8,512], index: 1, kind: input, shape index: {}, may-alias: {0,1}]
  %s2 = inlined_call_operand.vmem [shape: bf16[128,512], index: 2, kind: input, shape index: {}]
  %s3 = inlined_call_operand.vmem [shape: bf16[128,512], index: 3, kind: input, shape index: {}]
  %s4 = inlined_call_operand.vmem [shape: bf16[8,8,128], index: 4, kind: output, shape index: {0}]
  %s5 = inlined_call_operand.vmem [shape: bf16[8,8,128], index: 5, kind: output, shape index: {1}]
  %s6 = inlined_call_operand.vmem [shape: f32[8,128], index: 6, kind: output, shape index: {2}]
  %s7 = inlined_call_operand.vmem [shape: f32[8,128], index: 7, kind: output, shape index: {3}]
  %8 = xla_tuple %s4, %s5, %s6, %s7
  %s9 = sld [smem:[#allocation0]]
  $region58: #{encoder_forward.3} parent=0
    _
  %s11 = ssub.s32 1, %s9
  %s12 = scalar_select 0, %s11, %s9
  // Predicated region
  $region2: #{encoder_forward.3} parent=0 // pred_check
    _
  $region3: #{encoder_forward.3} parent=0 // pred_check_branch
    %14 = sbr.rel (0) target = $region5
  $region4: #{encoder_forward.3} parent=0 // pred_region
    _
  $region5: #{encoder_forward.3} parent=0 // pred_fallthru
    _
  // Predicated region
  $region6: #{encoder_forward.3} parent=0 // pred_check
    _
  $region7: #{encoder_forward.3} parent=0 // pred_check_branch
    %16 = sbr.rel (0) target = $region9
  $region8: #{encoder_forward.3} parent=0 // pred_region
    %s17 = ssub.s32 0, 0
    %s18 = smul.u32 8, %s17
    %p19 = scmp.lt.s32.totalorder %s18, 7
    %s20 = scalar_select %p19, %s18, 7
    %s21 = smul.addr %s20, 4
    %s22 = sadd.s32 %s21, 32
    %s23 = smul.addr %s22, 4
    %s24 = scalar_lea.vmem %s1, %s23
    %s25 = ssub.s32 0, 0
    %s26 = smul.u32 8, %s25
  $region9: #{encoder_forward.3} parent=0 // pred_fallthru
    _
  // Predicated region
  $region10: #{encoder_forward.3} parent=0 // pred_check
    _
  $region11: #{encoder_forward.3} parent=0 // pred_check_branch
    %28 = sbr.rel (0) target = $region13
  $region12: #{encoder_forward.3} parent=0 // pred_region
    _
  $region13: #{encoder_forward.3} parent=0 // pred_fallthru
    _
  // Predicated region
  $region14: #{encoder_forward.3} parent=0 // pred_check
    _
  $region15: #{encoder_forward.3} parent=0 // pred_check_branch
    %30 = sbr.rel (0) target = $region17
  $region16: #{encoder_forward.3} parent=0 // pred_region
    _
  $region17: #{encoder_forward.3} parent=0 // pred_fallthru
    _
  %s31 = ssub.s32 0, 0
  %s32 = smul.u32 8, %s31
  %p33 = scmp.lt.s32.totalorder %s32, 7
  %s34 = scalar_select %p33, %s32, 7
  %s35 = smul.addr %s34, 4
  %s36 = sadd.s32 %s35, 32
  %s37 = smul.addr %s36, 4
  %s38 = scalar_lea.vmem %s1, %s37
  %s39 = ssub.s32 0, 0
  %s40 = smul.u32 8, %s39
  %p41 = scmp.lt.s32.totalorder %s40, 7
  %s42 = scalar_select %p41, %s40, 7
  %s43 = smul.addr %s42, 4
  %s44 = scalar_lea.vmem %s5, %s43
  %s45 = ssub.s32 0, 0
  %s46 = smul.u32 8, %s45
  %p47 = scmp.lt.s32.totalorder %s46, 7
  %s48 = scalar_select %p47, %s46, 7
  %s49 = smul.addr %s48, 4
  %s50 = sadd.s32 %s49, 32
  %s51 = smul.addr %s50, 4
  %s52 = scalar_lea.vmem %s1, %s51
  %s53 = ssub.s32 0, 0
  %s54 = smul.u32 8, %s53
  %s55 = ssub.s32 0, 0
  %s56 = smul.u32 8, %s55
  %p57 = scmp.lt.s32.totalorder %s56, 7
  %s58 = scalar_select %p57, %s56, 7
  %s59 = smul.addr %s58, 4
  %s60 = scalar_lea.vmem %s5, %s59
  %s61 = ssub.s32 0, 0
  %s62 = smul.u32 8, %s61
  %p64 = scmp.eq.s32.totalorder 0, 0
  // Predicated region
  $region18: #{encoder_forward.3} parent=0 // pred_check
    %p65 = pneg %p64
  $region19: #{encoder_forward.3} parent=0 // pred_check_branch
    %67 = sbr.rel (%p65) target = $region21
  $region20: #{encoder_forward.3} parent=0 // pred_region
    %68 = vst [vmem:[#allocation2] sm:$0xff] 0.0
    %69 = vst [vmem:[#allocation3] sm:$0xff] 0.0
    %70 = vst [vmem:[#allocation4] sm:$0xff] 0.0
    %71 = vst [vmem:[#allocation5] sm:$0xff] 0.0
  $region21: #{encoder_forward.3} parent=0 // pred_fallthru
    _
  %v72 = vld [vmem:[#allocation2] sm:$0xff]
  %v73 = vld [vmem:[#allocation3] sm:$0xff]
  %v74 = vld [vmem:[#allocation4] sm:$0xff]
  %v75 = vld [vmem:[#allocation5] sm:$0xff]
  %v76 = vld [vmem:[%s0] sm:$0xff]
  %v77 = vld [vmem:[%s0 + $0x8] sm:$0xff]
  %v78 = vunpack.c.l.bf16 %v76
  %v79 = vunpack.c.h.bf16 %v76
  %v80 = vunpack.c.l.bf16 %v77
  %v81 = vunpack.c.h.bf16 %v77
  %v82 = vpack.c.bf16 %v72, %v72
  %v83 = vld [vmem:[%s2] sm:$0xff]
  %v84 = vld [vmem:[%s2 + $0x8] sm:$0xff]
  %v85 = vld [vmem:[%s2 + $0x10] sm:$0xff]
  %v86 = vld [vmem:[%s2 + $0x18] sm:$0xff]
  %v87 = vld [vmem:[%s2 + $0x20] sm:$0xff]
  %v88 = vld [vmem:[%s2 + $0x28] sm:$0xff]
  %v89 = vld [vmem:[%s2 + $0x30] sm:$0xff]
  %v90 = vld [vmem:[%s2 + $0x38] sm:$0xff]
  %v91 = vld [vmem:[%s2 + $0x40] sm:$0xff]
  %v92 = vld [vmem:[%s2 + $0x48] sm:$0xff]
  %v93 = vld [vmem:[%s2 + $0x50] sm:$0xff]
  %v94 = vld [vmem:[%s2 + $0x58] sm:$0xff]
  %v95 = vld [vmem:[%s2 + $0x60] sm:$0xff]
  %v96 = vld [vmem:[%s2 + $0x68] sm:$0xff]
  %v97 = vld [vmem:[%s2 + $0x70] sm:$0xff]
  %v98 = vld [vmem:[%s2 + $0x78] sm:$0xff]
  %v99 = vld [vmem:[%s2 + $0x80] sm:$0xff]
  %v100 = vld [vmem:[%s2 + $0x88] sm:$0xff]
  %v101 = vld [vmem:[%s2 + $0x90] sm:$0xff]
  %v102 = vld [vmem:[%s2 + $0x98] sm:$0xff]
  %v103 = vld [vmem:[%s2 + $0xa0] sm:$0xff]
  %v104 = vld [vmem:[%s2 + $0xa8] sm:$0xff]
  %v105 = vld [vmem:[%s2 + $0xb0] sm:$0xff]
  %v106 = vld [vmem:[%s2 + $0xb8] sm:$0xff]
  %v107 = vld [vmem:[%s2 + $0xc0] sm:$0xff]
  %v108 = vld [vmem:[%s2 + $0xc8] sm:$0xff]
  %v109 = vld [vmem:[%s2 + $0xd0] sm:$0xff]
  %v110 = vld [vmem:[%s2 + $0xd8] sm:$0xff]
  %v111 = vld [vmem:[%s2 + $0xe0] sm:$0xff]
  %v112 = vld [vmem:[%s2 + $0xe8] sm:$0xff]
  %v113 = vld [vmem:[%s2 + $0xf0] sm:$0xff]
  %v114 = vld [vmem:[%s2 + $0xf8] sm:$0xff]
  %v147 = vunpack.c.l.b16 %v83
  %v148 = vunpack.c.h.b16 %v83
  %v149 = vunpack.c.l.b16 %v84
  %v150 = vunpack.c.h.b16 %v84
  %v151 = vunpack.c.l.b16 %v85
  %v152 = vunpack.c.h.b16 %v85
  %v153 = vunpack.c.l.b16 %v86
  %v154 = vunpack.c.h.b16 %v86
  %v155 = vunpack.c.l.b16 %v87
  %v156 = vunpack.c.h.b16 %v87
  %v157 = vunpack.c.l.b16 %v88
  %v158 = vunpack.c.h.b16 %v88
  %v159 = vunpack.c.l.b16 %v89
  %v160 = vunpack.c.h.b16 %v89
  %v161 = vunpack.c.l.b16 %v90
  %v162 = vunpack.c.h.b16 %v90
  %v163 = vunpack.c.l.b16 %v91
  %v164 = vunpack.c.h.b16 %v91
  %v165 = vunpack.c.l.b16 %v92
  %v166 = vunpack.c.h.b16 %v92
  %v167 = vunpack.c.l.b16 %v93
  %v168 = vunpack.c.h.b16 %v93
  %v169 = vunpack.c.l.b16 %v94
  %v170 = vunpack.c.h.b16 %v94
  %v171 = vunpack.c.l.b16 %v95
  %v172 = vunpack.c.h.b16 %v95
  %v173 = vunpack.c.l.b16 %v96
  %v174 = vunpack.c.h.b16 %v96
  %v175 = vunpack.c.l.b16 %v97
  %v176 = vunpack.c.h.b16 %v97
  %v177 = vunpack.c.l.b16 %v98
  %v178 = vunpack.c.h.b16 %v98
  %v179 = vunpack.c.l.b16 %v99
  %v180 = vunpack.c.h.b16 %v99
  %v181 = vunpack.c.l.b16 %v100
  %v182 = vunpack.c.h.b16 %v100
  %v183 = vunpack.c.l.b16 %v101
  %v184 = vunpack.c.h.b16 %v101
  %v185 = vunpack.c.l.b16 %v102
  %v186 = vunpack.c.h.b16 %v102
  %v187 = vunpack.c.l.b16 %v103
  %v188 = vunpack.c.h.b16 %v103
  %v189 = vunpack.c.l.b16 %v104
  %v190 = vunpack.c.h.b16 %v104
  %v191 = vunpack.c.l.b16 %v105
  %v192 = vunpack.c.h.b16 %v105
  %v193 = vunpack.c.l.b16 %v106
  %v194 = vunpack.c.h.b16 %v106
  %v195 = vunpack.c.l.b16 %v107
  %v196 = vunpack.c.h.b16 %v107
  %v197 = vunpack.c.l.b16 %v108
  %v198 = vunpack.c.h.b16 %v108
  %v199 = vunpack.c.l.b16 %v109
  %v200 = vunpack.c.h.b16 %v109
  %v201 = vunpack.c.l.b16 %v110
  %v202 = vunpack.c.h.b16 %v110
  %v203 = vunpack.c.l.b16 %v111
  %v204 = vunpack.c.h.b16 %v111
  %v205 = vunpack.c.l.b16 %v112
  %v206 = vunpack.c.h.b16 %v112
  %v207 = vunpack.c.l.b16 %v113
  %v208 = vunpack.c.h.b16 %v113
  %v209 = vunpack.c.l.b16 %v114
  %v210 = vunpack.c.h.b16 %v114
  %v211 = vpack.c.b16 %v151, %v147
  %v212 = vpack.c.b16 %v152, %v148
  %v213 = vpack.c.b16 %v153, %v149
  %v214 = vpack.c.b16 %v154, %v150
  %v215 = vpack.c.b16 %v159, %v155
  %v216 = vpack.c.b16 %v160, %v156
  %v217 = vpack.c.b16 %v161, %v157
  %v218 = vpack.c.b16 %v162, %v158
  %v219 = vpack.c.b16 %v167, %v163
  %v220 = vpack.c.b16 %v168, %v164
  %v221 = vpack.c.b16 %v169, %v165
  %v222 = vpack.c.b16 %v170, %v166
  %v223 = vpack.c.b16 %v175, %v171
  %v224 = vpack.c.b16 %v176, %v172
  %v225 = vpack.c.b16 %v177, %v173
  %v226 = vpack.c.b16 %v178, %v174
  %v227 = vpack.c.b16 %v183, %v179
  %v228 = vpack.c.b16 %v184, %v180
  %v229 = vpack.c.b16 %v185, %v181
  %v230 = vpack.c.b16 %v186, %v182
  %v231 = vpack.c.b16 %v191, %v187
  %v232 = vpack.c.b16 %v192, %v188
  %v233 = vpack.c.b16 %v193, %v189
  %v234 = vpack.c.b16 %v194, %v190
  %v235 = vpack.c.b16 %v199, %v195
  %v236 = vpack.c.b16 %v200, %v196
  %v237 = vpack.c.b16 %v201, %v197
  %v238 = vpack.c.b16 %v202, %v198
  %v239 = vpack.c.b16 %v207, %v203
  %v240 = vpack.c.b16 %v208, %v204
  %v241 = vpack.c.b16 %v209, %v205
  %v242 = vpack.c.b16 %v210, %v206
  %275 = vmatprep.subr.bf16.mxu0 %v212
  %276 = vmatpush1.bf16.msra.mxu0 %v211
  %277 = vmatprep.subr.bf16.mxu0 %v216
  %278 = vmatpush1.bf16.msra.mxu0 %v215
  %279 = vmatprep.subr.bf16.mxu0 %v220
  %280 = vmatpush1.bf16.msra.mxu0 %v219
  %281 = vmatprep.subr.bf16.mxu0 %v224
  %282 = vmatpush1.bf16.msra.mxu0 %v223
  %283 = vmatprep.subr.bf16.mxu0 %v228
  %284 = vmatpush1.bf16.msra.mxu0 %v227
  %285 = vmatprep.subr.bf16.mxu0 %v232
  %286 = vmatpush1.bf16.msra.mxu0 %v231
  %287 = vmatprep.subr.bf16.mxu0 %v236
  %288 = vmatpush1.bf16.msra.mxu0 %v235
  %289 = vmatprep.subr.bf16.mxu0 %v240
  %290 = vmatpush1.bf16.msra.mxu0 %v239
  %291 = vmatprep.subr.bf16.mxu0 0
  %292 = vmatpush1.bf16.msra.mxu0 0
  %293 = vmatprep.subr.bf16.mxu0 0
  %294 = vmatpush1.bf16.msra.mxu0 0
  %295 = vmatprep.subr.bf16.mxu0 0
  %296 = vmatpush1.bf16.msra.mxu0 0
  %297 = vmatprep.subr.bf16.mxu0 0
  %298 = vmatpush1.bf16.msra.mxu0 0
  %299 = vmatprep.subr.bf16.mxu0 0
  %300 = vmatpush1.bf16.msra.mxu0 0
  %301 = vmatprep.subr.bf16.mxu0 0
  %302 = vmatpush1.bf16.msra.mxu0 0
  %303 = vmatprep.subr.bf16.mxu0 0
  %304 = vmatpush1.bf16.msra.mxu0 0
  %305 = vmatprep.subr.bf16.mxu0 0
  %306 = vmatpush1.bf16.msra.mxu0 0
  %307 = vmatprep.mubr.bf16.mxu0 0
  %308 = vmatmul.mubr.bf16.gmra.mrb[0].mxu0 %v82
  %v309 = vpop.f32.mrb[0].mxu0
  %v310 = vadd.f32 0.0, %v309
  %v311 = vpop.f32.mrb[0].mxu0
  %v312 = vadd.f32 0.0, %v311
  %v313 = vpop.f32.mrb[0].mxu0
  %v314 = vpop.f32.mrb[0].mxu0
  %315 = vdwg.mxu0
  %316 = vmatprep.subr.bf16.mxu0 %v214
  %317 = vmatpush1.bf16.msra.mxu0 %v213
  %318 = vmatprep.subr.bf16.mxu0 %v218
  %319 = vmatpush1.bf16.msra.mxu0 %v217
  %320 = vmatprep.subr.bf16.mxu0 %v222
  %321 = vmatpush1.bf16.msra.mxu0 %v221
  %322 = vmatprep.subr.bf16.mxu0 %v226
  %323 = vmatpush1.bf16.msra.mxu0 %v225
  %324 = vmatprep.subr.bf16.mxu0 %v230
  %325 = vmatpush1.bf16.msra.mxu0 %v229
  %326 = vmatprep.subr.bf16.mxu0 %v234
  %327 = vmatpush1.bf16.msra.mxu0 %v233
  %328 = vmatprep.subr.bf16.mxu0 %v238
  %329 = vmatpush1.bf16.msra.mxu0 %v237
  %330 = vmatprep.subr.bf16.mxu0 %v242
  %331 = vmatpush1.bf16.msra.mxu0 %v241
  %332 = vmatprep.subr.bf16.mxu0 0
  %333 = vmatpush1.bf16.msra.mxu0 0
  %334 = vmatprep.subr.bf16.mxu0 0
  %335 = vmatpush1.bf16.msra.mxu0 0
  %336 = vmatprep.subr.bf16.mxu0 0
  %337 = vmatpush1.bf16.msra.mxu0 0
  %338 = vmatprep.subr.bf16.mxu0 0
  %339 = vmatpush1.bf16.msra.mxu0 0
  %340 = vmatprep.subr.bf16.mxu0 0
  %341 = vmatpush1.bf16.msra.mxu0 0
  %342 = vmatprep.subr.bf16.mxu0 0
  %343 = vmatpush1.bf16.msra.mxu0 0
  %344 = vmatprep.subr.bf16.mxu0 0
  %345 = vmatpush1.bf16.msra.mxu0 0
  %346 = vmatprep.subr.bf16.mxu0 0
  %347 = vmatpush1.bf16.msra.mxu0 0
  %348 = vmatprep.mubr.bf16.mxu0 0
  %349 = vmatmul.mubr.bf16.gmra.mrb[0].mxu0 %v82
  %v350 = vpop.f32.mrb[0].mxu0
  %v351 = vadd.f32 0.0, %v350
  %v352 = vpop.f32.mrb[0].mxu0
  %v353 = vadd.f32 0.0, %v352
  %v354 = vpop.f32.mrb[0].mxu0
  %v355 = vpop.f32.mrb[0].mxu0
  %356 = vdwg.mxu0
  %v357 = vadd.f32 %v78, %v310
  %v358 = vadd.f32 %v79, %v312
  %v359 = vadd.f32 %v80, %v351
  %v360 = vadd.f32 %v81, %v353
  %v361 = vxor.u32 %v357, 2147483648
  %v362 = vmul.f32 %v361, 1.442695
  %v363 = vpow.pop %v362
  %v364 = vadd.f32 %v363, 1.0
  %v365 = vrcp.pop %v364
  %v366 = vmul.f32 1.0, %v365
  %v367 = vxor.u32 %v358, 2147483648
  %v368 = vmul.f32 %v367, 1.442695
  %v369 = vpow.pop %v368
  %v370 = vadd.f32 %v369, 1.0
  %v371 = vrcp.pop %v370
  %v372 = vmul.f32 1.0, %v371
  %v373 = vtanh.pop %v359
  %v374 = vxor.u32 %v360, 2147483648
  %v375 = vmul.f32 %v374, 1.442695
  %v376 = vpow.pop %v375
  %v377 = vadd.f32 %v376, 1.0
  %v378 = vrcp.pop %v377
  %v379 = vmul.f32 1.0, %v378
  %v380 = vmul.f32 %v372, %v73
  %v381 = vmul.f32 %v366, %v373
  %v382 = vadd.f32 %v380, %v381
  %v383 = vtanh.pop %v382
  %v384 = vmul.f32 %v379, %v383
  %s385 = scalar_lea.vmem %s52, 112
  %v386 = vld [vmem:[%s385] sm:$0xff]
  %v387 = vld [vmem:[%s385 + $0x8] sm:$0xff]
  %v388 = vunpack.c.l.bf16 %v386
  %v389 = vunpack.c.h.bf16 %v386
  %v390 = vunpack.c.l.bf16 %v387
  %v391 = vunpack.c.h.bf16 %v387
  %v392 = vpack.c.bf16 %v74, %v74
  %v393 = vld [vmem:[%s3] sm:$0xff]
  %v394 = vld [vmem:[%s3 + $0x8] sm:$0xff]
  %v395 = vld [vmem:[%s3 + $0x10] sm:$0xff]
  %v396 = vld [vmem:[%s3 + $0x18] sm:$0xff]
  %v397 = vld [vmem:[%s3 + $0x20] sm:$0xff]
  %v398 = vld [vmem:[%s3 + $0x28] sm:$0xff]
  %v399 = vld [vmem:[%s3 + $0x30] sm:$0xff]
  %v400 = vld [vmem:[%s3 + $0x38] sm:$0xff]
  %v401 = vld [vmem:[%s3 + $0x40] sm:$0xff]
  %v402 = vld [vmem:[%s3 + $0x48] sm:$0xff]
  %v403 = vld [vmem:[%s3 + $0x50] sm:$0xff]
  %v404 = vld [vmem:[%s3 + $0x58] sm:$0xff]
  %v405 = vld [vmem:[%s3 + $0x60] sm:$0xff]
  %v406 = vld [vmem:[%s3 + $0x68] sm:$0xff]
  %v407 = vld [vmem:[%s3 + $0x70] sm:$0xff]
  %v408 = vld [vmem:[%s3 + $0x78] sm:$0xff]
  %v409 = vld [vmem:[%s3 + $0x80] sm:$0xff]
  %v410 = vld [vmem:[%s3 + $0x88] sm:$0xff]
  %v411 = vld [vmem:[%s3 + $0x90] sm:$0xff]
  %v412 = vld [vmem:[%s3 + $0x98] sm:$0xff]
  %v413 = vld [vmem:[%s3 + $0xa0] sm:$0xff]
  %v414 = vld [vmem:[%s3 + $0xa8] sm:$0xff]
  %v415 = vld [vmem:[%s3 + $0xb0] sm:$0xff]
  %v416 = vld [vmem:[%s3 + $0xb8] sm:$0xff]
  %v417 = vld [vmem:[%s3 + $0xc0] sm:$0xff]
  %v418 = vld [vmem:[%s3 + $0xc8] sm:$0xff]
  %v419 = vld [vmem:[%s3 + $0xd0] sm:$0xff]
  %v420 = vld [vmem:[%s3 + $0xd8] sm:$0xff]
  %v421 = vld [vmem:[%s3 + $0xe0] sm:$0xff]
  %v422 = vld [vmem:[%s3 + $0xe8] sm:$0xff]
  %v423 = vld [vmem:[%s3 + $0xf0] sm:$0xff]
  %v424 = vld [vmem:[%s3 + $0xf8] sm:$0xff]
  %v457 = vunpack.c.l.b16 %v393
  %v458 = vunpack.c.h.b16 %v393
  %v459 = vunpack.c.l.b16 %v394
  %v460 = vunpack.c.h.b16 %v394
  %v461 = vunpack.c.l.b16 %v395
  %v462 = vunpack.c.h.b16 %v395
  %v463 = vunpack.c.l.b16 %v396
  %v464 = vunpack.c.h.b16 %v396
  %v465 = vunpack.c.l.b16 %v397
  %v466 = vunpack.c.h.b16 %v397
  %v467 = vunpack.c.l.b16 %v398
  %v468 = vunpack.c.h.b16 %v398
  %v469 = vunpack.c.l.b16 %v399
  %v470 = vunpack.c.h.b16 %v399
  %v471 = vunpack.c.l.b16 %v400
  %v472 = vunpack.c.h.b16 %v400
  %v473 = vunpack.c.l.b16 %v401
  %v474 = vunpack.c.h.b16 %v401
  %v475 = vunpack.c.l.b16 %v402
  %v476 = vunpack.c.h.b16 %v402
  %v477 = vunpack.c.l.b16 %v403
  %v478 = vunpack.c.h.b16 %v403
  %v479 = vunpack.c.l.b16 %v404
  %v480 = vunpack.c.h.b16 %v404
  %v481 = vunpack.c.l.b16 %v405
  %v482 = vunpack.c.h.b16 %v405
  %v483 = vunpack.c.l.b16 %v406
  %v484 = vunpack.c.h.b16 %v406
  %v485 = vunpack.c.l.b16 %v407
  %v486 = vunpack.c.h.b16 %v407
  %v487 = vunpack.c.l.b16 %v408
  %v488 = vunpack.c.h.b16 %v408
  %v489 = vunpack.c.l.b16 %v409
  %v490 = vunpack.c.h.b16 %v409
  %v491 = vunpack.c.l.b16 %v410
  %v492 = vunpack.c.h.b16 %v410
  %v493 = vunpack.c.l.b16 %v411
  %v494 = vunpack.c.h.b16 %v411
  %v495 = vunpack.c.l.b16 %v412
  %v496 = vunpack.c.h.b16 %v412
  %v497 = vunpack.c.l.b16 %v413
  %v498 = vunpack.c.h.b16 %v413
  %v499 = vunpack.c.l.b16 %v414
  %v500 = vunpack.c.h.b16 %v414
  %v501 = vunpack.c.l.b16 %v415
  %v502 = vunpack.c.h.b16 %v415
  %v503 = vunpack.c.l.b16 %v416
  %v504 = vunpack.c.h.b16 %v416
  %v505 = vunpack.c.l.b16 %v417
  %v506 = vunpack.c.h.b16 %v417
  %v507 = vunpack.c.l.b16 %v418
  %v508 = vunpack.c.h.b16 %v418
  %v509 = vunpack.c.l.b16 %v419
  %v510 = vunpack.c.h.b16 %v419
  %v511 = vunpack.c.l.b16 %v420
  %v512 = vunpack.c.h.b16 %v420
  %v513 = vunpack.c.l.b16 %v421
  %v514 = vunpack.c.h.b16 %v421
  %v515 = vunpack.c.l.b16 %v422
  %v516 = vunpack.c.h.b16 %v422
  %v517 = vunpack.c.l.b16 %v423
  %v518 = vunpack.c.h.b16 %v423
  %v519 = vunpack.c.l.b16 %v424
  %v520 = vunpack.c.h.b16 %v424
  %v521 = vpack.c.b16 %v461, %v457
  %v522 = vpack.c.b16 %v462, %v458
  %v523 = vpack.c.b16 %v463, %v459
  %v524 = vpack.c.b16 %v464, %v460
  %v525 = vpack.c.b16 %v469, %v465
  %v526 = vpack.c.b16 %v470, %v466
  %v527 = vpack.c.b16 %v471, %v467
  %v528 = vpack.c.b16 %v472, %v468
  %v529 = vpack.c.b16 %v477, %v473
  %v530 = vpack.c.b16 %v478, %v474
  %v531 = vpack.c.b16 %v479, %v475
  %v532 = vpack.c.b16 %v480, %v476
  %v533 = vpack.c.b16 %v485, %v481
  %v534 = vpack.c.b16 %v486, %v482
  %v535 = vpack.c.b16 %v487, %v483
  %v536 = vpack.c.b16 %v488, %v484
  %v537 = vpack.c.b16 %v493, %v489
  %v538 = vpack.c.b16 %v494, %v490
  %v539 = vpack.c.b16 %v495, %v491
  %v540 = vpack.c.b16 %v496, %v492
  %v541 = vpack.c.b16 %v501, %v497
  %v542 = vpack.c.b16 %v502, %v498
  %v543 = vpack.c.b16 %v503, %v499
  %v544 = vpack.c.b16 %v504, %v500
  %v545 = vpack.c.b16 %v509, %v505
  %v546 = vpack.c.b16 %v510, %v506
  %v547 = vpack.c.b16 %v511, %v507
  %v548 = vpack.c.b16 %v512, %v508
  %v549 = vpack.c.b16 %v517, %v513
  %v550 = vpack.c.b16 %v518, %v514
  %v551 = vpack.c.b16 %v519, %v515
  %v552 = vpack.c.b16 %v520, %v516
  %585 = vmatprep.subr.bf16.mxu0 %v522
  %586 = vmatpush1.bf16.msra.mxu0 %v521
  %587 = vmatprep.subr.bf16.mxu0 %v526
  %588 = vmatpush1.bf16.msra.mxu0 %v525
  %589 = vmatprep.subr.bf16.mxu0 %v530
  %590 = vmatpush1.bf16.msra.mxu0 %v529
  %591 = vmatprep.subr.bf16.mxu0 %v534
  %592 = vmatpush1.bf16.msra.mxu0 %v533
  %593 = vmatprep.subr.bf16.mxu0 %v538
  %594 = vmatpush1.bf16.msra.mxu0 %v537
  %595 = vmatprep.subr.bf16.mxu0 %v542
  %596 = vmatpush1.bf16.msra.mxu0 %v541
  %597 = vmatprep.subr.bf16.mxu0 %v546
  %598 = vmatpush1.bf16.msra.mxu0 %v545
  %599 = vmatprep.subr.bf16.mxu0 %v550
  %600 = vmatpush1.bf16.msra.mxu0 %v549
  %601 = vmatprep.subr.bf16.mxu0 0
  %602 = vmatpush1.bf16.msra.mxu0 0
  %603 = vmatprep.subr.bf16.mxu0 0
  %604 = vmatpush1.bf16.msra.mxu0 0
  %605 = vmatprep.subr.bf16.mxu0 0
  %606 = vmatpush1.bf16.msra.mxu0 0
  %607 = vmatprep.subr.bf16.mxu0 0
  %608 = vmatpush1.bf16.msra.mxu0 0
  %609 = vmatprep.subr.bf16.mxu0 0
  %610 = vmatpush1.bf16.msra.mxu0 0
  %611 = vmatprep.subr.bf16.mxu0 0
  %612 = vmatpush1.bf16.msra.mxu0 0
  %613 = vmatprep.subr.bf16.mxu0 0
  %614 = vmatpush1.bf16.msra.mxu0 0
  %615 = vmatprep.subr.bf16.mxu0 0
  %616 = vmatpush1.bf16.msra.mxu0 0
  %617 = vmatprep.mubr.bf16.mxu0 0
  %618 = vmatmul.mubr.bf16.gmra.mrb[0].mxu0 %v392
  %v619 = vpop.f32.mrb[0].mxu0
  %v620 = vadd.f32 0.0, %v619
  %v621 = vpop.f32.mrb[0].mxu0
  %v622 = vadd.f32 0.0, %v621
  %v623 = vpop.f32.mrb[0].mxu0
  %v624 = vpop.f32.mrb[0].mxu0
  %625 = vdwg.mxu0
  %626 = vmatprep.subr.bf16.mxu0 %v524
  %627 = vmatpush1.bf16.msra.mxu0 %v523
  %628 = vmatprep.subr.bf16.mxu0 %v528
  %629 = vmatpush1.bf16.msra.mxu0 %v527
  %630 = vmatprep.subr.bf16.mxu0 %v532
  %631 = vmatpush1.bf16.msra.mxu0 %v531
  %632 = vmatprep.subr.bf16.mxu0 %v536
  %633 = vmatpush1.bf16.msra.mxu0 %v535
  %634 = vmatprep.subr.bf16.mxu0 %v540
  %635 = vmatpush1.bf16.msra.mxu0 %v539
  %636 = vmatprep.subr.bf16.mxu0 %v544
  %637 = vmatpush1.bf16.msra.mxu0 %v543
  %638 = vmatprep.subr.bf16.mxu0 %v548
  %639 = vmatpush1.bf16.msra.mxu0 %v547
  %640 = vmatprep.subr.bf16.mxu0 %v552
  %641 = vmatpush1.bf16.msra.mxu0 %v551
  %642 = vmatprep.subr.bf16.mxu0 0
  %643 = vmatpush1.bf16.msra.mxu0 0
  %644 = vmatprep.subr.bf16.mxu0 0
  %645 = vmatpush1.bf16.msra.mxu0 0
  %646 = vmatprep.subr.bf16.mxu0 0
  %647 = vmatpush1.bf16.msra.mxu0 0
  %648 = vmatprep.subr.bf16.mxu0 0
  %649 = vmatpush1.bf16.msra.mxu0 0
  %650 = vmatprep.subr.bf16.mxu0 0
  %651 = vmatpush1.bf16.msra.mxu0 0
  %652 = vmatprep.subr.bf16.mxu0 0
  %653 = vmatpush1.bf16.msra.mxu0 0
  %654 = vmatprep.subr.bf16.mxu0 0
  %655 = vmatpush1.bf16.msra.mxu0 0
  %656 = vmatprep.subr.bf16.mxu0 0
  %657 = vmatpush1.bf16.msra.mxu0 0
  %658 = vmatprep.mubr.bf16.mxu0 0
  %659 = vmatmul.mubr.bf16.gmra.mrb[0].mxu0 %v392
  %v660 = vpop.f32.mrb[0].mxu0
  %v661 = vadd.f32 0.0, %v660
  %v662 = vpop.f32.mrb[0].mxu0
  %v663 = vadd.f32 0.0, %v662
  %v664 = vpop.f32.mrb[0].mxu0
  %v665 = vpop.f32.mrb[0].mxu0
  %666 = vdwg.mxu0
  %v667 = vadd.f32 %v388, %v620
  %v668 = vadd.f32 %v389, %v622
  %v669 = vadd.f32 %v390, %v661
  %v670 = vadd.f32 %v391, %v663
  %v671 = vxor.u32 %v667, 2147483648
  %v672 = vmul.f32 %v671, 1.442695
  %v673 = vpow.pop %v672
  %v674 = vadd.f32 %v673, 1.0
  %v675 = vrcp.pop %v674
  %v676 = vmul.f32 1.0, %v675
  %v677 = vxor.u32 %v668, 2147483648
  %v678 = vmul.f32 %v677, 1.442695
  %v679 = vpow.pop %v678
  %v680 = vadd.f32 %v679, 1.0
  %v681 = vrcp.pop %v680
  %v682 = vmul.f32 1.0, %v681
  %v683 = vtanh.pop %v669
  %v684 = vxor.u32 %v670, 2147483648
  %v685 = vmul.f32 %v684, 1.442695
  %v686 = vpow.pop %v685
  %v687 = vadd.f32 %v686, 1.0
  %v688 = vrcp.pop %v687
  %v689 = vmul.f32 1.0, %v688
  %v690 = vmul.f32 %v682, %v75
  %v691 = vmul.f32 %v676, %v683
  %v692 = vadd.f32 %v690, %v691
  %v693 = vtanh.pop %v692
  %v694 = vmul.f32 %v689, %v693
  %v695 = vpack.c.bf16 %v384, %v384
  %696 = vst [vmem:[%s4] sm:$0xf] %v695
  %v697 = vpack.c.bf16 %v694, %v694
  %s698 = scalar_lea.vmem %s60, 28
  %699 = vst [vmem:[%s698] sm:$0xf] %v697
  %s700 = scalar_lea.vmem %s0, 16
  %v701 = vld [vmem:[%s700] sm:$0xff]
  %v702 = vld [vmem:[%s700 + $0x8] sm:$0xff]
  %v703 = vunpack.c.l.bf16 %v701
  %v704 = vunpack.c.h.bf16 %v701
  %v705 = vunpack.c.l.bf16 %v702
  %v706 = vunpack.c.h.bf16 %v702
  %v707 = vld [vmem:[%s2] sm:$0xff]
  %v708 = vld [vmem:[%s2 + $0x8] sm:$0xff]
  %v709 = vld [vmem:[%s2 + $0x10] sm:$0xff]
  %v710 = vld [vmem:[%s2 + $0x18] sm:$0xff]
  %v711 = vld [vmem:[%s2 + $0x20] sm:$0xff]
  %v712 = vld [vmem:[%s2 + $0x28] sm:$0xff]
  %v713 = vld [vmem:[%s2 + $0x30] sm:$0xff]
  %v714 = vld [vmem:[%s2 + $0x38] sm:$0xff]
  %v715 = vld [vmem:[%s2 + $0x40] sm:$0xff]
  %v716 = vld [vmem:[%s2 + $0x48] sm:$0xff]
  %v717 = vld [vmem:[%s2 + $0x50] sm:$0xff]
  %v718 = vld [vmem:[%s2 + $0x58] sm:$0xff]
  %v719 = vld [vmem:[%s2 + $0x60] sm:$0xff]
  %v720 = vld [vmem:[%s2 + $0x68] sm:$0xff]
  %v721 = vld [vmem:[%s2 + $0x70] sm:$0xff]
  %v722 = vld [vmem:[%s2 + $0x78] sm:$0xff]
  %v723 = vld [vmem:[%s2 + $0x80] sm:$0xff]
  %v724 = vld [vmem:[%s2 + $0x88] sm:$0xff]
  %v725 = vld [vmem:[%s2 + $0x90] sm:$0xff]
  %v726 = vld [vmem:[%s2 + $0x98] sm:$0xff]
  %v727 = vld [vmem:[%s2 + $0xa0] sm:$0xff]
  %v728 = vld [vmem:[%s2 + $0xa8] sm:$0xff]
  %v729 = vld [vmem:[%s2 + $0xb0] sm:$0xff]
  %v730 = vld [vmem:[%s2 + $0xb8] sm:$0xff]
  %v731 = vld [vmem:[%s2 + $0xc0] sm:$0xff]
  %v732 = vld [vmem:[%s2 + $0xc8] sm:$0xff]
  %v733 = vld [vmem:[%s2 + $0xd0] sm:$0xff]
  %v734 = vld [vmem:[%s2 + $0xd8] sm:$0xff]
  %v735 = vld [vmem:[%s2 + $0xe0] sm:$0xff]
  %v736 = vld [vmem:[%s2 + $0xe8] sm:$0xff]
  %v737 = vld [vmem:[%s2 + $0xf0] sm:$0xff]
  %v738 = vld [vmem:[%s2 + $0xf8] sm:$0xff]
  %v771 = vunpack.c.l.b16 %v707
  %v772 = vunpack.c.h.b16 %v707
  %v773 = vunpack.c.l.b16 %v708
  %v774 = vunpack.c.h.b16 %v708
  %v775 = vunpack.c.l.b16 %v709
  %v776 = vunpack.c.h.b16 %v709
  %v777 = vunpack.c.l.b16 %v710
  %v778 = vunpack.c.h.b16 %v710
  %v779 = vunpack.c.l.b16 %v711
  %v780 = vunpack.c.h.b16 %v711
  %v781 = vunpack.c.l.b16 %v712
  %v782 = vunpack.c.h.b16 %v712
  %v783 = vunpack.c.l.b16 %v713
  %v784 = vunpack.c.h.b16 %v713
  %v785 = vunpack.c.l.b16 %v714
  %v786 = vunpack.c.h.b16 %v714
  %v787 = vunpack.c.l.b16 %v715
  %v788 = vunpack.c.h.b16 %v715
  %v789 = vunpack.c.l.b16 %v716
  %v790 = vunpack.c.h.b16 %v716
  %v791 = vunpack.c.l.b16 %v717
  %v792 = vunpack.c.h.b16 %v717
  %v793 = vunpack.c.l.b16 %v718
  %v794 = vunpack.c.h.b16 %v718
  %v795 = vunpack.c.l.b16 %v719
  %v796 = vunpack.c.h.b16 %v719
  %v797 = vunpack.c.l.b16 %v720
  %v798 = vunpack.c.h.b16 %v720
  %v799 = vunpack.c.l.b16 %v721
  %v800 = vunpack.c.h.b16 %v721
  %v801 = vunpack.c.l.b16 %v722
  %v802 = vunpack.c.h.b16 %v722
  %v803 = vunpack.c.l.b16 %v723
  %v804 = vunpack.c.h.b16 %v723
  %v805 = vunpack.c.l.b16 %v724
  %v806 = vunpack.c.h.b16 %v724
  %v807 = vunpack.c.l.b16 %v725
  %v808 = vunpack.c.h.b16 %v725
  %v809 = vunpack.c.l.b16 %v726
  %v810 = vunpack.c.h.b16 %v726
  %v811 = vunpack.c.l.b16 %v727
  %v812 = vunpack.c.h.b16 %v727
  %v813 = vunpack.c.l.b16 %v728
  %v814 = vunpack.c.h.b16 %v728
  %v815 = vunpack.c.l.b16 %v729
  %v816 = vunpack.c.h.b16 %v729
  %v817 = vunpack.c.l.b16 %v730
  %v818 = vunpack.c.h.b16 %v730
  %v819 = vunpack.c.l.b16 %v731
  %v820 = vunpack.c.h.b16 %v731
  %v821 = vunpack.c.l.b16 %v732
  %v822 = vunpack.c.h.b16 %v732
  %v823 = vunpack.c.l.b16 %v733
  %v824 = vunpack.c.h.b16 %v733
  %v825 = vunpack.c.l.b16 %v734
  %v826 = vunpack.c.h.b16 %v734
  %v827 = vunpack.c.l.b16 %v735
  %v828 = vunpack.c.h.b16 %v735
  %v829 = vunpack.c.l.b16 %v736
  %v830 = vunpack.c.h.b16 %v736
  %v831 = vunpack.c.l.b16 %v737
  %v832 = vunpack.c.h.b16 %v737
  %v833 = vunpack.c.l.b16 %v738
  %v834 = vunpack.c.h.b16 %v738
  %v835 = vpack.c.b16 %v775, %v771
  %v836 = vpack.c.b16 %v776, %v772
  %v837 = vpack.c.b16 %v777, %v773
  %v838 = vpack.c.b16 %v778, %v774
  %v839 = vpack.c.b16 %v783, %v779
  %v840 = vpack.c.b16 %v784, %v780
  %v841 = vpack.c.b16 %v785, %v781
  %v842 = vpack.c.b16 %v786, %v782
  %v843 = vpack.c.b16 %v791, %v787
  %v844 = vpack.c.b16 %v792, %v788
  %v845 = vpack.c.b16 %v793, %v789
  %v846 = vpack.c.b16 %v794, %v790
  %v847 = vpack.c.b16 %v799, %v795
  %v848 = vpack.c.b16 %v800, %v796
  %v849 = vpack.c.b16 %v801, %v797
  %v850 = vpack.c.b16 %v802, %v798
  %v851 = vpack.c.b16 %v807, %v803
  %v852 = vpack.c.b16 %v808, %v804
  %v853 = vpack.c.b16 %v809, %v805
  %v854 = vpack.c.b16 %v810, %v806
  %v855 = vpack.c.b16 %v815, %v811
  %v856 = vpack.c.b16 %v816, %v812
  %v857 = vpack.c.b16 %v817, %v813
  %v858 = vpack.c.b16 %v818, %v814
  %v859 = vpack.c.b16 %v823, %v819
  %v860 = vpack.c.b16 %v824, %v820
  %v861 = vpack.c.b16 %v825, %v821
  %v862 = vpack.c.b16 %v826, %v822
  %v863 = vpack.c.b16 %v831, %v827
  %v864 = vpack.c.b16 %v832, %v828
  %v865 = vpack.c.b16 %v833, %v829
  %v866 = vpack.c.b16 %v834, %v830
  %899 = vmatprep.subr.bf16.mxu0 %v836
  %900 = vmatpush1.bf16.msra.mxu0 %v835
  %901 = vmatprep.subr.bf16.mxu0 %v840
  %902 = vmatpush1.bf16.msra.mxu0 %v839
  %903 = vmatprep.subr.bf16.mxu0 %v844
  %904 = vmatpush1.bf16.msra.mxu0 %v843
  %905 = vmatprep.subr.bf16.mxu0 %v848
  %906 = vmatpush1.bf16.msra.mxu0 %v847
  %907 = vmatprep.subr.bf16.mxu0 %v852
  %908 = vmatpush1.bf16.msra.mxu0 %v851
  %909 = vmatprep.subr.bf16.mxu0 %v856
  %910 = vmatpush1.bf16.msra.mxu0 %v855
  %911 = vmatprep.subr.bf16.mxu0 %v860
  %912 = vmatpush1.bf16.msra.mxu0 %v859
  %913 = vmatprep.subr.bf16.mxu0 %v864
  %914 = vmatpush1.bf16.msra.mxu0 %v863
  %915 = vmatprep.subr.bf16.mxu0 0
  %916 = vmatpush1.bf16.msra.mxu0 0
  %917 = vmatprep.subr.bf16.mxu0 0
  %918 = vmatpush1.bf16.msra.mxu0 0
  %919 = vmatprep.subr.bf16.mxu0 0
  %920 = vmatpush1.bf16.msra.mxu0 0
  %921 = vmatprep.subr.bf16.mxu0 0
  %922 = vmatpush1.bf16.msra.mxu0 0
  %923 = vmatprep.subr.bf16.mxu0 0
  %924 = vmatpush1.bf16.msra.mxu0 0
  %925 = vmatprep.subr.bf16.mxu0 0
  %926 = vmatpush1.bf16.msra.mxu0 0
  %927 = vmatprep.subr.bf16.mxu0 0
  %928 = vmatpush1.bf16.msra.mxu0 0
  %929 = vmatprep.subr.bf16.mxu0 0
  %930 = vmatpush1.bf16.msra.mxu0 0
  %931 = vmatprep.mubr.bf16.mxu0 0
  %932 = vmatmul.mubr.bf16.gmra.mrb[0].mxu0 %v695
  %v933 = vpop.f32.mrb[0].mxu0
  %v934 = vadd.f32 0.0, %v933
  %v935 = vpop.f32.mrb[0].mxu0
  %v936 = vadd.f32 0.0, %v935
  %v937 = vpop.f32.mrb[0].mxu0
  %v938 = vpop.f32.mrb[0].mxu0
  %939 = vdwg.mxu0
  %940 = vmatprep.subr.bf16.mxu0 %v838
  %941 = vmatpush1.bf16.msra.mxu0 %v837
  %942 = vmatprep.subr.bf16.mxu0 %v842
  %943 = vmatpush1.bf16.msra.mxu0 %v841
  %944 = vmatprep.subr.bf16.mxu0 %v846
  %945 = vmatpush1.bf16.msra.mxu0 %v845
  %946 = vmatprep.subr.bf16.mxu0 %v850
  %947 = vmatpush1.bf16.msra.mxu0 %v849
  %948 = vmatprep.subr.bf16.mxu0 %v854
  %949 = vmatpush1.bf16.msra.mxu0 %v853
  %950 = vmatprep.subr.bf16.mxu0 %v858
  %951 = vmatpush1.bf16.msra.mxu0 %v857
  %952 = vmatprep.subr.bf16.mxu0 %v862
  %953 = vmatpush1.bf16.msra.mxu0 %v861
  %954 = vmatprep.subr.bf16.mxu0 %v866
  %955 = vmatpush1.bf16.msra.mxu0 %v865
  %956 = vmatprep.subr.bf16.mxu0 0
  %957 = vmatpush1.bf16.msra.mxu0 0
  %958 = vmatprep.subr.bf16.mxu0 0
  %959 = vmatpush1.bf16.msra.mxu0 0
  %960 = vmatprep.subr.bf16.mxu0 0
  %961 = vmatpush1.bf16.msra.mxu0 0
  %962 = vmatprep.subr.bf16.mxu0 0
  %963 = vmatpush1.bf16.msra.mxu0 0
  %964 = vmatprep.subr.bf16.mxu0 0
  %965 = vmatpush1.bf16.msra.mxu0 0
  %966 = vmatprep.subr.bf16.mxu0 0
  %967 = vmatpush1.bf16.msra.mxu0 0
  %968 = vmatprep.subr.bf16.mxu0 0
  %969 = vmatpush1.bf16.msra.mxu0 0
  %970 = vmatprep.subr.bf16.mxu0 0
  %971 = vmatpush1.bf16.msra.mxu0 0
  %972 = vmatprep.mubr.bf16.mxu0 0
  %973 = vmatmul.mubr.bf16.gmra.mrb[0].mxu0 %v695
  %v974 = vpop.f32.mrb[0].mxu0
  %v975 = vadd.f32 0.0, %v974
  %v976 = vpop.f32.mrb[0].mxu0
  %v977 = vadd.f32 0.0, %v976
  %v978 = vpop.f32.mrb[0].mxu0
  %v979 = vpop.f32.mrb[0].mxu0
  %980 = vdwg.mxu0
  %v981 = vadd.f32 %v703, %v934
  %v982 = vadd.f32 %v704, %v936
  %v983 = vadd.f32 %v705, %v975
  %v984 = vadd.f32 %v706, %v977
  %v985 = vxor.u32 %v981, 2147483648
  %v986 = vmul.f32 %v985, 1.442695
  %v987 = vpow.pop %v986
  %v988 = vadd.f32 %v987, 1.0
  %v989 = vrcp.pop %v988
  %v990 = vmul.f32 1.0, %v989
  %v991 = vxor.u32 %v982, 2147483648
  %v992 = vmul.f32 %v991, 1.442695
  %v993 = vpow.pop %v992
  %v994 = vadd.f32 %v993, 1.0
  %v995 = vrcp.pop %v994
  %v996 = vmul.f32 1.0, %v995
  %v997 = vtanh.pop %v983
  %v998 = vxor.u32 %v984, 2147483648
  %v999 = vmul.f32 %v998, 1.442695
  %v1000 = vpow.pop %v999
  %v1001 = vadd.f32 %v1000, 1.0
  %v1002 = vrcp.pop %v1001
  %v1003 = vmul.f32 1.0, %v1002
  %v1004 = vmul.f32 %v996, %v382
  %v1005 = vmul.f32 %v990, %v997
  %v1006 = vadd.f32 %v1004, %v1005
  %v1007 = vtanh.pop %v1006
  %v1008 = vmul.f32 %v1003, %v1007
  %s1009 = scalar_lea.vmem %s52, 96
  %v1010 = vld [vmem:[%s1009] sm:$0xff]
  %v1011 = vld [vmem:[%s1009 + $0x8] sm:$0xff]
  %v1012 = vunpack.c.l.bf16 %v1010
  %v1013 = vunpack.c.h.bf16 %v1010
  %v1014 = vunpack.c.l.bf16 %v1011
  %v1015 = vunpack.c.h.bf16 %v1011
  %v1016 = vld [vmem:[%s3] sm:$0xff]
  %v1017 = vld [vmem:[%s3 + $0x8] sm:$0xff]
  %v1018 = vld [vmem:[%s3 + $0x10] sm:$0xff]
  %v1019 = vld [vmem:[%s3 + $0x18] sm:$0xff]
  %v1020 = vld [vmem:[%s3 + $0x20] sm:$0xff]
  %v1021 = vld [vmem:[%s3 + $0x28] sm:$0xff]
  %v1022 = vld [vmem:[%s3 + $0x30] sm:$0xff]
  %v1023 = vld [vmem:[%s3 + $0x38] sm:$0xff]
  %v1024 = vld [vmem:[%s3 + $0x40] sm:$0xff]
  %v1025 = vld [vmem:[%s3 + $0x48] sm:$0xff]
  %v1026 = vld [vmem:[%s3 + $0x50] sm:$0xff]
  %v1027 = vld [vmem:[%s3 + $0x58] sm:$0xff]
  %v1028 = vld [vmem:[%s3 + $0x60] sm:$0xff]
  %v1029 = vld [vmem:[%s3 + $0x68] sm:$0xff]
  %v1030 = vld [vmem:[%s3 + $0x70] sm:$0xff]
  %v1031 = vld [vmem:[%s3 + $0x78] sm:$0xff]
  %v1032 = vld [vmem:[%s3 + $0x80] sm:$0xff]
  %v1033 = vld [vmem:[%s3 + $0x88] sm:$0xff]
  %v1034 = vld [vmem:[%s3 + $0x90] sm:$0xff]
  %v1035 = vld [vmem:[%s3 + $0x98] sm:$0xff]
  %v1036 = vld [vmem:[%s3 + $0xa0] sm:$0xff]
  %v1037 = vld [vmem:[%s3 + $0xa8] sm:$0xff]
  %v1038 = vld [vmem:[%s3 + $0xb0] sm:$0xff]
  %v1039 = vld [vmem:[%s3 + $0xb8] sm:$0xff]
  %v1040 = vld [vmem:[%s3 + $0xc0] sm:$0xff]
  %v1041 = vld [vmem:[%s3 + $0xc8] sm:$0xff]
  %v1042 = vld [vmem:[%s3 + $0xd0] sm:$0xff]
  %v1043 = vld [vmem:[%s3 + $0xd8] sm:$0xff]
  %v1044 = vld [vmem:[%s3 + $0xe0] sm:$0xff]
  %v1045 = vld [vmem:[%s3 + $0xe8] sm:$0xff]
  %v1046 = vld [vmem:[%s3 + $0xf0] sm:$0xff]
  %v1047 = vld [vmem:[%s3 + $0xf8] sm:$0xff]
  %v1080 = vunpack.c.l.b16 %v1016
  %v1081 = vunpack.c.h.b16 %v1016
  %v1082 = vunpack.c.l.b16 %v1017
  %v1083 = vunpack.c.h.b16 %v1017
  %v1084 = vunpack.c.l.b16 %v1018
  %v1085 = vunpack.c.h.b16 %v1018
  %v1086 = vunpack.c.l.b16 %v1019
  %v1087 = vunpack.c.h.b16 %v1019
  %v1088 = vunpack.c.l.b16 %v1020
  %v1089 = vunpack.c.h.b16 %v1020
  %v1090 = vunpack.c.l.b16 %v1021
  %v1091 = vunpack.c.h.b16 %v1021
  %v1092 = vunpack.c.l.b16 %v1022
  %v1093 = vunpack.c.h.b16 %v1022
  %v1094 = vunpack.c.l.b16 %v1023
  %v1095 = vunpack.c.h.b16 %v1023
  %v1096 = vunpack.c.l.b16 %v1024
  %v1097 = vunpack.c.h.b16 %v1024
  %v1098 = vunpack.c.l.b16 %v1025
  %v1099 = vunpack.c.h.b16 %v1025
  %v1100 = vunpack.c.l.b16 %v1026
  %v1101 = vunpack.c.h.b16 %v1026
  %v1102 = vunpack.c.l.b16 %v1027
  %v1103 = vunpack.c.h.b16 %v1027
  %v1104 = vunpack.c.l.b16 %v1028
  %v1105 = vunpack.c.h.b16 %v1028
  %v1106 = vunpack.c.l.b16 %v1029
  %v1107 = vunpack.c.h.b16 %v1029
  %v1108 = vunpack.c.l.b16 %v1030
  %v1109 = vunpack.c.h.b16 %v1030
  %v1110 = vunpack.c.l.b16 %v1031
  %v1111 = vunpack.c.h.b16 %v1031
  %v1112 = vunpack.c.l.b16 %v1032
  %v1113 = vunpack.c.h.b16 %v1032
  %v1114 = vunpack.c.l.b16 %v1033
  %v1115 = vunpack.c.h.b16 %v1033
  %v1116 = vunpack.c.l.b16 %v1034
  %v1117 = vunpack.c.h.b16 %v1034
  %v1118 = vunpack.c.l.b16 %v1035
  %v1119 = vunpack.c.h.b16 %v1035
  %v1120 = vunpack.c.l.b16 %v1036
  %v1121 = vunpack.c.h.b16 %v1036
  %v1122 = vunpack.c.l.b16 %v1037
  %v1123 = vunpack.c.h.b16 %v1037
  %v1124 = vunpack.c.l.b16 %v1038
  %v1125 = vunpack.c.h.b16 %v1038
  %v1126 = vunpack.c.l.b16 %v1039
  %v1127 = vunpack.c.h.b16 %v1039
  %v1128 = vunpack.c.l.b16 %v1040
  %v1129 = vunpack.c.h.b16 %v1040
  %v1130 = vunpack.c.l.b16 %v1041
  %v1131 = vunpack.c.h.b16 %v1041
  %v1132 = vunpack.c.l.b16 %v1042
  %v1133 = vunpack.c.h.b16 %v1042
  %v1134 = vunpack.c.l.b16 %v1043
  %v1135 = vunpack.c.h.b16 %v1043
  %v1136 = vunpack.c.l.b16 %v1044
  %v1137 = vunpack.c.h.b16 %v1044
  %v1138 = vunpack.c.l.b16 %v1045
  %v1139 = vunpack.c.h.b16 %v1045
  %v1140 = vunpack.c.l.b16 %v1046
  %v1141 = vunpack.c.h.b16 %v1046
  %v1142 = vunpack.c.l.b16 %v1047
  %v1143 = vunpack.c.h.b16 %v1047
  %v1144 = vpack.c.b16 %v1084, %v1080
  %v1145 = vpack.c.b16 %v1085, %v1081
  %v1146 = vpack.c.b16 %v1086, %v1082
  %v1147 = vpack.c.b16 %v1087, %v1083
  %v1148 = vpack.c.b16 %v1092, %v1088
  %v1149 = vpack.c.b16 %v1093, %v1089
  %v1150 = vpack.c.b16 %v1094, %v1090
  %v1151 = vpack.c.b16 %v1095, %v1091
  %v1152 = vpack.c.b16 %v1100, %v1096
  %v1153 = vpack.c.b16 %v1101, %v1097
  %v1154 = vpack.c.b16 %v1102, %v1098
  %v1155 = vpack.c.b16 %v1103, %v1099
  %v1156 = vpack.c.b16 %v1108, %v1104
  %v1157 = vpack.c.b16 %v1109, %v1105
  %v1158 = vpack.c.b16 %v1110, %v1106
  %v1159 = vpack.c.b16 %v1111, %v1107
  %v1160 = vpack.c.b16 %v1116, %v1112
  %v1161 = vpack.c.b16 %v1117, %v1113
  %v1162 = vpack.c.b16 %v1118, %v1114
  %v1163 = vpack.c.b16 %v1119, %v1115
  %v1164 = vpack.c.b16 %v1124, %v1120
  %v1165 = vpack.c.b16 %v1125, %v1121
  %v1166 = vpack.c.b16 %v1126, %v1122
  %v1167 = vpack.c.b16 %v1127, %v1123
  %v1168 = vpack.c.b16 %v1132, %v1128
  %v1169 = vpack.c.b16 %v1133, %v1129
  %v1170 = vpack.c.b16 %v1134, %v1130
  %v1171 = vpack.c.b16 %v1135, %v1131
  %v1172 = vpack.c.b16 %v1140, %v1136
  %v1173 = vpack.c.b16 %v1141, %v1137
  %v1174 = vpack.c.b16 %v1142, %v1138
  %v1175 = vpack.c.b16 %v1143, %v1139
  %1208 = vmatprep.subr.bf16.mxu0 %v1145
  %1209 = vmatpush1.bf16.msra.mxu0 %v1144
  %1210 = vmatprep.subr.bf16.mxu0 %v1149
  %1211 = vmatpush1.bf16.msra.mxu0 %v1148
  %1212 = vmatprep.subr.bf16.mxu0 %v1153
  %1213 = vmatpush1.bf16.msra.mxu0 %v1152
  %1214 = vmatprep.subr.bf16.mxu0 %v1157
  %1215 = vmatpush1.bf16.msra.mxu0 %v1156
  %1216 = vmatprep.subr.bf16.mxu0 %v1161
  %1217 = vmatpush1.bf16.msra.mxu0 %v1160
  %1218 = vmatprep.subr.bf16.mxu0 %v1165
  %1219 = vmatpush1.bf16.msra.mxu0 %v1164
  %1220 = vmatprep.subr.bf16.mxu0 %v1169
  %1221 = vmatpush1.bf16.msra.mxu0 %v1168
  %1222 = vmatprep.subr.bf16.mxu0 %v1173
  %1223 = vmatpush1.bf16.msra.mxu0 %v1172
  %1224 = vmatprep.subr.bf16.mxu0 0
  %1225 = vmatpush1.bf16.msra.mxu0 0
  %1226 = vmatprep.subr.bf16.mxu0 0
  %1227 = vmatpush1.bf16.msra.mxu0 0
  %1228 = vmatprep.subr.bf16.mxu0 0
  %1229 = vmatpush1.bf16.msra.mxu0 0
  %1230 = vmatprep.subr.bf16.mxu0 0
  %1231 = vmatpush1.bf16.msra.mxu0 0
  %1232 = vmatprep.subr.bf16.mxu0 0
  %1233 = vmatpush1.bf16.msra.mxu0 0
  %1234 = vmatprep.subr.bf16.mxu0 0
  %1235 = vmatpush1.bf16.msra.mxu0 0
  %1236 = vmatprep.subr.bf16.mxu0 0
  %1237 = vmatpush1.bf16.msra.mxu0 0
  %1238 = vmatprep.subr.bf16.mxu0 0
  %1239 = vmatpush1.bf16.msra.mxu0 0
  %1240 = vmatprep.mubr.bf16.mxu0 0
  %1241 = vmatmul.mubr.bf16.gmra.mrb[0].mxu0 %v697
  %v1242 = vpop.f32.mrb[0].mxu0
  %v1243 = vadd.f32 0.0, %v1242
  %v1244 = vpop.f32.mrb[0].mxu0
  %v1245 = vadd.f32 0.0, %v1244
  %v1246 = vpop.f32.mrb[0].mxu0
  %v1247 = vpop.f32.mrb[0].mxu0
  %1248 = vdwg.mxu0
  %1249 = vmatprep.subr.bf16.mxu0 %v1147
  %1250 = vmatpush1.bf16.msra.mxu0 %v1146
  %1251 = vmatprep.subr.bf16.mxu0 %v1151
  %1252 = vmatpush1.bf16.msra.mxu0 %v1150
  %1253 = vmatprep.subr.bf16.mxu0 %v1155
  %1254 = vmatpush1.bf16.msra.mxu0 %v1154
  %1255 = vmatprep.subr.bf16.mxu0 %v1159
  %1256 = vmatpush1.bf16.msra.mxu0 %v1158
  %1257 = vmatprep.subr.bf16.mxu0 %v1163
  %1258 = vmatpush1.bf16.msra.mxu0 %v1162
  %1259 = vmatprep.subr.bf16.mxu0 %v1167
  %1260 = vmatpush1.bf16.msra.mxu0 %v1166
  %1261 = vmatprep.subr.bf16.mxu0 %v1171
  %1262 = vmatpush1.bf16.msra.mxu0 %v1170
  %1263 = vmatprep.subr.bf16.mxu0 %v1175
  %1264 = vmatpush1.bf16.msra.mxu0 %v1174
  %1265 = vmatprep.subr.bf16.mxu0 0
  %1266 = vmatpush1.bf16.msra.mxu0 0
  %1267 = vmatprep.subr.bf16.mxu0 0
  %1268 = vmatpush1.bf16.msra.mxu0 0
  %1269 = vmatprep.subr.bf16.mxu0 0
  %1270 = vmatpush1.bf16.msra.mxu0 0
  %1271 = vmatprep.subr.bf16.mxu0 0
  %1272 = vmatpush1.bf16.msra.mxu0 0
  %1273 = vmatprep.subr.bf16.mxu0 0
  %1274 = vmatpush1.bf16.msra.mxu0 0
  %1275 = vmatprep.subr.bf16.mxu0 0
  %1276 = vmatpush1.bf16.msra.mxu0 0
  %1277 = vmatprep.subr.bf16.mxu0 0
  %1278 = vmatpush1.bf16.msra.mxu0 0
  %1279 = vmatprep.subr.bf16.mxu0 0
  %1280 = vmatpush1.bf16.msra.mxu0 0
  %1281 = vmatprep.mubr.bf16.mxu0 0
  %1282 = vmatmul.mubr.bf16.gmra.mrb[0].mxu0 %v697
  %v1283 = vpop.f32.mrb[0].mxu0
  %v1284 = vadd.f32 0.0, %v1283
  %v1285 = vpop.f32.mrb[0].mxu0
  %v1286 = vadd.f32 0.0, %v1285
  %v1287 = vpop.f32.mrb[0].mxu0
  %v1288 = vpop.f32.mrb[0].mxu0
  %1289 = vdwg.mxu0
  %v1290 = vadd.f32 %v1012, %v1243
  %v1291 = vadd.f32 %v1013, %v1245
  %v1292 = vadd.f32 %v1014, %v1284
  %v1293 = vadd.f32 %v1015, %v1286
  %v1294 = vxor.u32 %v1290, 2147483648
  %v1295 = vmul.f32 %v1294, 1.442695
  %v1296 = vpow.pop %v1295
  %v1297 = vadd.f32 %v1296, 1.0
  %v1298 = vrcp.pop %v1297
  %v1299 = vmul.f32 1.0, %v1298
  %v1300 = vxor.u32 %v1291, 2147483648
  %v1301 = vmul.f32 %v1300, 1.442695
  %v1302 = vpow.pop %v1301
  %v1303 = vadd.f32 %v1302, 1.0
  %v1304 = vrcp.pop %v1303
  %v1305 = vmul.f32 1.0, %v1304
  %v1306 = vtanh.pop %v1292
  %v1307 = vxor.u32 %v1293, 2147483648
  %v1308 = vmul.f32 %v1307, 1.442695
  %v1309 = vpow.pop %v1308
  %v1310 = vadd.f32 %v1309, 1.0
  %v1311 = vrcp.pop %v1310
  %v1312 = vmul.f32 1.0, %v1311
  %v1313 = vmul.f32 %v1305, %v692
  %v1314 = vmul.f32 %v1299, %v1306
  %v1315 = vadd.f32 %v1313, %v1314
  %v1316 = vtanh.pop %v1315
  %v1317 = vmul.f32 %v1312, %v1316
  %v1318 = vpack.c.bf16 %v1008, %v1008
  %s1319 = scalar_lea.vmem %s4, 4
  %1320 = vst [vmem:[%s1319] sm:$0xf] %v1318
  %v1321 = vpack.c.bf16 %v1317, %v1317
  %s1322 = scalar_lea.vmem %s60, 24
  %1323 = vst [vmem:[%s1322] sm:$0xf] %v1321
  %s1324 = scalar_lea.vmem %s0, 32
  %v1325 = vld [vmem:[%s1324] sm:$0xff]
  %v1326 = vld [vmem:[%s1324 + $0x8] sm:$0xff]
  %v1327 = vunpack.c.l.bf16 %v1325
  %v1328 = vunpack.c.h.bf16 %v1325
  %v1329 = vunpack.c.l.bf16 %v1326
  %v1330 = vunpack.c.h.bf16 %v1326
  %v1331 = vld [vmem:[%s2] sm:$0xff]
  %v1332 = vld [vmem:[%s2 + $0x8] sm:$0xff]
  %v1333 = vld [vmem:[%s2 + $0x10] sm:$0xff]
  %v1334 = vld [vmem:[%s2 + $0x18] sm:$0xff]
  %v1335 = vld [vmem:[%s2 + $0x20] sm:$0xff]
  %v1336 = vld [vmem:[%s2 + $0x28] sm:$0xff]
  %v1337 = vld [vmem:[%s2 + $0x30] sm:$0xff]
  %v1338 = vld [vmem:[%s2 + $0x38] sm:$0xff]
  %v1339 = vld [vmem:[%s2 + $0x40] sm:$0xff]
  %v1340 = vld [vmem:[%s2 + $0x48] sm:$0xff]
  %v1341 = vld [vmem:[%s2 + $0x50] sm:$0xff]
  %v1342 = vld [vmem:[%s2 + $0x58] sm:$0xff]
  %v1343 = vld [vmem:[%s2 + $0x60] sm:$0xff]
  %v1344 = vld [vmem:[%s2 + $0x68] sm:$0xff]
  %v1345 = vld [vmem:[%s2 + $0x70] sm:$0xff]
  %v1346 = vld [vmem:[%s2 + $0x78] sm:$0xff]
  %v1347 = vld [vmem:[%s2 + $0x80] sm:$0xff]
  %v1348 = vld [vmem:[%s2 + $0x88] sm:$0xff]
  %v1349 = vld [vmem:[%s2 + $0x90] sm:$0xff]
  %v1350 = vld [vmem:[%s2 + $0x98] sm:$0xff]
  %v1351 = vld [vmem:[%s2 + $0xa0] sm:$0xff]
  %v1352 = vld [vmem:[%s2 + $0xa8] sm:$0xff]
  %v1353 = vld [vmem:[%s2 + $0xb0] sm:$0xff]
  %v1354 = vld [vmem:[%s2 + $0xb8] sm:$0xff]
  %v1355 = vld [vmem:[%s2 + $0xc0] sm:$0xff]
  %v1356 = vld [vmem:[%s2 + $0xc8] sm:$0xff]
  %v1357 = vld [vmem:[%s2 + $0xd0] sm:$0xff]
  %v1358 = vld [vmem:[%s2 + $0xd8] sm:$0xff]
  %v1359 = vld [vmem:[%s2 + $0xe0] sm:$0xff]
  %v1360 = vld [vmem:[%s2 + $0xe8] sm:$0xff]
  %v1361 = vld [vmem:[%s2 + $0xf0] sm:$0xff]
  %v1362 = vld [vmem:[%s2 + $0xf8] sm:$0xff]
  %v1395 = vunpack.c.l.b16 %v1331
  %v1396 = vunpack.c.h.b16 %v1331
  %v1397 = vunpack.c.l.b16 %v1332
  %v1398 = vunpack.c.h.b16 %v1332
  %v1399 = vunpack.c.l.b16 %v1333
  %v1400 = vunpack.c.h.b16 %v1333
  %v1401 = vunpack.c.l.b16 %v1334
  %v1402 = vunpack.c.h.b16 %v1334
  %v1403 = vunpack.c.l.b16 %v1335
  %v1404 = vunpack.c.h.b16 %v1335
  %v1405 = vunpack.c.l.b16 %v1336
  %v1406 = vunpack.c.h.b16 %v1336
  %v1407 = vunpack.c.l.b16 %v1337
  %v1408 = vunpack.c.h.b16 %v1337
  %v1409 = vunpack.c.l.b16 %v1338
  %v1410 = vunpack.c.h.b16 %v1338
  %v1411 = vunpack.c.l.b16 %v1339
  %v1412 = vunpack.c.h.b16 %v1339
  %v1413 = vunpack.c.l.b16 %v1340
  %v1414 = vunpack.c.h.b16 %v1340
  %v1415 = vunpack.c.l.b16 %v1341
  %v1416 = vunpack.c.h.b16 %v1341
  %v1417 = vunpack.c.l.b16 %v1342
  %v1418 = vunpack.c.h.b16 %v1342
  %v1419 = vunpack.c.l.b16 %v1343
  %v1420 = vunpack.c.h.b16 %v1343
  %v1421 = vunpack.c.l.b16 %v1344
  %v1422 = vunpack.c.h.b16 %v1344
  %v1423 = vunpack.c.l.b16 %v1345
  %v1424 = vunpack.c.h.b16 %v1345
  %v1425 = vunpack.c.l.b16 %v1346
  %v1426 = vunpack.c.h.b16 %v1346
  %v1427 = vunpack.c.l.b16 %v1347
  %v1428 = vunpack.c.h.b16 %v1347
  %v1429 = vunpack.c.l.b16 %v1348
  %v1430 = vunpack.c.h.b16 %v1348
  %v1431 = vunpack.c.l.b16 %v1349
  %v1432 = vunpack.c.h.b16 %v1349
  %v1433 = vunpack.c.l.b16 %v1350
  %v1434 = vunpack.c.h.b16 %v1350
  %v1435 = vunpack.c.l.b16 %v1351
  %v1436 = vunpack.c.h.b16 %v1351
  %v1437 = vunpack.c.l.b16 %v1352
  %v1438 = vunpack.c.h.b16 %v1352
  %v1439 = vunpack.c.l.b16 %v1353
  %v1440 = vunpack.c.h.b16 %v1353
  %v1441 = vunpack.c.l.b16 %v1354
  %v1442 = vunpack.c.h.b16 %v1354
  %v1443 = vunpack.c.l.b16 %v1355
  %v1444 = vunpack.c.h.b16 %v1355
  %v1445 = vunpack.c.l.b16 %v1356
  %v1446 = vunpack.c.h.b16 %v1356
  %v1447 = vunpack.c.l.b16 %v1357
  %v1448 = vunpack.c.h.b16 %v1357
  %v1449 = vunpack.c.l.b16 %v1358
  %v1450 = vunpack.c.h.b16 %v1358
  %v1451 = vunpack.c.l.b16 %v1359
  %v1452 = vunpack.c.h.b16 %v1359
  %v1453 = vunpack.c.l.b16 %v1360
  %v1454 = vunpack.c.h.b16 %v1360
  %v1455 = vunpack.c.l.b16 %v1361
  %v1456 = vunpack.c.h.b16 %v1361
  %v1457 = vunpack.c.l.b16 %v1362
  %v1458 = vunpack.c.h.b16 %v1362
  %v1459 = vpack.c.b16 %v1399, %v1395
  %v1460 = vpack.c.b16 %v1400, %v1396
  %v1461 = vpack.c.b16 %v1401, %v1397
  %v1462 = vpack.c.b16 %v1402, %v1398
  %v1463 = vpack.c.b16 %v1407, %v1403
  %v1464 = vpack.c.b16 %v1408, %v1404
  %v1465 = vpack.c.b16 %v1409, %v1405
  %v1466 = vpack.c.b16 %v1410, %v1406
  %v1467 = vpack.c.b16 %v1415, %v1411
  %v1468 = vpack.c.b16 %v1416, %v1412
  %v1469 = vpack.c.b16 %v1417, %v1413
  %v1470 = vpack.c.b16 %v1418, %v1414
  %v1471 = vpack.c.b16 %v1423, %v1419
  %v1472 = vpack.c.b16 %v1424, %v1420
  %v1473 = vpack.c.b16 %v1425, %v1421
  %v1474 = vpack.c.b16 %v1426, %v1422
  %v1475 = vpack.c.b16 %v1431, %v1427
  %v1476 = vpack.c.b16 %v1432, %v1428
  %v1477 = vpack.c.b16 %v1433, %v1429
  %v1478 = vpack.c.b16 %v1434, %v1430
  %v1479 = vpack.c.b16 %v1439, %v1435
  %v1480 = vpack.c.b16 %v1440, %v1436
  %v1481 = vpack.c.b16 %v1441, %v1437
  %v1482 = vpack.c.b16 %v1442, %v1438
  %v1483 = vpack.c.b16 %v1447, %v1443
  %v1484 = vpack.c.b16 %v1448, %v1444
  %v1485 = vpack.c.b16 %v1449, %v1445
  %v1486 = vpack.c.b16 %v1450, %v1446
  %v1487 = vpack.c.b16 %v1455, %v1451
  %v1488 = vpack.c.b16 %v1456, %v1452
  %v1489 = vpack.c.b16 %v1457, %v1453
  %v1490 = vpack.c.b16 %v1458, %v1454
  %1523 = vmatprep.subr.bf16.mxu0 %v1460
  %1524 = vmatpush1.bf16.msra.mxu0 %v1459
  %1525 = vmatprep.subr.bf16.mxu0 %v1464
  %1526 = vmatpush1.bf16.msra.mxu0 %v1463
  %1527 = vmatprep.subr.bf16.mxu0 %v1468
  %1528 = vmatpush1.bf16.msra.mxu0 %v1467
  %1529 = vmatprep.subr.bf16.mxu0 %v1472
  %1530 = vmatpush1.bf16.msra.mxu0 %v1471
  %1531 = vmatprep.subr.bf16.mxu0 %v1476
  %1532 = vmatpush1.bf16.msra.mxu0 %v1475
  %1533 = vmatprep.subr.bf16.mxu0 %v1480
  %1534 = vmatpush1.bf16.msra.mxu0 %v1479
  %1535 = vmatprep.subr.bf16.mxu0 %v1484
  %1536 = vmatpush1.bf16.msra.mxu0 %v1483
  %1537 = vmatprep.subr.bf16.mxu0 %v1488
  %1538 = vmatpush1.bf16.msra.mxu0 %v1487
  %1539 = vmatprep.subr.bf16.mxu0 0
  %1540 = vmatpush1.bf16.msra.mxu0 0
  %1541 = vmatprep.subr.bf16.mxu0 0
  %1542 = vmatpush1.bf16.msra.mxu0 0
  %1543 = vmatprep.subr.bf16.mxu0 0
  %1544 = vmatpush1.bf16.msra.mxu0 0
  %1545 = vmatprep.subr.bf16.mxu0 0
  %1546 = vmatpush1.bf16.msra.mxu0 0
  %1547 = vmatprep.subr.bf16.mxu0 0
  %1548 = vmatpush1.bf16.msra.mxu0 0
  %1549 = vmatprep.subr.bf16.mxu0 0
  %1550 = vmatpush1.bf16.msra.mxu0 0
  %1551 = vmatprep.subr.bf16.mxu0 0
  %1552 = vmatpush1.bf16.msra.mxu0 0
  %1553 = vmatprep.subr.bf16.mxu0 0
  %1554 = vmatpush1.bf16.msra.mxu0 0
  %1555 = vmatprep.mubr.bf16.mxu0 0
  %1556 = vmatmul.mubr.bf16.gmra.mrb[0].mxu0 %v1318
  %v1557 = vpop.f32.mrb[0].mxu0
  %v1558 = vadd.f32 0.0, %v1557
  %v1559 = vpop.f32.mrb[0].mxu0
  %v1560 = vadd.f32 0.0, %v1559
  %v1561 = vpop.f32.mrb[0].mxu0
  %v1562 = vpop.f32.mrb[0].mxu0
  %1563 = vdwg.mxu0
  %1564 = vmatprep.subr.bf16.mxu0 %v1462
  %1565 = vmatpush1.bf16.msra.mxu0 %v1461
  %1566 = vmatprep.subr.bf16.mxu0 %v1466
  %1567 = vmatpush1.bf16.msra.mxu0 %v1465
  %1568 = vmatprep.subr.bf16.mxu0 %v1470
  %1569 = vmatpush1.bf16.msra.mxu0 %v1469
  %1570 = vmatprep.subr.bf16.mxu0 %v1474
  %1571 = vmatpush1.bf16.msra.mxu0 %v1473
  %1572 = vmatprep.subr.bf16.mxu0 %v1478
  %1573 = vmatpush1.bf16.msra.mxu0 %v1477
  %1574 = vmatprep.subr.bf16.mxu0 %v1482
  %1575 = vmatpush1.bf16.msra.mxu0 %v1481
  %1576 = vmatprep.subr.bf16.mxu0 %v1486
  %1577 = vmatpush1.bf16.msra.mxu0 %v1485
  %1578 = vmatprep.subr.bf16.mxu0 %v1490
  %1579 = vmatpush1.bf16.msra.mxu0 %v1489
  %1580 = vmatprep.subr.bf16.mxu0 0
  %1581 = vmatpush1.bf16.msra.mxu0 0
  %1582 = vmatprep.subr.bf16.mxu0 0
  %1583 = vmatpush1.bf16.msra.mxu0 0
  %1584 = vmatprep.subr.bf16.mxu0 0
  %1585 = vmatpush1.bf16.msra.mxu0 0
  %1586 = vmatprep.subr.bf16.mxu0 0
  %1587 = vmatpush1.bf16.msra.mxu0 0
  %1588 = vmatprep.subr.bf16.mxu0 0
  %1589 = vmatpush1.bf16.msra.mxu0 0
  %1590 = vmatprep.subr.bf16.mxu0 0
  %1591 = vmatpush1.bf16.msra.mxu0 0
  %1592 = vmatprep.subr.bf16.mxu0 0
  %1593 = vmatpush1.bf16.msra.mxu0 0
  %1594 = vmatprep.subr.bf16.mxu0 0
  %1595 = vmatpush1.bf16.msra.mxu0 0
  %1596 = vmatprep.mubr.bf16.mxu0 0
  %1597 = vmatmul.mubr.bf16.gmra.mrb[0].mxu0 %v1318
  %v1598 = vpop.f32.mrb[0].mxu0
  %v1599 = vadd.f32 0.0, %v1598
  %v1600 = vpop.f32.mrb[0].mxu0
  %v1601 = vadd.f32 0.0, %v1600
  %v1602 = vpop.f32.mrb[0].mxu0
  %v1603 = vpop.f32.mrb[0].mxu0
  %1604 = vdwg.mxu0
  %v1605 = vadd.f32 %v1327, %v1558
  %v1606 = vadd.f32 %v1328, %v1560
  %v1607 = vadd.f32 %v1329, %v1599
  %v1608 = vadd.f32 %v1330, %v1601
  %v1609 = vxor.u32 %v1605, 2147483648
  %v1610 = vmul.f32 %v1609, 1.442695
  %v1611 = vpow.pop %v1610
  %v1612 = vadd.f32 %v1611, 1.0
  %v1613 = vrcp.pop %v1612
  %v1614 = vmul.f32 1.0, %v1613
  %v1615 = vxor.u32 %v1606, 2147483648
  %v1616 = vmul.f32 %v1615, 1.442695
  %v1617 = vpow.pop %v1616
  %v1618 = vadd.f32 %v1617, 1.0
  %v1619 = vrcp.pop %v1618
  %v1620 = vmul.f32 1.0, %v1619
  %v1621 = vtanh.pop %v1607
  %v1622 = vxor.u32 %v1608, 2147483648
  %v1623 = vmul.f32 %v1622, 1.442695
  %v1624 = vpow.pop %v1623
  %v1625 = vadd.f32 %v1624, 1.0
  %v1626 = vrcp.pop %v1625
  %v1627 = vmul.f32 1.0, %v1626
  %v1628 = vmul.f32 %v1620, %v1006
  %v1629 = vmul.f32 %v1614, %v1621
  %v1630 = vadd.f32 %v1628, %v1629
  %v1631 = vtanh.pop %v1630
  %v1632 = vmul.f32 %v1627, %v1631
  %s1633 = scalar_lea.vmem %s52, 80
  %v1634 = vld [vmem:[%s1633] sm:$0xff]
  %v1635 = vld [vmem:[%s1633 + $0x8] sm:$0xff]
  %v1636 = vunpack.c.l.bf16 %v1634
  %v1637 = vunpack.c.h.bf16 %v1634
  %v1638 = vunpack.c.l.bf16 %v1635
  %v1639 = vunpack.c.h.bf16 %v1635
  %v1640 = vld [vmem:[%s3] sm:$0xff]
  %v1641 = vld [vmem:[%s3 + $0x8] sm:$0xff]
  %v1642 = vld [vmem:[%s3 + $0x10] sm:$0xff]
  %v1643 = vld [vmem:[%s3 + $0x18] sm:$0xff]
  %v1644 = vld [vmem:[%s3 + $0x20] sm:$0xff]
  %v1645 = vld [vmem:[%s3 + $0x28] sm:$0xff]
  %v1646 = vld [vmem:[%s3 + $0x30] sm:$0xff]
  %v1647 = vld [vmem:[%s3 + $0x38] sm:$0xff]
  %v1648 = vld [vmem:[%s3 + $0x40] sm:$0xff]
  %v1649 = vld [vmem:[%s3 + $0x48] sm:$0xff]
  %v1650 = vld [vmem:[%s3 + $0x50] sm:$0xff]
  %v1651 = vld [vmem:[%s3 + $0x58] sm:$0xff]
  %v1652 = vld [vmem:[%s3 + $0x60] sm:$0xff]
  %v1653 = vld [vmem:[%s3 + $0x68] sm:$0xff]
  %v1654 = vld [vmem:[%s3 + $0x70] sm:$0xff]
  %v1655 = vld [vmem:[%s3 + $0x78] sm:$0xff]
  %v1656 = vld [vmem:[%s3 + $0x80] sm:$0xff]
  %v1657 = vld [vmem:[%s3 + $0x88] sm:$0xff]
  %v1658 = vld [vmem:[%s3 + $0x90] sm:$0xff]
  %v1659 = vld [vmem:[%s3 + $0x98] sm:$0xff]
  %v1660 = vld [vmem:[%s3 + $0xa0] sm:$0xff]
  %v1661 = vld [vmem:[%s3 + $0xa8] sm:$0xff]
  %v1662 = vld [vmem:[%s3 + $0xb0] sm:$0xff]
  %v1663 = vld [vmem:[%s3 + $0xb8] sm:$0xff]
  %v1664 = vld [vmem:[%s3 + $0xc0] sm:$0xff]
  %v1665 = vld [vmem:[%s3 + $0xc8] sm:$0xff]
  %v1666 = vld [vmem:[%s3 + $0xd0] sm:$0xff]
  %v1667 = vld [vmem:[%s3 + $0xd8] sm:$0xff]
  %v1668 = vld [vmem:[%s3 + $0xe0] sm:$0xff]
  %v1669 = vld [vmem:[%s3 + $0xe8] sm:$0xff]
  %v1670 = vld [vmem:[%s3 + $0xf0] sm:$0xff]
  %v1671 = vld [vmem:[%s3 + $0xf8] sm:$0xff]
  %v1704 = vunpack.c.l.b16 %v1640
  %v1705 = vunpack.c.h.b16 %v1640
  %v1706 = vunpack.c.l.b16 %v1641
  %v1707 = vunpack.c.h.b16 %v1641
  %v1708 = vunpack.c.l.b16 %v1642
  %v1709 = vunpack.c.h.b16 %v1642
  %v1710 = vunpack.c.l.b16 %v1643
  %v1711 = vunpack.c.h.b16 %v1643
  %v1712 = vunpack.c.l.b16 %v1644
  %v1713 = vunpack.c.h.b16 %v1644
  %v1714 = vunpack.c.l.b16 %v1645
  %v1715 = vunpack.c.h.b16 %v1645
  %v1716 = vunpack.c.l.b16 %v1646
  %v1717 = vunpack.c.h.b16 %v1646
  %v1718 = vunpack.c.l.b16 %v1647
  %v1719 = vunpack.c.h.b16 %v1647
  %v1720 = vunpack.c.l.b16 %v1648
  %v1721 = vunpack.c.h.b16 %v1648
  %v1722 = vunpack.c.l.b16 %v1649
  %v1723 = vunpack.c.h.b16 %v1649
  %v1724 = vunpack.c.l.b16 %v1650
  %v1725 = vunpack.c.h.b16 %v1650
  %v1726 = vunpack.c.l.b16 %v1651
  %v1727 = vunpack.c.h.b16 %v1651
  %v1728 = vunpack.c.l.b16 %v1652
  %v1729 = vunpack.c.h.b16 %v1652
  %v1730 = vunpack.c.l.b16 %v1653
  %v1731 = vunpack.c.h.b16 %v1653
  %v1732 = vunpack.c.l.b16 %v1654
  %v1733 = vunpack.c.h.b16 %v1654
  %v1734 = vunpack.c.l.b16 %v1655
  %v1735 = vunpack.c.h.b16 %v1655
  %v1736 = vunpack.c.l.b16 %v1656
  %v1737 = vunpack.c.h.b16 %v1656
  %v1738 = vunpack.c.l.b16 %v1657
  %v1739 = vunpack.c.h.b16 %v1657
  %v1740 = vunpack.c.l.b16 %v1658
  %v1741 = vunpack.c.h.b16 %v1658
  %v1742 = vunpack.c.l.b16 %v1659
  %v1743 = vunpack.c.h.b16 %v1659
  %v1744 = vunpack.c.l.b16 %v1660
  %v1745 = vunpack.c.h.b16 %v1660
  %v1746 = vunpack.c.l.b16 %v1661
  %v1747 = vunpack.c.h.b16 %v1661
  %v1748 = vunpack.c.l.b16 %v1662
  %v1749 = vunpack.c.h.b16 %v1662
  %v1750 = vunpack.c.l.b16 %v1663
  %v1751 = vunpack.c.h.b16 %v1663
  %v1752 = vunpack.c.l.b16 %v1664
  %v1753 = vunpack.c.h.b16 %v1664
  %v1754 = vunpack.c.l.b16 %v1665
  %v1755 = vunpack.c.h.b16 %v1665
  %v1756 = vunpack.c.l.b16 %v1666
  %v1757 = vunpack.c.h.b16 %v1666
  %v1758 = vunpack.c.l.b16 %v1667
  %v1759 = vunpack.c.h.b16 %v1667
  %v1760 = vunpack.c.l.b16 %v1668
  %v1761 = vunpack.c.h.b16 %v1668
  %v1762 = vunpack.c.l.b16 %v1669
  %v1763 = vunpack.c.h.b16 %v1669
  %v1764 = vunpack.c.l.b16 %v1670
  %v1765 = vunpack.c.h.b16 %v1670
  %v1766 = vunpack.c.l.b16 %v1671
  %v1767 = vunpack.c.h.b16 %v1671
  %v1768 = vpack.c.b16 %v1708, %v1704
  %v1769 = vpack.c.b16 %v1709, %v1705
  %v1770 = vpack.c.b16 %v1710, %v1706
  %v1771 = vpack.c.b16 %v1711, %v1707
  %v1772 = vpack.c.b16 %v1716, %v1712
  %v1773 = vpack.c.b16 %v1717, %v1713
  %v1774 = vpack.c.b16 %v1718, %v1714
  %v1775 = vpack.c.b16 %v1719, %v1715
  %v1776 = vpack.c.b16 %v1724, %v1720
  %v1777 = vpack.c.b16 %v1725, %v1721
  %v1778 = vpack.c.b16 %v1726, %v1722
  %v1779 = vpack.c.b16 %v1727, %v1723
  %v1780 = vpack.c.b16 %v1732, %v1728
  %v1781 = vpack.c.b16 %v1733, %v1729
  %v1782 = vpack.c.b16 %v1734, %v1730
  %v1783 = vpack.c.b16 %v1735, %v1731
  %v1784 = vpack.c.b16 %v1740, %v1736
  %v1785 = vpack.c.b16 %v1741, %v1737
  %v1786 = vpack.c.b16 %v1742, %v1738
  %v1787 = vpack.c.b16 %v1743, %v1739
  %v1788 = vpack.c.b16 %v1748, %v1744
  %v1789 = vpack.c.b16 %v1749, %v1745
  %v1790 = vpack.c.b16 %v1750, %v1746
  %v1791 = vpack.c.b16 %v1751, %v1747
  %v1792 = vpack.c.b16 %v1756, %v1752
  %v1793 = vpack.c.b16 %v1757, %v1753
  %v1794 = vpack.c.b16 %v1758, %v1754
  %v1795 = vpack.c.b16 %v1759, %v1755
  %v1796 = vpack.c.b16 %v1764, %v1760
  %v1797 = vpack.c.b16 %v1765, %v1761
  %v1798 = vpack.c.b16 %v1766, %v1762
  %v1799 = vpack.c.b16 %v1767, %v1763
  %1832 = vmatprep.subr.bf16.mxu0 %v1769
  %1833 = vmatpush1.bf16.msra.mxu0 %v1768
  %1834 = vmatprep.subr.bf16.mxu0 %v1773
  %1835 = vmatpush1.bf16.msra.mxu0 %v1772
  %1836 = vmatprep.subr.bf16.mxu0 %v1777
  %1837 = vmatpush1.bf16.msra.mxu0 %v1776
  %1838 = vmatprep.subr.bf16.mxu0 %v1781
  %1839 = vmatpush1.bf16.msra.mxu0 %v1780
  %1840 = vmatprep.subr.bf16.mxu0 %v1785
  %1841 = vmatpush1.bf16.msra.mxu0 %v1784
  %1842 = vmatprep.subr.bf16.mxu0 %v1789
  %1843 = vmatpush1.bf16.msra.mxu0 %v1788
  %1844 = vmatprep.subr.bf16.mxu0 %v1793
  %1845 = vmatpush1.bf16.msra.mxu0 %v1792
  %1846 = vmatprep.subr.bf16.mxu0 %v1797
  %1847 = vmatpush1.bf16.msra.mxu0 %v1796
  %1848 = vmatprep.subr.bf16.mxu0 0
  %1849 = vmatpush1.bf16.msra.mxu0 0
  %1850 = vmatprep.subr.bf16.mxu0 0
  %1851 = vmatpush1.bf16.msra.mxu0 0
  %1852 = vmatprep.subr.bf16.mxu0 0
  %1853 = vmatpush1.bf16.msra.mxu0 0
  %1854 = vmatprep.subr.bf16.mxu0 0
  %1855 = vmatpush1.bf16.msra.mxu0 0
  %1856 = vmatprep.subr.bf16.mxu0 0
  %1857 = vmatpush1.bf16.msra.mxu0 0
  %1858 = vmatprep.subr.bf16.mxu0 0
  %1859 = vmatpush1.bf16.msra.mxu0 0
  %1860 = vmatprep.subr.bf16.mxu0 0
  %1861 = vmatpush1.bf16.msra.mxu0 0
  %1862 = vmatprep.subr.bf16.mxu0 0
  %1863 = vmatpush1.bf16.msra.mxu0 0
  %1864 = vmatprep.mubr.bf16.mxu0 0
  %1865 = vmatmul.mubr.bf16.gmra.mrb[0].mxu0 %v1321
  %v1866 = vpop.f32.mrb[0].mxu0
  %v1867 = vadd.f32 0.0, %v1866
  %v1868 = vpop.f32.mrb[0].mxu0
  %v1869 = vadd.f32 0.0, %v1868
  %v1870 = vpop.f32.mrb[0].mxu0
  %v1871 = vpop.f32.mrb[0].mxu0
  %1872 = vdwg.mxu0
  %1873 = vmatprep.subr.bf16.mxu0 %v1771
  %1874 = vmatpush1.bf16.msra.mxu0 %v1770
  %1875 = vmatprep.subr.bf16.mxu0 %v1775
  %1876 = vmatpush1.bf16.msra.mxu0 %v1774
  %1877 = vmatprep.subr.bf16.mxu0 %v1779
  %1878 = vmatpush1.bf16.msra.mxu0 %v1778
  %1879 = vmatprep.subr.bf16.mxu0 %v1783
  %1880 = vmatpush1.bf16.msra.mxu0 %v1782
  %1881 = vmatprep.subr.bf16.mxu0 %v1787
  %1882 = vmatpush1.bf16.msra.mxu0 %v1786
  %1883 = vmatprep.subr.bf16.mxu0 %v1791
  %1884 = vmatpush1.bf16.msra.mxu0 %v1790
  %1885 = vmatprep.subr.bf16.mxu0 %v1795
  %1886 = vmatpush1.bf16.msra.mxu0 %v1794
  %1887 = vmatprep.subr.bf16.mxu0 %v1799
  %1888 = vmatpush1.bf16.msra.mxu0 %v1798
  %1889 = vmatprep.subr.bf16.mxu0 0
  %1890 = vmatpush1.bf16.msra.mxu0 0
  %1891 = vmatprep.subr.bf16.mxu0 0
  %1892 = vmatpush1.bf16.msra.mxu0 0
  %1893 = vmatprep.subr.bf16.mxu0 0
  %1894 = vmatpush1.bf16.msra.mxu0 0
  %1895 = vmatprep.subr.bf16.mxu0 0
  %1896 = vmatpush1.bf16.msra.mxu0 0
  %1897 = vmatprep.subr.bf16.mxu0 0
  %1898 = vmatpush1.bf16.msra.mxu0 0
  %1899 = vmatprep.subr.bf16.mxu0 0
  %1900 = vmatpush1.bf16.msra.mxu0 0
  %1901 = vmatprep.subr.bf16.mxu0 0
  %1902 = vmatpush1.bf16.msra.mxu0 0
  %1903 = vmatprep.subr.bf16.mxu0 0
  %1904 = vmatpush1.bf16.msra.mxu0 0
  %1905 = vmatprep.mubr.bf16.mxu0 0
  %1906 = vmatmul.mubr.bf16.gmra.mrb[0].mxu0 %v1321
  %v1907 = vpop.f32.mrb[0].mxu0
  %v1908 = vadd.f32 0.0, %v1907
  %v1909 = vpop.f32.mrb[0].mxu0
  %v1910 = vadd.f32 0.0, %v1909
  %v1911 = vpop.f32.mrb[0].mxu0
  %v1912 = vpop.f32.mrb[0].mxu0
  %1913 = vdwg.mxu0
  %v1914 = vadd.f32 %v1636, %v1867
  %v1915 = vadd.f32 %v1637, %v1869
  %v1916 = vadd.f32 %v1638, %v1908
  %v1917 = vadd.f32 %v1639, %v1910
  %v1918 = vxor.u32 %v1914, 2147483648
  %v1919 = vmul.f32 %v1918, 1.442695
  %v1920 = vpow.pop %v1919
  %v1921 = vadd.f32 %v1920, 1.0
  %v1922 = vrcp.pop %v1921
  %v1923 = vmul.f32 1.0, %v1922
  %v1924 = vxor.u32 %v1915, 2147483648
  %v1925 = vmul.f32 %v1924, 1.442695
  %v1926 = vpow.pop %v1925
  %v1927 = vadd.f32 %v1926, 1.0
  %v1928 = vrcp.pop %v1927
  %v1929 = vmul.f32 1.0, %v1928
  %v1930 = vtanh.pop %v1916
  %v1931 = vxor.u32 %v1917, 2147483648
  %v1932 = vmul.f32 %v1931, 1.442695
  %v1933 = vpow.pop %v1932
  %v1934 = vadd.f32 %v1933, 1.0
  %v1935 = vrcp.pop %v1934
  %v1936 = vmul.f32 1.0, %v1935
  %v1937 = vmul.f32 %v1929, %v1315
  %v1938 = vmul.f32 %v1923, %v1930
  %v1939 = vadd.f32 %v1937, %v1938
  %v1940 = vtanh.pop %v1939
  %v1941 = vmul.f32 %v1936, %v1940
  %v1942 = vpack.c.bf16 %v1632, %v1632
  %s1943 = scalar_lea.vmem %s4, 8
  %1944 = vst [vmem:[%s1943] sm:$0xf] %v1942
  %v1945 = vpack.c.bf16 %v1941, %v1941
  %s1946 = scalar_lea.vmem %s60, 20
  %1947 = vst [vmem:[%s1946] sm:$0xf] %v1945
  %s1948 = scalar_lea.vmem %s0, 48
  %v1949 = vld [vmem:[%s1948] sm:$0xff]
  %v1950 = vld [vmem:[%s1948 + $0x8] sm:$0xff]
  %v1951 = vunpack.c.l.bf16 %v1949
  %v1952 = vunpack.c.h.bf16 %v1949
  %v1953 = vunpack.c.l.bf16 %v1950
  %v1954 = vunpack.c.h.bf16 %v1950
  %v1955 = vld [vmem:[%s2] sm:$0xff]
  %v1956 = vld [vmem:[%s2 + $0x8] sm:$0xff]
  %v1957 = vld [vmem:[%s2 + $0x10] sm:$0xff]
  %v1958 = vld [vmem:[%s2 + $0x18] sm:$0xff]
  %v1959 = vld [vmem:[%s2 + $0x20] sm:$0xff]
  %v1960 = vld [vmem:[%s2 + $0x28] sm:$0xff]
  %v1961 = vld [vmem:[%s2 + $0x30] sm:$0xff]
  %v1962 = vld [vmem:[%s2 + $0x38] sm:$0xff]
  %v1963 = vld [vmem:[%s2 + $0x40] sm:$0xff]
  %v1964 = vld [vmem:[%s2 + $0x48] sm:$0xff]
  %v1965 = vld [vmem:[%s2 + $0x50] sm:$0xff]
  %v1966 = vld [vmem:[%s2 + $0x58] sm:$0xff]
  %v1967 = vld [vmem:[%s2 + $0x60] sm:$0xff]
  %v1968 = vld [vmem:[%s2 + $0x68] sm:$0xff]
  %v1969 = vld [vmem:[%s2 + $0x70] sm:$0xff]
  %v1970 = vld [vmem:[%s2 + $0x78] sm:$0xff]
  %v1971 = vld [vmem:[%s2 + $0x80] sm:$0xff]
  %v1972 = vld [vmem:[%s2 + $0x88] sm:$0xff]
  %v1973 = vld [vmem:[%s2 + $0x90] sm:$0xff]
  %v1974 = vld [vmem:[%s2 + $0x98] sm:$0xff]
  %v1975 = vld [vmem:[%s2 + $0xa0] sm:$0xff]
  %v1976 = vld [vmem:[%s2 + $0xa8] sm:$0xff]
  %v1977 = vld [vmem:[%s2 + $0xb0] sm:$0xff]
  %v1978 = vld [vmem:[%s2 + $0xb8] sm:$0xff]
  %v1979 = vld [vmem:[%s2 + $0xc0] sm:$0xff]
  %v1980 = vld [vmem:[%s2 + $0xc8] sm:$0xff]
  %v1981 = vld [vmem:[%s2 + $0xd0] sm:$0xff]
  %v1982 = vld [vmem:[%s2 + $0xd8] sm:$0xff]
  %v1983 = vld [vmem:[%s2 + $0xe0] sm:$0xff]
  %v1984 = vld [vmem:[%s2 + $0xe8] sm:$0xff]
  %v1985 = vld [vmem:[%s2 + $0xf0] sm:$0xff]
  %v1986 = vld [vmem:[%s2 + $0xf8] sm:$0xff]
  %v2019 = vunpack.c.l.b16 %v1955
  %v2020 = vunpack.c.h.b16 %v1955
  %v2021 = vunpack.c.l.b16 %v1956
  %v2022 = vunpack.c.h.b16 %v1956
  %v2023 = vunpack.c.l.b16 %v1957
  %v2024 = vunpack.c.h.b16 %v1957
  %v2025 = vunpack.c.l.b16 %v1958
  %v2026 = vunpack.c.h.b16 %v1958
  %v2027 = vunpack.c.l.b16 %v1959
  %v2028 = vunpack.c.h.b16 %v1959
  %v2029 = vunpack.c.l.b16 %v1960
  %v2030 = vunpack.c.h.b16 %v1960
  %v2031 = vunpack.c.l.b16 %v1961
  %v2032 = vunpack.c.h.b16 %v1961
  %v2033 = vunpack.c.l.b16 %v1962
  %v2034 = vunpack.c.h.b16 %v1962
  %v2035 = vunpack.c.l.b16 %v1963
  %v2036 = vunpack.c.h.b16 %v1963
  %v2037 = vunpack.c.l.b16 %v1964
  %v2038 = vunpack.c.h.b16 %v1964
  %v2039 = vunpack.c.l.b16 %v1965
  %v2040 = vunpack.c.h.b16 %v1965
  %v2041 = vunpack.c.l.b16 %v1966
  %v2042 = vunpack.c.h.b16 %v1966
  %v2043 = vunpack.c.l.b16 %v1967
  %v2044 = vunpack.c.h.b16 %v1967
  %v2045 = vunpack.c.l.b16 %v1968
  %v2046 = vunpack.c.h.b16 %v1968
  %v2047 = vunpack.c.l.b16 %v1969
  %v2048 = vunpack.c.h.b16 %v1969
  %v2049 = vunpack.c.l.b16 %v1970
  %v2050 = vunpack.c.h.b16 %v1970
  %v2051 = vunpack.c.l.b16 %v1971
  %v2052 = vunpack.c.h.b16 %v1971
  %v2053 = vunpack.c.l.b16 %v1972
  %v2054 = vunpack.c.h.b16 %v1972
  %v2055 = vunpack.c.l.b16 %v1973
  %v2056 = vunpack.c.h.b16 %v1973
  %v2057 = vunpack.c.l.b16 %v1974
  %v2058 = vunpack.c.h.b16 %v1974
  %v2059 = vunpack.c.l.b16 %v1975
  %v2060 = vunpack.c.h.b16 %v1975
  %v2061 = vunpack.c.l.b16 %v1976
  %v2062 = vunpack.c.h.b16 %v1976
  %v2063 = vunpack.c.l.b16 %v1977
  %v2064 = vunpack.c.h.b16 %v1977
  %v2065 = vunpack.c.l.b16 %v1978
  %v2066 = vunpack.c.h.b16 %v1978
  %v2067 = vunpack.c.l.b16 %v1979
  %v2068 = vunpack.c.h.b16 %v1979
  %v2069 = vunpack.c.l.b16 %v1980
  %v2070 = vunpack.c.h.b16 %v1980
  %v2071 = vunpack.c.l.b16 %v1981
  %v2072 = vunpack.c.h.b16 %v1981
  %v2073 = vunpack.c.l.b16 %v1982
  %v2074 = vunpack.c.h.b16 %v1982
  %v2075 = vunpack.c.l.b16 %v1983
  %v2076 = vunpack.c.h.b16 %v1983
  %v2077 = vunpack.c.l.b16 %v1984
  %v2078 = vunpack.c.h.b16 %v1984
  %v2079 = vunpack.c.l.b16 %v1985
  %v2080 = vunpack.c.h.b16 %v1985
  %v2081 = vunpack.c.l.b16 %v1986
  %v2082 = vunpack.c.h.b16 %v1986
  %v2083 = vpack.c.b16 %v2023, %v2019
  %v2084 = vpack.c.b16 %v2024, %v2020
  %v2085 = vpack.c.b16 %v2025, %v2021
  %v2086 = vpack.c.b16 %v2026, %v2022
  %v2087 = vpack.c.b16 %v2031, %v2027
  %v2088 = vpack.c.b16 %v2032, %v2028
  %v2089 = vpack.c.b16 %v2033, %v2029
  %v2090 = vpack.c.b16 %v2034, %v2030
  %v2091 = vpack.c.b16 %v2039, %v2035
  %v2092 = vpack.c.b16 %v2040, %v2036
  %v2093 = vpack.c.b16 %v2041, %v2037
  %v2094 = vpack.c.b16 %v2042, %v2038
  %v2095 = vpack.c.b16 %v2047, %v2043
  %v2096 = vpack.c.b16 %v2048, %v2044
  %v2097 = vpack.c.b16 %v2049, %v2045
  %v2098 = vpack.c.b16 %v2050, %v2046
  %v2099 = vpack.c.b16 %v2055, %v2051
  %v2100 = vpack.c.b16 %v2056, %v2052
  %v2101 = vpack.c.b16 %v2057, %v2053
  %v2102 = vpack.c.b16 %v2058, %v2054
  %v2103 = vpack.c.b16 %v2063, %v2059
  %v2104 = vpack.c.b16 %v2064, %v2060
  %v2105 = vpack.c.b16 %v2065, %v2061
  %v2106 = vpack.c.b16 %v2066, %v2062
  %v2107 = vpack.c.b16 %v2071, %v2067
  %v2108 = vpack.c.b16 %v2072, %v2068
  %v2109 = vpack.c.b16 %v2073, %v2069
  %v2110 = vpack.c.b16 %v2074, %v2070
  %v2111 = vpack.c.b16 %v2079, %v2075
  %v2112 = vpack.c.b16 %v2080, %v2076
  %v2113 = vpack.c.b16 %v2081, %v2077
  %v2114 = vpack.c.b16 %v2082, %v2078
  %2147 = vmatprep.subr.bf16.mxu0 %v2084
  %2148 = vmatpush1.bf16.msra.mxu0 %v2083
  %2149 = vmatprep.subr.bf16.mxu0 %v2088
  %2150 = vmatpush1.bf16.msra.mxu0 %v2087
  %2151 = vmatprep.subr.bf16.mxu0 %v2092
  %2152 = vmatpush1.bf16.msra.mxu0 %v2091
  %2153 = vmatprep.subr.bf16.mxu0 %v2096
  %2154 = vmatpush1.bf16.msra.mxu0 %v2095
  %2155 = vmatprep.subr.bf16.mxu0 %v2100
  %2156 = vmatpush1.bf16.msra.mxu0 %v2099
  %2157 = vmatprep.subr.bf16.mxu0 %v2104
  %2158 = vmatpush1.bf16.msra.mxu0 %v2103
  %2159 = vmatprep.subr.bf16.mxu0 %v2108
  %2160 = vmatpush1.bf16.msra.mxu0 %v2107
  %2161 = vmatprep.subr.bf16.mxu0 %v2112
  %2162 = vmatpush1.bf16.msra.mxu0 %v2111
  %2163 = vmatprep.subr.bf16.mxu0 0
  %2164 = vmatpush1.bf16.msra.mxu0 0
  %2165 = vmatprep.subr.bf16.mxu0 0
  %2166 = vmatpush1.bf16.msra.mxu0 0
  %2167 = vmatprep.subr.bf16.mxu0 0
  %2168 = vmatpush1.bf16.msra.mxu0 0
  %2169 = vmatprep.subr.bf16.mxu0 0
  %2170 = vmatpush1.bf16.msra.mxu0 0
  %2171 = vmatprep.subr.bf16.mxu0 0
  %2172 = vmatpush1.bf16.msra.mxu0 0
  %2173 = vmatprep.subr.bf16.mxu0 0
  %2174 = vmatpush1.bf16.msra.mxu0 0
  %2175 = vmatprep.subr.bf16.mxu0 0
  %2176 = vmatpush1.bf16.msra.mxu0 0
  %2177 = vmatprep.subr.bf16.mxu0 0
  %2178 = vmatpush1.bf16.msra.mxu0 0
  %2179 = vmatprep.mubr.bf16.mxu0 0
  %2180 = vmatmul.mubr.bf16.gmra.mrb[0].mxu0 %v1942
  %v2181 = vpop.f32.mrb[0].mxu0
  %v2182 = vadd.f32 0.0, %v2181
  %v2183 = vpop.f32.mrb[0].mxu0
  %v2184 = vadd.f32 0.0, %v2183
  %v2185 = vpop.f32.mrb[0].mxu0
  %v2186 = vpop.f32.mrb[0].mxu0
  %2187 = vdwg.mxu0
  %2188 = vmatprep.subr.bf16.mxu0 %v2086
  %2189 = vmatpush1.bf16.msra.mxu0 %v2085
  %2190 = vmatprep.subr.bf16.mxu0 %v2090
  %2191 = vmatpush1.bf16.msra.mxu0 %v2089
  %2192 = vmatprep.subr.bf16.mxu0 %v2094
  %2193 = vmatpush1.bf16.msra.mxu0 %v2093
  %2194 = vmatprep.subr.bf16.mxu0 %v2098
  %2195 = vmatpush1.bf16.msra.mxu0 %v2097
  %2196 = vmatprep.subr.bf16.mxu0 %v2102
  %2197 = vmatpush1.bf16.msra.mxu0 %v2101
  %2198 = vmatprep.subr.bf16.mxu0 %v2106
  %2199 = vmatpush1.bf16.msra.mxu0 %v2105
  %2200 = vmatprep.subr.bf16.mxu0 %v2110
  %2201 = vmatpush1.bf16.msra.mxu0 %v2109
  %2202 = vmatprep.subr.bf16.mxu0 %v2114
  %2203 = vmatpush1.bf16.msra.mxu0 %v2113
  %2204 = vmatprep.subr.bf16.mxu0 0
  %2205 = vmatpush1.bf16.msra.mxu0 0
  %2206 = vmatprep.subr.bf16.mxu0 0
  %2207 = vmatpush1.bf16.msra.mxu0 0
  %2208 = vmatprep.subr.bf16.mxu0 0
  %2209 = vmatpush1.bf16.msra.mxu0 0
  %2210 = vmatprep.subr.bf16.mxu0 0
  %2211 = vmatpush1.bf16.msra.mxu0 0
  %2212 = vmatprep.subr.bf16.mxu0 0
  %2213 = vmatpush1.bf16.msra.mxu0 0
  %2214 = vmatprep.subr.bf16.mxu0 0
  %2215 = vmatpush1.bf16.msra.mxu0 0
  %2216 = vmatprep.subr.bf16.mxu0 0
  %2217 = vmatpush1.bf16.msra.mxu0 0
  %2218 = vmatprep.subr.bf16.mxu0 0
  %2219 = vmatpush1.bf16.msra.mxu0 0
  %2220 = vmatprep.mubr.bf16.mxu0 0
  %2221 = vmatmul.mubr.bf16.gmra.mrb[0].mxu0 %v1942
  %v2222 = vpop.f32.mrb[0].mxu0
  %v2223 = vadd.f32 0.0, %v2222
  %v2224 = vpop.f32.mrb[0].mxu0
  %v2225 = vadd.f32 0.0, %v2224
  %v2226 = vpop.f32.mrb[0].mxu0
  %v2227 = vpop.f32.mrb[0].mxu0
  %2228 = vdwg.mxu0
  %v2229 = vadd.f32 %v1951, %v2182
  %v2230 = vadd.f32 %v1952, %v2184
  %v2231 = vadd.f32 %v1953, %v2223
  %v2232 = vadd.f32 %v1954, %v2225
  %v2233 = vxor.u32 %v2229, 2147483648
  %v2234 = vmul.f32 %v2233, 1.442695
  %v2235 = vpow.pop %v2234
  %v2236 = vadd.f32 %v2235, 1.0
  %v2237 = vrcp.pop %v2236
  %v2238 = vmul.f32 1.0, %v2237
  %v2239 = vxor.u32 %v2230, 2147483648
  %v2240 = vmul.f32 %v2239, 1.442695
  %v2241 = vpow.pop %v2240
  %v2242 = vadd.f32 %v2241, 1.0
  %v2243 = vrcp.pop %v2242
  %v2244 = vmul.f32 1.0, %v2243
  %v2245 = vtanh.pop %v2231
  %v2246 = vxor.u32 %v2232, 2147483648
  %v2247 = vmul.f32 %v2246, 1.442695
  %v2248 = vpow.pop %v2247
  %v2249 = vadd.f32 %v2248, 1.0
  %v2250 = vrcp.pop %v2249
  %v2251 = vmul.f32 1.0, %v2250
  %v2252 = vmul.f32 %v2244, %v1630
  %v2253 = vmul.f32 %v2238, %v2245
  %v2254 = vadd.f32 %v2252, %v2253
  %v2255 = vtanh.pop %v2254
  %v2256 = vmul.f32 %v2251, %v2255
  %s2257 = scalar_lea.vmem %s52, 64
  %v2258 = vld [vmem:[%s2257] sm:$0xff]
  %v2259 = vld [vmem:[%s2257 + $0x8] sm:$0xff]
  %v2260 = vunpack.c.l.bf16 %v2258
  %v2261 = vunpack.c.h.bf16 %v2258
  %v2262 = vunpack.c.l.bf16 %v2259
  %v2263 = vunpack.c.h.bf16 %v2259
  %v2264 = vld [vmem:[%s3] sm:$0xff]
  %v2265 = vld [vmem:[%s3 + $0x8] sm:$0xff]
  %v2266 = vld [vmem:[%s3 + $0x10] sm:$0xff]
  %v2267 = vld [vmem:[%s3 + $0x18] sm:$0xff]
  %v2268 = vld [vmem:[%s3 + $0x20] sm:$0xff]
  %v2269 = vld [vmem:[%s3 + $0x28] sm:$0xff]
  %v2270 = vld [vmem:[%s3 + $0x30] sm:$0xff]
  %v2271 = vld [vmem:[%s3 + $0x38] sm:$0xff]
  %v2272 = vld [vmem:[%s3 + $0x40] sm:$0xff]
  %v2273 = vld [vmem:[%s3 + $0x48] sm:$0xff]
  %v2274 = vld [vmem:[%s3 + $0x50] sm:$0xff]
  %v2275 = vld [vmem:[%s3 + $0x58] sm:$0xff]
  %v2276 = vld [vmem:[%s3 + $0x60] sm:$0xff]
  %v2277 = vld [vmem:[%s3 + $0x68] sm:$0xff]
  %v2278 = vld [vmem:[%s3 + $0x70] sm:$0xff]
  %v2279 = vld [vmem:[%s3 + $0x78] sm:$0xff]
  %v2280 = vld [vmem:[%s3 + $0x80] sm:$0xff]
  %v2281 = vld [vmem:[%s3 + $0x88] sm:$0xff]
  %v2282 = vld [vmem:[%s3 + $0x90] sm:$0xff]
  %v2283 = vld [vmem:[%s3 + $0x98] sm:$0xff]
  %v2284 = vld [vmem:[%s3 + $0xa0] sm:$0xff]
  %v2285 = vld [vmem:[%s3 + $0xa8] sm:$0xff]
  %v2286 = vld [vmem:[%s3 + $0xb0] sm:$0xff]
  %v2287 = vld [vmem:[%s3 + $0xb8] sm:$0xff]
  %v2288 = vld [vmem:[%s3 + $0xc0] sm:$0xff]
  %v2289 = vld [vmem:[%s3 + $0xc8] sm:$0xff]
  %v2290 = vld [vmem:[%s3 + $0xd0] sm:$0xff]
  %v2291 = vld [vmem:[%s3 + $0xd8] sm:$0xff]
  %v2292 = vld [vmem:[%s3 + $0xe0] sm:$0xff]
  %v2293 = vld [vmem:[%s3 + $0xe8] sm:$0xff]
  %v2294 = vld [vmem:[%s3 + $0xf0] sm:$0xff]
  %v2295 = vld [vmem:[%s3 + $0xf8] sm:$0xff]
  %v2328 = vunpack.c.l.b16 %v2264
  %v2329 = vunpack.c.h.b16 %v2264
  %v2330 = vunpack.c.l.b16 %v2265
  %v2331 = vunpack.c.h.b16 %v2265
  %v2332 = vunpack.c.l.b16 %v2266
  %v2333 = vunpack.c.h.b16 %v2266
  %v2334 = vunpack.c.l.b16 %v2267
  %v2335 = vunpack.c.h.b16 %v2267
  %v2336 = vunpack.c.l.b16 %v2268
  %v2337 = vunpack.c.h.b16 %v2268
  %v2338 = vunpack.c.l.b16 %v2269
  %v2339 = vunpack.c.h.b16 %v2269
  %v2340 = vunpack.c.l.b16 %v2270
  %v2341 = vunpack.c.h.b16 %v2270
  %v2342 = vunpack.c.l.b16 %v2271
  %v2343 = vunpack.c.h.b16 %v2271
  %v2344 = vunpack.c.l.b16 %v2272
  %v2345 = vunpack.c.h.b16 %v2272
  %v2346 = vunpack.c.l.b16 %v2273
  %v2347 = vunpack.c.h.b16 %v2273
  %v2348 = vunpack.c.l.b16 %v2274
  %v2349 = vunpack.c.h.b16 %v2274
  %v2350 = vunpack.c.l.b16 %v2275
  %v2351 = vunpack.c.h.b16 %v2275
  %v2352 = vunpack.c.l.b16 %v2276
  %v2353 = vunpack.c.h.b16 %v2276
  %v2354 = vunpack.c.l.b16 %v2277
  %v2355 = vunpack.c.h.b16 %v2277
  %v2356 = vunpack.c.l.b16 %v2278
  %v2357 = vunpack.c.h.b16 %v2278
  %v2358 = vunpack.c.l.b16 %v2279
  %v2359 = vunpack.c.h.b16 %v2279
  %v2360 = vunpack.c.l.b16 %v2280
  %v2361 = vunpack.c.h.b16 %v2280
  %v2362 = vunpack.c.l.b16 %v2281
  %v2363 = vunpack.c.h.b16 %v2281
  %v2364 = vunpack.c.l.b16 %v2282
  %v2365 = vunpack.c.h.b16 %v2282
  %v2366 = vunpack.c.l.b16 %v2283
  %v2367 = vunpack.c.h.b16 %v2283
  %v2368 = vunpack.c.l.b16 %v2284
  %v2369 = vunpack.c.h.b16 %v2284
  %v2370 = vunpack.c.l.b16 %v2285
  %v2371 = vunpack.c.h.b16 %v2285
  %v2372 = vunpack.c.l.b16 %v2286
  %v2373 = vunpack.c.h.b16 %v2286
  %v2374 = vunpack.c.l.b16 %v2287
  %v2375 = vunpack.c.h.b16 %v2287
  %v2376 = vunpack.c.l.b16 %v2288
  %v2377 = vunpack.c.h.b16 %v2288
  %v2378 = vunpack.c.l.b16 %v2289
  %v2379 = vunpack.c.h.b16 %v2289
  %v2380 = vunpack.c.l.b16 %v2290
  %v2381 = vunpack.c.h.b16 %v2290
  %v2382 = vunpack.c.l.b16 %v2291
  %v2383 = vunpack.c.h.b16 %v2291
  %v2384 = vunpack.c.l.b16 %v2292
  %v2385 = vunpack.c.h.b16 %v2292
  %v2386 = vunpack.c.l.b16 %v2293
  %v2387 = vunpack.c.h.b16 %v2293
  %v2388 = vunpack.c.l.b16 %v2294
  %v2389 = vunpack.c.h.b16 %v2294
  %v2390 = vunpack.c.l.b16 %v2295
  %v2391 = vunpack.c.h.b16 %v2295
  %v2392 = vpack.c.b16 %v2332, %v2328
  %v2393 = vpack.c.b16 %v2333, %v2329
  %v2394 = vpack.c.b16 %v2334, %v2330
  %v2395 = vpack.c.b16 %v2335, %v2331
  %v2396 = vpack.c.b16 %v2340, %v2336
  %v2397 = vpack.c.b16 %v2341, %v2337
  %v2398 = vpack.c.b16 %v2342, %v2338
  %v2399 = vpack.c.b16 %v2343, %v2339
  %v2400 = vpack.c.b16 %v2348, %v2344
  %v2401 = vpack.c.b16 %v2349, %v2345
  %v2402 = vpack.c.b16 %v2350, %v2346
  %v2403 = vpack.c.b16 %v2351, %v2347
  %v2404 = vpack.c.b16 %v2356, %v2352
  %v2405 = vpack.c.b16 %v2357, %v2353
  %v2406 = vpack.c.b16 %v2358, %v2354
  %v2407 = vpack.c.b16 %v2359, %v2355
  %v2408 = vpack.c.b16 %v2364, %v2360
  %v2409 = vpack.c.b16 %v2365, %v2361
  %v2410 = vpack.c.b16 %v2366, %v2362
  %v2411 = vpack.c.b16 %v2367, %v2363
  %v2412 = vpack.c.b16 %v2372, %v2368
  %v2413 = vpack.c.b16 %v2373, %v2369
  %v2414 = vpack.c.b16 %v2374, %v2370
  %v2415 = vpack.c.b16 %v2375, %v2371
  %v2416 = vpack.c.b16 %v2380, %v2376
  %v2417 = vpack.c.b16 %v2381, %v2377
  %v2418 = vpack.c.b16 %v2382, %v2378
  %v2419 = vpack.c.b16 %v2383, %v2379
  %v2420 = vpack.c.b16 %v2388, %v2384
  %v2421 = vpack.c.b16 %v2389, %v2385
  %v2422 = vpack.c.b16 %v2390, %v2386
  %v2423 = vpack.c.b16 %v2391, %v2387
  %2456 = vmatprep.subr.bf16.mxu0 %v2393
  %2457 = vmatpush1.bf16.msra.mxu0 %v2392
  %2458 = vmatprep.subr.bf16.mxu0 %v2397
  %2459 = vmatpush1.bf16.msra.mxu0 %v2396
  %2460 = vmatprep.subr.bf16.mxu0 %v2401
  %2461 = vmatpush1.bf16.msra.mxu0 %v2400
  %2462 = vmatprep.subr.bf16.mxu0 %v2405
  %2463 = vmatpush1.bf16.msra.mxu0 %v2404
  %2464 = vmatprep.subr.bf16.mxu0 %v2409
  %2465 = vmatpush1.bf16.msra.mxu0 %v2408
  %2466 = vmatprep.subr.bf16.mxu0 %v2413
  %2467 = vmatpush1.bf16.msra.mxu0 %v2412
  %2468 = vmatprep.subr.bf16.mxu0 %v2417
  %2469 = vmatpush1.bf16.msra.mxu0 %v2416
  %2470 = vmatprep.subr.bf16.mxu0 %v2421
  %2471 = vmatpush1.bf16.msra.mxu0 %v2420
  %2472 = vmatprep.subr.bf16.mxu0 0
  %2473 = vmatpush1.bf16.msra.mxu0 0
  %2474 = vmatprep.subr.bf16.mxu0 0
  %2475 = vmatpush1.bf16.msra.mxu0 0
  %2476 = vmatprep.subr.bf16.mxu0 0
  %2477 = vmatpush1.bf16.msra.mxu0 0
  %2478 = vmatprep.subr.bf16.mxu0 0
  %2479 = vmatpush1.bf16.msra.mxu0 0
  %2480 = vmatprep.subr.bf16.mxu0 0
  %2481 = vmatpush1.bf16.msra.mxu0 0
  %2482 = vmatprep.subr.bf16.mxu0 0
  %2483 = vmatpush1.bf16.msra.mxu0 0
  %2484 = vmatprep.subr.bf16.mxu0 0
  %2485 = vmatpush1.bf16.msra.mxu0 0
  %2486 = vmatprep.subr.bf16.mxu0 0
  %2487 = vmatpush1.bf16.msra.mxu0 0
  %2488 = vmatprep.mubr.bf16.mxu0 0
  %2489 = vmatmul.mubr.bf16.gmra.mrb[0].mxu0 %v1945
  %v2490 = vpop.f32.mrb[0].mxu0
  %v2491 = vadd.f32 0.0, %v2490
  %v2492 = vpop.f32.mrb[0].mxu0
  %v2493 = vadd.f32 0.0, %v2492
  %v2494 = vpop.f32.mrb[0].mxu0
  %v2495 = vpop.f32.mrb[0].mxu0
  %2496 = vdwg.mxu0
  %2497 = vmatprep.subr.bf16.mxu0 %v2395
  %2498 = vmatpush1.bf16.msra.mxu0 %v2394
  %2499 = vmatprep.subr.bf16.mxu0 %v2399
  %2500 = vmatpush1.bf16.msra.mxu0 %v2398
  %2501 = vmatprep.subr.bf16.mxu0 %v2403
  %2502 = vmatpush1.bf16.msra.mxu0 %v2402
  %2503 = vmatprep.subr.bf16.mxu0 %v2407
  %2504 = vmatpush1.bf16.msra.mxu0 %v2406
  %2505 = vmatprep.subr.bf16.mxu0 %v2411
  %2506 = vmatpush1.bf16.msra.mxu0 %v2410
  %2507 = vmatprep.subr.bf16.mxu0 %v2415
  %2508 = vmatpush1.bf16.msra.mxu0 %v2414
  %2509 = vmatprep.subr.bf16.mxu0 %v2419
  %2510 = vmatpush1.bf16.msra.mxu0 %v2418
  %2511 = vmatprep.subr.bf16.mxu0 %v2423
  %2512 = vmatpush1.bf16.msra.mxu0 %v2422
  %2513 = vmatprep.subr.bf16.mxu0 0
  %2514 = vmatpush1.bf16.msra.mxu0 0
  %2515 = vmatprep.subr.bf16.mxu0 0
  %2516 = vmatpush1.bf16.msra.mxu0 0
  %2517 = vmatprep.subr.bf16.mxu0 0
  %2518 = vmatpush1.bf16.msra.mxu0 0
  %2519 = vmatprep.subr.bf16.mxu0 0
  %2520 = vmatpush1.bf16.msra.mxu0 0
  %2521 = vmatprep.subr.bf16.mxu0 0
  %2522 = vmatpush1.bf16.msra.mxu0 0
  %2523 = vmatprep.subr.bf16.mxu0 0
  %2524 = vmatpush1.bf16.msra.mxu0 0
  %2525 = vmatprep.subr.bf16.mxu0 0
  %2526 = vmatpush1.bf16.msra.mxu0 0
  %2527 = vmatprep.subr.bf16.mxu0 0
  %2528 = vmatpush1.bf16.msra.mxu0 0
  %2529 = vmatprep.mubr.bf16.mxu0 0
  %2530 = vmatmul.mubr.bf16.gmra.mrb[0].mxu0 %v1945
  %v2531 = vpop.f32.mrb[0].mxu0
  %v2532 = vadd.f32 0.0, %v2531
  %v2533 = vpop.f32.mrb[0].mxu0
  %v2534 = vadd.f32 0.0, %v2533
  %v2535 = vpop.f32.mrb[0].mxu0
  %v2536 = vpop.f32.mrb[0].mxu0
  %2537 = vdwg.mxu0
  %v2538 = vadd.f32 %v2260, %v2491
  %v2539 = vadd.f32 %v2261, %v2493
  %v2540 = vadd.f32 %v2262, %v2532
  %v2541 = vadd.f32 %v2263, %v2534
  %v2542 = vxor.u32 %v2538, 2147483648
  %v2543 = vmul.f32 %v2542, 1.442695
  %v2544 = vpow.pop %v2543
  %v2545 = vadd.f32 %v2544, 1.0
  %v2546 = vrcp.pop %v2545
  %v2547 = vmul.f32 1.0, %v2546
  %v2548 = vxor.u32 %v2539, 2147483648
  %v2549 = vmul.f32 %v2548, 1.442695
  %v2550 = vpow.pop %v2549
  %v2551 = vadd.f32 %v2550, 1.0
  %v2552 = vrcp.pop %v2551
  %v2553 = vmul.f32 1.0, %v2552
  %v2554 = vtanh.pop %v2540
  %v2555 = vxor.u32 %v2541, 2147483648
  %v2556 = vmul.f32 %v2555, 1.442695
  %v2557 = vpow.pop %v2556
  %v2558 = vadd.f32 %v2557, 1.0
  %v2559 = vrcp.pop %v2558
  %v2560 = vmul.f32 1.0, %v2559
  %v2561 = vmul.f32 %v2553, %v1939
  %v2562 = vmul.f32 %v2547, %v2554
  %v2563 = vadd.f32 %v2561, %v2562
  %v2564 = vtanh.pop %v2563
  %v2565 = vmul.f32 %v2560, %v2564
  %v2566 = vpack.c.bf16 %v2256, %v2256
  %s2567 = scalar_lea.vmem %s4, 12
  %2568 = vst [vmem:[%s2567] sm:$0xf] %v2566
  %v2569 = vpack.c.bf16 %v2565, %v2565
  %s2570 = scalar_lea.vmem %s60, 16
  %2571 = vst [vmem:[%s2570] sm:$0xf] %v2569
  %s2572 = scalar_lea.vmem %s0, 64
  %v2573 = vld [vmem:[%s2572] sm:$0xff]
  %v2574 = vld [vmem:[%s2572 + $0x8] sm:$0xff]
  %v2575 = vunpack.c.l.bf16 %v2573
  %v2576 = vunpack.c.h.bf16 %v2573
  %v2577 = vunpack.c.l.bf16 %v2574
  %v2578 = vunpack.c.h.bf16 %v2574
  %v2579 = vld [vmem:[%s2] sm:$0xff]
  %v2580 = vld [vmem:[%s2 + $0x8] sm:$0xff]
  %v2581 = vld [vmem:[%s2 + $0x10] sm:$0xff]
  %v2582 = vld [vmem:[%s2 + $0x18] sm:$0xff]
  %v2583 = vld [vmem:[%s2 + $0x20] sm:$0xff]
  %v2584 = vld [vmem:[%s2 + $0x28] sm:$0xff]
  %v2585 = vld [vmem:[%s2 + $0x30] sm:$0xff]
  %v2586 = vld [vmem:[%s2 + $0x38] sm:$0xff]
  %v2587 = vld [vmem:[%s2 + $0x40] sm:$0xff]
  %v2588 = vld [vmem:[%s2 + $0x48] sm:$0xff]
  %v2589 = vld [vmem:[%s2 + $0x50] sm:$0xff]
  %v2590 = vld [vmem:[%s2 + $0x58] sm:$0xff]
  %v2591 = vld [vmem:[%s2 + $0x60] sm:$0xff]
  %v2592 = vld [vmem:[%s2 + $0x68] sm:$0xff]
  %v2593 = vld [vmem:[%s2 + $0x70] sm:$0xff]
  %v2594 = vld [vmem:[%s2 + $0x78] sm:$0xff]
  %v2595 = vld [vmem:[%s2 + $0x80] sm:$0xff]
  %v2596 = vld [vmem:[%s2 + $0x88] sm:$0xff]
  %v2597 = vld [vmem:[%s2 + $0x90] sm:$0xff]
  %v2598 = vld [vmem:[%s2 + $0x98] sm:$0xff]
  %v2599 = vld [vmem:[%s2 + $0xa0] sm:$0xff]
  %v2600 = vld [vmem:[%s2 + $0xa8] sm:$0xff]
  %v2601 = vld [vmem:[%s2 + $0xb0] sm:$0xff]
  %v2602 = vld [vmem:[%s2 + $0xb8] sm:$0xff]
  %v2603 = vld [vmem:[%s2 + $0xc0] sm:$0xff]
  %v2604 = vld [vmem:[%s2 + $0xc8] sm:$0xff]
  %v2605 = vld [vmem:[%s2 + $0xd0] sm:$0xff]
  %v2606 = vld [vmem:[%s2 + $0xd8] sm:$0xff]
  %v2607 = vld [vmem:[%s2 + $0xe0] sm:$0xff]
  %v2608 = vld [vmem:[%s2 + $0xe8] sm:$0xff]
  %v2609 = vld [vmem:[%s2 + $0xf0] sm:$0xff]
  %v2610 = vld [vmem:[%s2 + $0xf8] sm:$0xff]
  %v2643 = vunpack.c.l.b16 %v2579
  %v2644 = vunpack.c.h.b16 %v2579
  %v2645 = vunpack.c.l.b16 %v2580
  %v2646 = vunpack.c.h.b16 %v2580
  %v2647 = vunpack.c.l.b16 %v2581
  %v2648 = vunpack.c.h.b16 %v2581
  %v2649 = vunpack.c.l.b16 %v2582
  %v2650 = vunpack.c.h.b16 %v2582
  %v2651 = vunpack.c.l.b16 %v2583
  %v2652 = vunpack.c.h.b16 %v2583
  %v2653 = vunpack.c.l.b16 %v2584
  %v2654 = vunpack.c.h.b16 %v2584
  %v2655 = vunpack.c.l.b16 %v2585
  %v2656 = vunpack.c.h.b16 %v2585
  %v2657 = vunpack.c.l.b16 %v2586
  %v2658 = vunpack.c.h.b16 %v2586
  %v2659 = vunpack.c.l.b16 %v2587
  %v2660 = vunpack.c.h.b16 %v2587
  %v2661 = vunpack.c.l.b16 %v2588
  %v2662 = vunpack.c.h.b16 %v2588
  %v2663 = vunpack.c.l.b16 %v2589
  %v2664 = vunpack.c.h.b16 %v2589
  %v2665 = vunpack.c.l.b16 %v2590
  %v2666 = vunpack.c.h.b16 %v2590
  %v2667 = vunpack.c.l.b16 %v2591
  %v2668 = vunpack.c.h.b16 %v2591
  %v2669 = vunpack.c.l.b16 %v2592
  %v2670 = vunpack.c.h.b16 %v2592
  %v2671 = vunpack.c.l.b16 %v2593
  %v2672 = vunpack.c.h.b16 %v2593
  %v2673 = vunpack.c.l.b16 %v2594
  %v2674 = vunpack.c.h.b16 %v2594
  %v2675 = vunpack.c.l.b16 %v2595
  %v2676 = vunpack.c.h.b16 %v2595
  %v2677 = vunpack.c.l.b16 %v2596
  %v2678 = vunpack.c.h.b16 %v2596
  %v2679 = vunpack.c.l.b16 %v2597
  %v2680 = vunpack.c.h.b16 %v2597
  %v2681 = vunpack.c.l.b16 %v2598
  %v2682 = vunpack.c.h.b16 %v2598
  %v2683 = vunpack.c.l.b16 %v2599
  %v2684 = vunpack.c.h.b16 %v2599
  %v2685 = vunpack.c.l.b16 %v2600
  %v2686 = vunpack.c.h.b16 %v2600
  %v2687 = vunpack.c.l.b16 %v2601
  %v2688 = vunpack.c.h.b16 %v2601
  %v2689 = vunpack.c.l.b16 %v2602
  %v2690 = vunpack.c.h.b16 %v2602
  %v2691 = vunpack.c.l.b16 %v2603
  %v2692 = vunpack.c.h.b16 %v2603
  %v2693 = vunpack.c.l.b16 %v2604
  %v2694 = vunpack.c.h.b16 %v2604
  %v2695 = vunpack.c.l.b16 %v2605
  %v2696 = vunpack.c.h.b16 %v2605
  %v2697 = vunpack.c.l.b16 %v2606
  %v2698 = vunpack.c.h.b16 %v2606
  %v2699 = vunpack.c.l.b16 %v2607
  %v2700 = vunpack.c.h.b16 %v2607
  %v2701 = vunpack.c.l.b16 %v2608
  %v2702 = vunpack.c.h.b16 %v2608
  %v2703 = vunpack.c.l.b16 %v2609
  %v2704 = vunpack.c.h.b16 %v2609
  %v2705 = vunpack.c.l.b16 %v2610
  %v2706 = vunpack.c.h.b16 %v2610
  %v2707 = vpack.c.b16 %v2647, %v2643
  %v2708 = vpack.c.b16 %v2648, %v2644
  %v2709 = vpack.c.b16 %v2649, %v2645
  %v2710 = vpack.c.b16 %v2650, %v2646
  %v2711 = vpack.c.b16 %v2655, %v2651
  %v2712 = vpack.c.b16 %v2656, %v2652
  %v2713 = vpack.c.b16 %v2657, %v2653
  %v2714 = vpack.c.b16 %v2658, %v2654
  %v2715 = vpack.c.b16 %v2663, %v2659
  %v2716 = vpack.c.b16 %v2664, %v2660
  %v2717 = vpack.c.b16 %v2665, %v2661
  %v2718 = vpack.c.b16 %v2666, %v2662
  %v2719 = vpack.c.b16 %v2671, %v2667
  %v2720 = vpack.c.b16 %v2672, %v2668
  %v2721 = vpack.c.b16 %v2673, %v2669
  %v2722 = vpack.c.b16 %v2674, %v2670
  %v2723 = vpack.c.b16 %v2679, %v2675
  %v2724 = vpack.c.b16 %v2680, %v2676
  %v2725 = vpack.c.b16 %v2681, %v2677
  %v2726 = vpack.c.b16 %v2682, %v2678
  %v2727 = vpack.c.b16 %v2687, %v2683
  %v2728 = vpack.c.b16 %v2688, %v2684
  %v2729 = vpack.c.b16 %v2689, %v2685
  %v2730 = vpack.c.b16 %v2690, %v2686
  %v2731 = vpack.c.b16 %v2695, %v2691
  %v2732 = vpack.c.b16 %v2696, %v2692
  %v2733 = vpack.c.b16 %v2697, %v2693
  %v2734 = vpack.c.b16 %v2698, %v2694
  %v2735 = vpack.c.b16 %v2703, %v2699
  %v2736 = vpack.c.b16 %v2704, %v2700
  %v2737 = vpack.c.b16 %v2705, %v2701
  %v2738 = vpack.c.b16 %v2706, %v2702
  %2771 = vmatprep.subr.bf16.mxu0 %v2708
  %2772 = vmatpush1.bf16.msra.mxu0 %v2707
  %2773 = vmatprep.subr.bf16.mxu0 %v2712
  %2774 = vmatpush1.bf16.msra.mxu0 %v2711
  %2775 = vmatprep.subr.bf16.mxu0 %v2716
  %2776 = vmatpush1.bf16.msra.mxu0 %v2715
  %2777 = vmatprep.subr.bf16.mxu0 %v2720
  %2778 = vmatpush1.bf16.msra.mxu0 %v2719
  %2779 = vmatprep.subr.bf16.mxu0 %v2724
  %2780 = vmatpush1.bf16.msra.mxu0 %v2723
  %2781 = vmatprep.subr.bf16.mxu0 %v2728
  %2782 = vmatpush1.bf16.msra.mxu0 %v2727
  %2783 = vmatprep.subr.bf16.mxu0 %v2732
  %2784 = vmatpush1.bf16.msra.mxu0 %v2731
  %2785 = vmatprep.subr.bf16.mxu0 %v2736
  %2786 = vmatpush1.bf16.msra.mxu0 %v2735
  %2787 = vmatprep.subr.bf16.mxu0 0
  %2788 = vmatpush1.bf16.msra.mxu0 0
  %2789 = vmatprep.subr.bf16.mxu0 0
  %2790 = vmatpush1.bf16.msra.mxu0 0
  %2791 = vmatprep.subr.bf16.mxu0 0
  %2792 = vmatpush1.bf16.msra.mxu0 0
  %2793 = vmatprep.subr.bf16.mxu0 0
  %2794 = vmatpush1.bf16.msra.mxu0 0
  %2795 = vmatprep.subr.bf16.mxu0 0
  %2796 = vmatpush1.bf16.msra.mxu0 0
  %2797 = vmatprep.subr.bf16.mxu0 0
  %2798 = vmatpush1.bf16.msra.mxu0 0
  %2799 = vmatprep.subr.bf16.mxu0 0
  %2800 = vmatpush1.bf16.msra.mxu0 0
  %2801 = vmatprep.subr.bf16.mxu0 0
  %2802 = vmatpush1.bf16.msra.mxu0 0
  %2803 = vmatprep.mubr.bf16.mxu0 0
  %2804 = vmatmul.mubr.bf16.gmra.mrb[0].mxu0 %v2566
  %v2805 = vpop.f32.mrb[0].mxu0
  %v2806 = vadd.f32 0.0, %v2805
  %v2807 = vpop.f32.mrb[0].mxu0
  %v2808 = vadd.f32 0.0, %v2807
  %v2809 = vpop.f32.mrb[0].mxu0
  %v2810 = vpop.f32.mrb[0].mxu0
  %2811 = vdwg.mxu0
  %2812 = vmatprep.subr.bf16.mxu0 %v2710
  %2813 = vmatpush1.bf16.msra.mxu0 %v2709
  %2814 = vmatprep.subr.bf16.mxu0 %v2714
  %2815 = vmatpush1.bf16.msra.mxu0 %v2713
  %2816 = vmatprep.subr.bf16.mxu0 %v2718
  %2817 = vmatpush1.bf16.msra.mxu0 %v2717
  %2818 = vmatprep.subr.bf16.mxu0 %v2722
  %2819 = vmatpush1.bf16.msra.mxu0 %v2721
  %2820 = vmatprep.subr.bf16.mxu0 %v2726
  %2821 = vmatpush1.bf16.msra.mxu0 %v2725
  %2822 = vmatprep.subr.bf16.mxu0 %v2730
  %2823 = vmatpush1.bf16.msra.mxu0 %v2729
  %2824 = vmatprep.subr.bf16.mxu0 %v2734
  %2825 = vmatpush1.bf16.msra.mxu0 %v2733
  %2826 = vmatprep.subr.bf16.mxu0 %v2738
  %2827 = vmatpush1.bf16.msra.mxu0 %v2737
  %2828 = vmatprep.subr.bf16.mxu0 0
  %2829 = vmatpush1.bf16.msra.mxu0 0
  %2830 = vmatprep.subr.bf16.mxu0 0
  %2831 = vmatpush1.bf16.msra.mxu0 0
  %2832 = vmatprep.subr.bf16.mxu0 0
  %2833 = vmatpush1.bf16.msra.mxu0 0
  %2834 = vmatprep.subr.bf16.mxu0 0
  %2835 = vmatpush1.bf16.msra.mxu0 0
  %2836 = vmatprep.subr.bf16.mxu0 0
  %2837 = vmatpush1.bf16.msra.mxu0 0
  %2838 = vmatprep.subr.bf16.mxu0 0
  %2839 = vmatpush1.bf16.msra.mxu0 0
  %2840 = vmatprep.subr.bf16.mxu0 0
  %2841 = vmatpush1.bf16.msra.mxu0 0
  %2842 = vmatprep.subr.bf16.mxu0 0
  %2843 = vmatpush1.bf16.msra.mxu0 0
  %2844 = vmatprep.mubr.bf16.mxu0 0
  %2845 = vmatmul.mubr.bf16.gmra.mrb[0].mxu0 %v2566
  %v2846 = vpop.f32.mrb[0].mxu0
  %v2847 = vadd.f32 0.0, %v2846
  %v2848 = vpop.f32.mrb[0].mxu0
  %v2849 = vadd.f32 0.0, %v2848
  %v2850 = vpop.f32.mrb[0].mxu0
  %v2851 = vpop.f32.mrb[0].mxu0
  %2852 = vdwg.mxu0
  %v2853 = vadd.f32 %v2575, %v2806
  %v2854 = vadd.f32 %v2576, %v2808
  %v2855 = vadd.f32 %v2577, %v2847
  %v2856 = vadd.f32 %v2578, %v2849
  %v2857 = vxor.u32 %v2853, 2147483648
  %v2858 = vmul.f32 %v2857, 1.442695
  %v2859 = vpow.pop %v2858
  %v2860 = vadd.f32 %v2859, 1.0
  %v2861 = vrcp.pop %v2860
  %v2862 = vmul.f32 1.0, %v2861
  %v2863 = vxor.u32 %v2854, 2147483648
  %v2864 = vmul.f32 %v2863, 1.442695
  %v2865 = vpow.pop %v2864
  %v2866 = vadd.f32 %v2865, 1.0
  %v2867 = vrcp.pop %v2866
  %v2868 = vmul.f32 1.0, %v2867
  %v2869 = vtanh.pop %v2855
  %v2870 = vxor.u32 %v2856, 2147483648
  %v2871 = vmul.f32 %v2870, 1.442695
  %v2872 = vpow.pop %v2871
  %v2873 = vadd.f32 %v2872, 1.0
  %v2874 = vrcp.pop %v2873
  %v2875 = vmul.f32 1.0, %v2874
  %v2876 = vmul.f32 %v2868, %v2254
  %v2877 = vmul.f32 %v2862, %v2869
  %v2878 = vadd.f32 %v2876, %v2877
  %v2879 = vtanh.pop %v2878
  %v2880 = vmul.f32 %v2875, %v2879
  %s2881 = scalar_lea.vmem %s52, 48
  %v2882 = vld [vmem:[%s2881] sm:$0xff]
  %v2883 = vld [vmem:[%s2881 + $0x8] sm:$0xff]
  %v2884 = vunpack.c.l.bf16 %v2882
  %v2885 = vunpack.c.h.bf16 %v2882
  %v2886 = vunpack.c.l.bf16 %v2883
  %v2887 = vunpack.c.h.bf16 %v2883
  %v2888 = vld [vmem:[%s3] sm:$0xff]
  %v2889 = vld [vmem:[%s3 + $0x8] sm:$0xff]
  %v2890 = vld [vmem:[%s3 + $0x10] sm:$0xff]
  %v2891 = vld [vmem:[%s3 + $0x18] sm:$0xff]
  %v2892 = vld [vmem:[%s3 + $0x20] sm:$0xff]
  %v2893 = vld [vmem:[%s3 + $0x28] sm:$0xff]
  %v2894 = vld [vmem:[%s3 + $0x30] sm:$0xff]
  %v2895 = vld [vmem:[%s3 + $0x38] sm:$0xff]
  %v2896 = vld [vmem:[%s3 + $0x40] sm:$0xff]
  %v2897 = vld [vmem:[%s3 + $0x48] sm:$0xff]
  %v2898 = vld [vmem:[%s3 + $0x50] sm:$0xff]
  %v2899 = vld [vmem:[%s3 + $0x58] sm:$0xff]
  %v2900 = vld [vmem:[%s3 + $0x60] sm:$0xff]
  %v2901 = vld [vmem:[%s3 + $0x68] sm:$0xff]
  %v2902 = vld [vmem:[%s3 + $0x70] sm:$0xff]
  %v2903 = vld [vmem:[%s3 + $0x78] sm:$0xff]
  %v2904 = vld [vmem:[%s3 + $0x80] sm:$0xff]
  %v2905 = vld [vmem:[%s3 + $0x88] sm:$0xff]
  %v2906 = vld [vmem:[%s3 + $0x90] sm:$0xff]
  %v2907 = vld [vmem:[%s3 + $0x98] sm:$0xff]
  %v2908 = vld [vmem:[%s3 + $0xa0] sm:$0xff]
  %v2909 = vld [vmem:[%s3 + $0xa8] sm:$0xff]
  %v2910 = vld [vmem:[%s3 + $0xb0] sm:$0xff]
  %v2911 = vld [vmem:[%s3 + $0xb8] sm:$0xff]
  %v2912 = vld [vmem:[%s3 + $0xc0] sm:$0xff]
  %v2913 = vld [vmem:[%s3 + $0xc8] sm:$0xff]
  %v2914 = vld [vmem:[%s3 + $0xd0] sm:$0xff]
  %v2915 = vld [vmem:[%s3 + $0xd8] sm:$0xff]
  %v2916 = vld [vmem:[%s3 + $0xe0] sm:$0xff]
  %v2917 = vld [vmem:[%s3 + $0xe8] sm:$0xff]
  %v2918 = vld [vmem:[%s3 + $0xf0] sm:$0xff]
  %v2919 = vld [vmem:[%s3 + $0xf8] sm:$0xff]
  %v2952 = vunpack.c.l.b16 %v2888
  %v2953 = vunpack.c.h.b16 %v2888
  %v2954 = vunpack.c.l.b16 %v2889
  %v2955 = vunpack.c.h.b16 %v2889
  %v2956 = vunpack.c.l.b16 %v2890
  %v2957 = vunpack.c.h.b16 %v2890
  %v2958 = vunpack.c.l.b16 %v2891
  %v2959 = vunpack.c.h.b16 %v2891
  %v2960 = vunpack.c.l.b16 %v2892
  %v2961 = vunpack.c.h.b16 %v2892
  %v2962 = vunpack.c.l.b16 %v2893
  %v2963 = vunpack.c.h.b16 %v2893
  %v2964 = vunpack.c.l.b16 %v2894
  %v2965 = vunpack.c.h.b16 %v2894
  %v2966 = vunpack.c.l.b16 %v2895
  %v2967 = vunpack.c.h.b16 %v2895
  %v2968 = vunpack.c.l.b16 %v2896
  %v2969 = vunpack.c.h.b16 %v2896
  %v2970 = vunpack.c.l.b16 %v2897
  %v2971 = vunpack.c.h.b16 %v2897
  %v2972 = vunpack.c.l.b16 %v2898
  %v2973 = vunpack.c.h.b16 %v2898
  %v2974 = vunpack.c.l.b16 %v2899
  %v2975 = vunpack.c.h.b16 %v2899
  %v2976 = vunpack.c.l.b16 %v2900
  %v2977 = vunpack.c.h.b16 %v2900
  %v2978 = vunpack.c.l.b16 %v2901
  %v2979 = vunpack.c.h.b16 %v2901
  %v2980 = vunpack.c.l.b16 %v2902
  %v2981 = vunpack.c.h.b16 %v2902
  %v2982 = vunpack.c.l.b16 %v2903
  %v2983 = vunpack.c.h.b16 %v2903
  %v2984 = vunpack.c.l.b16 %v2904
  %v2985 = vunpack.c.h.b16 %v2904
  %v2986 = vunpack.c.l.b16 %v2905
  %v2987 = vunpack.c.h.b16 %v2905
  %v2988 = vunpack.c.l.b16 %v2906
  %v2989 = vunpack.c.h.b16 %v2906
  %v2990 = vunpack.c.l.b16 %v2907
  %v2991 = vunpack.c.h.b16 %v2907
  %v2992 = vunpack.c.l.b16 %v2908
  %v2993 = vunpack.c.h.b16 %v2908
  %v2994 = vunpack.c.l.b16 %v2909
  %v2995 = vunpack.c.h.b16 %v2909
  %v2996 = vunpack.c.l.b16 %v2910
  %v2997 = vunpack.c.h.b16 %v2910
  %v2998 = vunpack.c.l.b16 %v2911
  %v2999 = vunpack.c.h.b16 %v2911
  %v3000 = vunpack.c.l.b16 %v2912
  %v3001 = vunpack.c.h.b16 %v2912
  %v3002 = vunpack.c.l.b16 %v2913
  %v3003 = vunpack.c.h.b16 %v2913
  %v3004 = vunpack.c.l.b16 %v2914
  %v3005 = vunpack.c.h.b16 %v2914
  %v3006 = vunpack.c.l.b16 %v2915
  %v3007 = vunpack.c.h.b16 %v2915
  %v3008 = vunpack.c.l.b16 %v2916
  %v3009 = vunpack.c.h.b16 %v2916
  %v3010 = vunpack.c.l.b16 %v2917
  %v3011 = vunpack.c.h.b16 %v2917
  %v3012 = vunpack.c.l.b16 %v2918
  %v3013 = vunpack.c.h.b16 %v2918
  %v3014 = vunpack.c.l.b16 %v2919
  %v3015 = vunpack.c.h.b16 %v2919
  %v3016 = vpack.c.b16 %v2956, %v2952
  %v3017 = vpack.c.b16 %v2957, %v2953
  %v3018 = vpack.c.b16 %v2958, %v2954
  %v3019 = vpack.c.b16 %v2959, %v2955
  %v3020 = vpack.c.b16 %v2964, %v2960
  %v3021 = vpack.c.b16 %v2965, %v2961
  %v3022 = vpack.c.b16 %v2966, %v2962
  %v3023 = vpack.c.b16 %v2967, %v2963
  %v3024 = vpack.c.b16 %v2972, %v2968
  %v3025 = vpack.c.b16 %v2973, %v2969
  %v3026 = vpack.c.b16 %v2974, %v2970
  %v3027 = vpack.c.b16 %v2975, %v2971
  %v3028 = vpack.c.b16 %v2980, %v2976
  %v3029 = vpack.c.b16 %v2981, %v2977
  %v3030 = vpack.c.b16 %v2982, %v2978
  %v3031 = vpack.c.b16 %v2983, %v2979
  %v3032 = vpack.c.b16 %v2988, %v2984
  %v3033 = vpack.c.b16 %v2989, %v2985
  %v3034 = vpack.c.b16 %v2990, %v2986
  %v3035 = vpack.c.b16 %v2991, %v2987
  %v3036 = vpack.c.b16 %v2996, %v2992
  %v3037 = vpack.c.b16 %v2997, %v2993
  %v3038 = vpack.c.b16 %v2998, %v2994
  %v3039 = vpack.c.b16 %v2999, %v2995
  %v3040 = vpack.c.b16 %v3004, %v3000
  %v3041 = vpack.c.b16 %v3005, %v3001
  %v3042 = vpack.c.b16 %v3006, %v3002
  %v3043 = vpack.c.b16 %v3007, %v3003
  %v3044 = vpack.c.b16 %v3012, %v3008
  %v3045 = vpack.c.b16 %v3013, %v3009
  %v3046 = vpack.c.b16 %v3014, %v3010
  %v3047 = vpack.c.b16 %v3015, %v3011
  %3080 = vmatprep.subr.bf16.mxu0 %v3017
  %3081 = vmatpush1.bf16.msra.mxu0 %v3016
  %3082 = vmatprep.subr.bf16.mxu0 %v3021
  %3083 = vmatpush1.bf16.msra.mxu0 %v3020
  %3084 = vmatprep.subr.bf16.mxu0 %v3025
  %3085 = vmatpush1.bf16.msra.mxu0 %v3024
  %3086 = vmatprep.subr.bf16.mxu0 %v3029
  %3087 = vmatpush1.bf16.msra.mxu0 %v3028
  %3088 = vmatprep.subr.bf16.mxu0 %v3033
  %3089 = vmatpush1.bf16.msra.mxu0 %v3032
  %3090 = vmatprep.subr.bf16.mxu0 %v3037
  %3091 = vmatpush1.bf16.msra.mxu0 %v3036
  %3092 = vmatprep.subr.bf16.mxu0 %v3041
  %3093 = vmatpush1.bf16.msra.mxu0 %v3040
  %3094 = vmatprep.subr.bf16.mxu0 %v3045
  %3095 = vmatpush1.bf16.msra.mxu0 %v3044
  %3096 = vmatprep.subr.bf16.mxu0 0
  %3097 = vmatpush1.bf16.msra.mxu0 0
  %3098 = vmatprep.subr.bf16.mxu0 0
  %3099 = vmatpush1.bf16.msra.mxu0 0
  %3100 = vmatprep.subr.bf16.mxu0 0
  %3101 = vmatpush1.bf16.msra.mxu0 0
  %3102 = vmatprep.subr.bf16.mxu0 0
  %3103 = vmatpush1.bf16.msra.mxu0 0
  %3104 = vmatprep.subr.bf16.mxu0 0
  %3105 = vmatpush1.bf16.msra.mxu0 0
  %3106 = vmatprep.subr.bf16.mxu0 0
  %3107 = vmatpush1.bf16.msra.mxu0 0
  %3108 = vmatprep.subr.bf16.mxu0 0
  %3109 = vmatpush1.bf16.msra.mxu0 0
  %3110 = vmatprep.subr.bf16.mxu0 0
  %3111 = vmatpush1.bf16.msra.mxu0 0
  %3112 = vmatprep.mubr.bf16.mxu0 0
  %3113 = vmatmul.mubr.bf16.gmra.mrb[0].mxu0 %v2569
  %v3114 = vpop.f32.mrb[0].mxu0
  %v3115 = vadd.f32 0.0, %v3114
  %v3116 = vpop.f32.mrb[0].mxu0
  %v3117 = vadd.f32 0.0, %v3116
  %v3118 = vpop.f32.mrb[0].mxu0
  %v3119 = vpop.f32.mrb[0].mxu0
  %3120 = vdwg.mxu0
  %3121 = vmatprep.subr.bf16.mxu0 %v3019
  %3122 = vmatpush1.bf16.msra.mxu0 %v3018
  %3123 = vmatprep.subr.bf16.mxu0 %v3023
  %3124 = vmatpush1.bf16.msra.mxu0 %v3022
  %3125 = vmatprep.subr.bf16.mxu0 %v3027
  %3126 = vmatpush1.bf16.msra.mxu0 %v3026
  %3127 = vmatprep.subr.bf16.mxu0 %v3031
  %3128 = vmatpush1.bf16.msra.mxu0 %v3030
  %3129 = vmatprep.subr.bf16.mxu0 %v3035
  %3130 = vmatpush1.bf16.msra.mxu0 %v3034
  %3131 = vmatprep.subr.bf16.mxu0 %v3039
  %3132 = vmatpush1.bf16.msra.mxu0 %v3038
  %3133 = vmatprep.subr.bf16.mxu0 %v3043
  %3134 = vmatpush1.bf16.msra.mxu0 %v3042
  %3135 = vmatprep.subr.bf16.mxu0 %v3047
  %3136 = vmatpush1.bf16.msra.mxu0 %v3046
  %3137 = vmatprep.subr.bf16.mxu0 0
  %3138 = vmatpush1.bf16.msra.mxu0 0
  %3139 = vmatprep.subr.bf16.mxu0 0
  %3140 = vmatpush1.bf16.msra.mxu0 0
  %3141 = vmatprep.subr.bf16.mxu0 0
  %3142 = vmatpush1.bf16.msra.mxu0 0
  %3143 = vmatprep.subr.bf16.mxu0 0
  %3144 = vmatpush1.bf16.msra.mxu0 0
  %3145 = vmatprep.subr.bf16.mxu0 0
  %3146 = vmatpush1.bf16.msra.mxu0 0
  %3147 = vmatprep.subr.bf16.mxu0 0
  %3148 = vmatpush1.bf16.msra.mxu0 0
  %3149 = vmatprep.subr.bf16.mxu0 0
  %3150 = vmatpush1.bf16.msra.mxu0 0
  %3151 = vmatprep.subr.bf16.mxu0 0
  %3152 = vmatpush1.bf16.msra.mxu0 0
  %3153 = vmatprep.mubr.bf16.mxu0 0
  %3154 = vmatmul.mubr.bf16.gmra.mrb[0].mxu0 %v2569
  %v3155 = vpop.f32.mrb[0].mxu0
  %v3156 = vadd.f32 0.0, %v3155
  %v3157 = vpop.f32.mrb[0].mxu0
  %v3158 = vadd.f32 0.0, %v3157
  %v3159 = vpop.f32.mrb[0].mxu0
  %v3160 = vpop.f32.mrb[0].mxu0
  %3161 = vdwg.mxu0
  %v3162 = vadd.f32 %v2884, %v3115
  %v3163 = vadd.f32 %v2885, %v3117
  %v3164 = vadd.f32 %v2886, %v3156
  %v3165 = vadd.f32 %v2887, %v3158
  %v3166 = vxor.u32 %v3162, 2147483648
  %v3167 = vmul.f32 %v3166, 1.442695
  %v3168 = vpow.pop %v3167
  %v3169 = vadd.f32 %v3168, 1.0
  %v3170 = vrcp.pop %v3169
  %v3171 = vmul.f32 1.0, %v3170
  %v3172 = vxor.u32 %v3163, 2147483648
  %v3173 = vmul.f32 %v3172, 1.442695
  %v3174 = vpow.pop %v3173
  %v3175 = vadd.f32 %v3174, 1.0
  %v3176 = vrcp.pop %v3175
  %v3177 = vmul.f32 1.0, %v3176
  %v3178 = vtanh.pop %v3164
  %v3179 = vxor.u32 %v3165, 2147483648
  %v3180 = vmul.f32 %v3179, 1.442695
  %v3181 = vpow.pop %v3180
  %v3182 = vadd.f32 %v3181, 1.0
  %v3183 = vrcp.pop %v3182
  %v3184 = vmul.f32 1.0, %v3183
  %v3185 = vmul.f32 %v3177, %v2563
  %v3186 = vmul.f32 %v3171, %v3178
  %v3187 = vadd.f32 %v3185, %v3186
  %v3188 = vtanh.pop %v3187
  %v3189 = vmul.f32 %v3184, %v3188
  %v3190 = vpack.c.bf16 %v2880, %v2880
  %s3191 = scalar_lea.vmem %s4, 16
  %3192 = vst [vmem:[%s3191] sm:$0xf] %v3190
  %v3193 = vpack.c.bf16 %v3189, %v3189
  %s3194 = scalar_lea.vmem %s60, 12
  %3195 = vst [vmem:[%s3194] sm:$0xf] %v3193
  %s3196 = scalar_lea.vmem %s0, 80
  %v3197 = vld [vmem:[%s3196] sm:$0xff]
  %v3198 = vld [vmem:[%s3196 + $0x8] sm:$0xff]
  %v3199 = vunpack.c.l.bf16 %v3197
  %v3200 = vunpack.c.h.bf16 %v3197
  %v3201 = vunpack.c.l.bf16 %v3198
  %v3202 = vunpack.c.h.bf16 %v3198
  %v3203 = vld [vmem:[%s2] sm:$0xff]
  %v3204 = vld [vmem:[%s2 + $0x8] sm:$0xff]
  %v3205 = vld [vmem:[%s2 + $0x10] sm:$0xff]
  %v3206 = vld [vmem:[%s2 + $0x18] sm:$0xff]
  %v3207 = vld [vmem:[%s2 + $0x20] sm:$0xff]
  %v3208 = vld [vmem:[%s2 + $0x28] sm:$0xff]
  %v3209 = vld [vmem:[%s2 + $0x30] sm:$0xff]
  %v3210 = vld [vmem:[%s2 + $0x38] sm:$0xff]
  %v3211 = vld [vmem:[%s2 + $0x40] sm:$0xff]
  %v3212 = vld [vmem:[%s2 + $0x48] sm:$0xff]
  %v3213 = vld [vmem:[%s2 + $0x50] sm:$0xff]
  %v3214 = vld [vmem:[%s2 + $0x58] sm:$0xff]
  %v3215 = vld [vmem:[%s2 + $0x60] sm:$0xff]
  %v3216 = vld [vmem:[%s2 + $0x68] sm:$0xff]
  %v3217 = vld [vmem:[%s2 + $0x70] sm:$0xff]
  %v3218 = vld [vmem:[%s2 + $0x78] sm:$0xff]
  %v3219 = vld [vmem:[%s2 + $0x80] sm:$0xff]
  %v3220 = vld [vmem:[%s2 + $0x88] sm:$0xff]
  %v3221 = vld [vmem:[%s2 + $0x90] sm:$0xff]
  %v3222 = vld [vmem:[%s2 + $0x98] sm:$0xff]
  %v3223 = vld [vmem:[%s2 + $0xa0] sm:$0xff]
  %v3224 = vld [vmem:[%s2 + $0xa8] sm:$0xff]
  %v3225 = vld [vmem:[%s2 + $0xb0] sm:$0xff]
  %v3226 = vld [vmem:[%s2 + $0xb8] sm:$0xff]
  %v3227 = vld [vmem:[%s2 + $0xc0] sm:$0xff]
  %v3228 = vld [vmem:[%s2 + $0xc8] sm:$0xff]
  %v3229 = vld [vmem:[%s2 + $0xd0] sm:$0xff]
  %v3230 = vld [vmem:[%s2 + $0xd8] sm:$0xff]
  %v3231 = vld [vmem:[%s2 + $0xe0] sm:$0xff]
  %v3232 = vld [vmem:[%s2 + $0xe8] sm:$0xff]
  %v3233 = vld [vmem:[%s2 + $0xf0] sm:$0xff]
  %v3234 = vld [vmem:[%s2 + $0xf8] sm:$0xff]
  %v3267 = vunpack.c.l.b16 %v3203
  %v3268 = vunpack.c.h.b16 %v3203
  %v3269 = vunpack.c.l.b16 %v3204
  %v3270 = vunpack.c.h.b16 %v3204
  %v3271 = vunpack.c.l.b16 %v3205
  %v3272 = vunpack.c.h.b16 %v3205
  %v3273 = vunpack.c.l.b16 %v3206
  %v3274 = vunpack.c.h.b16 %v3206
  %v3275 = vunpack.c.l.b16 %v3207
  %v3276 = vunpack.c.h.b16 %v3207
  %v3277 = vunpack.c.l.b16 %v3208
  %v3278 = vunpack.c.h.b16 %v3208
  %v3279 = vunpack.c.l.b16 %v3209
  %v3280 = vunpack.c.h.b16 %v3209
  %v3281 = vunpack.c.l.b16 %v3210
  %v3282 = vunpack.c.h.b16 %v3210
  %v3283 = vunpack.c.l.b16 %v3211
  %v3284 = vunpack.c.h.b16 %v3211
  %v3285 = vunpack.c.l.b16 %v3212
  %v3286 = vunpack.c.h.b16 %v3212
  %v3287 = vunpack.c.l.b16 %v3213
  %v3288 = vunpack.c.h.b16 %v3213
  %v3289 = vunpack.c.l.b16 %v3214
  %v3290 = vunpack.c.h.b16 %v3214
  %v3291 = vunpack.c.l.b16 %v3215
  %v3292 = vunpack.c.h.b16 %v3215
  %v3293 = vunpack.c.l.b16 %v3216
  %v3294 = vunpack.c.h.b16 %v3216
  %v3295 = vunpack.c.l.b16 %v3217
  %v3296 = vunpack.c.h.b16 %v3217
  %v3297 = vunpack.c.l.b16 %v3218
  %v3298 = vunpack.c.h.b16 %v3218
  %v3299 = vunpack.c.l.b16 %v3219
  %v3300 = vunpack.c.h.b16 %v3219
  %v3301 = vunpack.c.l.b16 %v3220
  %v3302 = vunpack.c.h.b16 %v3220
  %v3303 = vunpack.c.l.b16 %v3221
  %v3304 = vunpack.c.h.b16 %v3221
  %v3305 = vunpack.c.l.b16 %v3222
  %v3306 = vunpack.c.h.b16 %v3222
  %v3307 = vunpack.c.l.b16 %v3223
  %v3308 = vunpack.c.h.b16 %v3223
  %v3309 = vunpack.c.l.b16 %v3224
  %v3310 = vunpack.c.h.b16 %v3224
  %v3311 = vunpack.c.l.b16 %v3225
  %v3312 = vunpack.c.h.b16 %v3225
  %v3313 = vunpack.c.l.b16 %v3226
  %v3314 = vunpack.c.h.b16 %v3226
  %v3315 = vunpack.c.l.b16 %v3227
  %v3316 = vunpack.c.h.b16 %v3227
  %v3317 = vunpack.c.l.b16 %v3228
  %v3318 = vunpack.c.h.b16 %v3228
  %v3319 = vunpack.c.l.b16 %v3229
  %v3320 = vunpack.c.h.b16 %v3229
  %v3321 = vunpack.c.l.b16 %v3230
  %v3322 = vunpack.c.h.b16 %v3230
  %v3323 = vunpack.c.l.b16 %v3231
  %v3324 = vunpack.c.h.b16 %v3231
  %v3325 = vunpack.c.l.b16 %v3232
  %v3326 = vunpack.c.h.b16 %v3232
  %v3327 = vunpack.c.l.b16 %v3233
  %v3328 = vunpack.c.h.b16 %v3233
  %v3329 = vunpack.c.l.b16 %v3234
  %v3330 = vunpack.c.h.b16 %v3234
  %v3331 = vpack.c.b16 %v3271, %v3267
  %v3332 = vpack.c.b16 %v3272, %v3268
  %v3333 = vpack.c.b16 %v3273, %v3269
  %v3334 = vpack.c.b16 %v3274, %v3270
  %v3335 = vpack.c.b16 %v3279, %v3275
  %v3336 = vpack.c.b16 %v3280, %v3276
  %v3337 = vpack.c.b16 %v3281, %v3277
  %v3338 = vpack.c.b16 %v3282, %v3278
  %v3339 = vpack.c.b16 %v3287, %v3283
  %v3340 = vpack.c.b16 %v3288, %v3284
  %v3341 = vpack.c.b16 %v3289, %v3285
  %v3342 = vpack.c.b16 %v3290, %v3286
  %v3343 = vpack.c.b16 %v3295, %v3291
  %v3344 = vpack.c.b16 %v3296, %v3292
  %v3345 = vpack.c.b16 %v3297, %v3293
  %v3346 = vpack.c.b16 %v3298, %v3294
  %v3347 = vpack.c.b16 %v3303, %v3299
  %v3348 = vpack.c.b16 %v3304, %v3300
  %v3349 = vpack.c.b16 %v3305, %v3301
  %v3350 = vpack.c.b16 %v3306, %v3302
  %v3351 = vpack.c.b16 %v3311, %v3307
  %v3352 = vpack.c.b16 %v3312, %v3308
  %v3353 = vpack.c.b16 %v3313, %v3309
  %v3354 = vpack.c.b16 %v3314, %v3310
  %v3355 = vpack.c.b16 %v3319, %v3315
  %v3356 = vpack.c.b16 %v3320, %v3316
  %v3357 = vpack.c.b16 %v3321, %v3317
  %v3358 = vpack.c.b16 %v3322, %v3318
  %v3359 = vpack.c.b16 %v3327, %v3323
  %v3360 = vpack.c.b16 %v3328, %v3324
  %v3361 = vpack.c.b16 %v3329, %v3325
  %v3362 = vpack.c.b16 %v3330, %v3326
  %3395 = vmatprep.subr.bf16.mxu0 %v3332
  %3396 = vmatpush1.bf16.msra.mxu0 %v3331
  %3397 = vmatprep.subr.bf16.mxu0 %v3336
  %3398 = vmatpush1.bf16.msra.mxu0 %v3335
  %3399 = vmatprep.subr.bf16.mxu0 %v3340
  %3400 = vmatpush1.bf16.msra.mxu0 %v3339
  %3401 = vmatprep.subr.bf16.mxu0 %v3344
  %3402 = vmatpush1.bf16.msra.mxu0 %v3343
  %3403 = vmatprep.subr.bf16.mxu0 %v3348
  %3404 = vmatpush1.bf16.msra.mxu0 %v3347
  %3405 = vmatprep.subr.bf16.mxu0 %v3352
  %3406 = vmatpush1.bf16.msra.mxu0 %v3351
  %3407 = vmatprep.subr.bf16.mxu0 %v3356
  %3408 = vmatpush1.bf16.msra.mxu0 %v3355
  %3409 = vmatprep.subr.bf16.mxu0 %v3360
  %3410 = vmatpush1.bf16.msra.mxu0 %v3359
  %3411 = vmatprep.subr.bf16.mxu0 0
  %3412 = vmatpush1.bf16.msra.mxu0 0
  %3413 = vmatprep.subr.bf16.mxu0 0
  %3414 = vmatpush1.bf16.msra.mxu0 0
  %3415 = vmatprep.subr.bf16.mxu0 0
  %3416 = vmatpush1.bf16.msra.mxu0 0
  %3417 = vmatprep.subr.bf16.mxu0 0
  %3418 = vmatpush1.bf16.msra.mxu0 0
  %3419 = vmatprep.subr.bf16.mxu0 0
  %3420 = vmatpush1.bf16.msra.mxu0 0
  %3421 = vmatprep.subr.bf16.mxu0 0
  %3422 = vmatpush1.bf16.msra.mxu0 0
  %3423 = vmatprep.subr.bf16.mxu0 0
  %3424 = vmatpush1.bf16.msra.mxu0 0
  %3425 = vmatprep.subr.bf16.mxu0 0
  %3426 = vmatpush1.bf16.msra.mxu0 0
  %3427 = vmatprep.mubr.bf16.mxu0 0
  %3428 = vmatmul.mubr.bf16.gmra.mrb[0].mxu0 %v3190
  %v3429 = vpop.f32.mrb[0].mxu0
  %v3430 = vadd.f32 0.0, %v3429
  %v3431 = vpop.f32.mrb[0].mxu0
  %v3432 = vadd.f32 0.0, %v3431
  %v3433 = vpop.f32.mrb[0].mxu0
  %v3434 = vpop.f32.mrb[0].mxu0
  %3435 = vdwg.mxu0
  %3436 = vmatprep.subr.bf16.mxu0 %v3334
  %3437 = vmatpush1.bf16.msra.mxu0 %v3333
  %3438 = vmatprep.subr.bf16.mxu0 %v3338
  %3439 = vmatpush1.bf16.msra.mxu0 %v3337
  %3440 = vmatprep.subr.bf16.mxu0 %v3342
  %3441 = vmatpush1.bf16.msra.mxu0 %v3341
  %3442 = vmatprep.subr.bf16.mxu0 %v3346
  %3443 = vmatpush1.bf16.msra.mxu0 %v3345
  %3444 = vmatprep.subr.bf16.mxu0 %v3350
  %3445 = vmatpush1.bf16.msra.mxu0 %v3349
  %3446 = vmatprep.subr.bf16.mxu0 %v3354
  %3447 = vmatpush1.bf16.msra.mxu0 %v3353
  %3448 = vmatprep.subr.bf16.mxu0 %v3358
  %3449 = vmatpush1.bf16.msra.mxu0 %v3357
  %3450 = vmatprep.subr.bf16.mxu0 %v3362
  %3451 = vmatpush1.bf16.msra.mxu0 %v3361
  %3452 = vmatprep.subr.bf16.mxu0 0
  %3453 = vmatpush1.bf16.msra.mxu0 0
  %3454 = vmatprep.subr.bf16.mxu0 0
  %3455 = vmatpush1.bf16.msra.mxu0 0
  %3456 = vmatprep.subr.bf16.mxu0 0
  %3457 = vmatpush1.bf16.msra.mxu0 0
  %3458 = vmatprep.subr.bf16.mxu0 0
  %3459 = vmatpush1.bf16.msra.mxu0 0
  %3460 = vmatprep.subr.bf16.mxu0 0
  %3461 = vmatpush1.bf16.msra.mxu0 0
  %3462 = vmatprep.subr.bf16.mxu0 0
  %3463 = vmatpush1.bf16.msra.mxu0 0
  %3464 = vmatprep.subr.bf16.mxu0 0
  %3465 = vmatpush1.bf16.msra.mxu0 0
  %3466 = vmatprep.subr.bf16.mxu0 0
  %3467 = vmatpush1.bf16.msra.mxu0 0
  %3468 = vmatprep.mubr.bf16.mxu0 0
  %3469 = vmatmul.mubr.bf16.gmra.mrb[0].mxu0 %v3190
  %v3470 = vpop.f32.mrb[0].mxu0
  %v3471 = vadd.f32 0.0, %v3470
  %v3472 = vpop.f32.mrb[0].mxu0
  %v3473 = vadd.f32 0.0, %v3472
  %v3474 = vpop.f32.mrb[0].mxu0
  %v3475 = vpop.f32.mrb[0].mxu0
  %3476 = vdwg.mxu0
  %v3477 = vadd.f32 %v3199, %v3430
  %v3478 = vadd.f32 %v3200, %v3432
  %v3479 = vadd.f32 %v3201, %v3471
  %v3480 = vadd.f32 %v3202, %v3473
  %v3481 = vxor.u32 %v3477, 2147483648
  %v3482 = vmul.f32 %v3481, 1.442695
  %v3483 = vpow.pop %v3482
  %v3484 = vadd.f32 %v3483, 1.0
  %v3485 = vrcp.pop %v3484
  %v3486 = vmul.f32 1.0, %v3485
  %v3487 = vxor.u32 %v3478, 2147483648
  %v3488 = vmul.f32 %v3487, 1.442695
  %v3489 = vpow.pop %v3488
  %v3490 = vadd.f32 %v3489, 1.0
  %v3491 = vrcp.pop %v3490
  %v3492 = vmul.f32 1.0, %v3491
  %v3493 = vtanh.pop %v3479
  %v3494 = vxor.u32 %v3480, 2147483648
  %v3495 = vmul.f32 %v3494, 1.442695
  %v3496 = vpow.pop %v3495
  %v3497 = vadd.f32 %v3496, 1.0
  %v3498 = vrcp.pop %v3497
  %v3499 = vmul.f32 1.0, %v3498
  %v3500 = vmul.f32 %v3492, %v2878
  %v3501 = vmul.f32 %v3486, %v3493
  %v3502 = vadd.f32 %v3500, %v3501
  %v3503 = vtanh.pop %v3502
  %v3504 = vmul.f32 %v3499, %v3503
  %s3505 = scalar_lea.vmem %s52, 32
  %v3506 = vld [vmem:[%s3505] sm:$0xff]
  %v3507 = vld [vmem:[%s3505 + $0x8] sm:$0xff]
  %v3508 = vunpack.c.l.bf16 %v3506
  %v3509 = vunpack.c.h.bf16 %v3506
  %v3510 = vunpack.c.l.bf16 %v3507
  %v3511 = vunpack.c.h.bf16 %v3507
  %v3512 = vld [vmem:[%s3] sm:$0xff]
  %v3513 = vld [vmem:[%s3 + $0x8] sm:$0xff]
  %v3514 = vld [vmem:[%s3 + $0x10] sm:$0xff]
  %v3515 = vld [vmem:[%s3 + $0x18] sm:$0xff]
  %v3516 = vld [vmem:[%s3 + $0x20] sm:$0xff]
  %v3517 = vld [vmem:[%s3 + $0x28] sm:$0xff]
  %v3518 = vld [vmem:[%s3 + $0x30] sm:$0xff]
  %v3519 = vld [vmem:[%s3 + $0x38] sm:$0xff]
  %v3520 = vld [vmem:[%s3 + $0x40] sm:$0xff]
  %v3521 = vld [vmem:[%s3 + $0x48] sm:$0xff]
  %v3522 = vld [vmem:[%s3 + $0x50] sm:$0xff]
  %v3523 = vld [vmem:[%s3 + $0x58] sm:$0xff]
  %v3524 = vld [vmem:[%s3 + $0x60] sm:$0xff]
  %v3525 = vld [vmem:[%s3 + $0x68] sm:$0xff]
  %v3526 = vld [vmem:[%s3 + $0x70] sm:$0xff]
  %v3527 = vld [vmem:[%s3 + $0x78] sm:$0xff]
  %v3528 = vld [vmem:[%s3 + $0x80] sm:$0xff]
  %v3529 = vld [vmem:[%s3 + $0x88] sm:$0xff]
  %v3530 = vld [vmem:[%s3 + $0x90] sm:$0xff]
  %v3531 = vld [vmem:[%s3 + $0x98] sm:$0xff]
  %v3532 = vld [vmem:[%s3 + $0xa0] sm:$0xff]
  %v3533 = vld [vmem:[%s3 + $0xa8] sm:$0xff]
  %v3534 = vld [vmem:[%s3 + $0xb0] sm:$0xff]
  %v3535 = vld [vmem:[%s3 + $0xb8] sm:$0xff]
  %v3536 = vld [vmem:[%s3 + $0xc0] sm:$0xff]
  %v3537 = vld [vmem:[%s3 + $0xc8] sm:$0xff]
  %v3538 = vld [vmem:[%s3 + $0xd0] sm:$0xff]
  %v3539 = vld [vmem:[%s3 + $0xd8] sm:$0xff]
  %v3540 = vld [vmem:[%s3 + $0xe0] sm:$0xff]
  %v3541 = vld [vmem:[%s3 + $0xe8] sm:$0xff]
  %v3542 = vld [vmem:[%s3 + $0xf0] sm:$0xff]
  %v3543 = vld [vmem:[%s3 + $0xf8] sm:$0xff]
  %v3576 = vunpack.c.l.b16 %v3512
  %v3577 = vunpack.c.h.b16 %v3512
  %v3578 = vunpack.c.l.b16 %v3513
  %v3579 = vunpack.c.h.b16 %v3513
  %v3580 = vunpack.c.l.b16 %v3514
  %v3581 = vunpack.c.h.b16 %v3514
  %v3582 = vunpack.c.l.b16 %v3515
  %v3583 = vunpack.c.h.b16 %v3515
  %v3584 = vunpack.c.l.b16 %v3516
  %v3585 = vunpack.c.h.b16 %v3516
  %v3586 = vunpack.c.l.b16 %v3517
  %v3587 = vunpack.c.h.b16 %v3517
  %v3588 = vunpack.c.l.b16 %v3518
  %v3589 = vunpack.c.h.b16 %v3518
  %v3590 = vunpack.c.l.b16 %v3519
  %v3591 = vunpack.c.h.b16 %v3519
  %v3592 = vunpack.c.l.b16 %v3520
  %v3593 = vunpack.c.h.b16 %v3520
  %v3594 = vunpack.c.l.b16 %v3521
  %v3595 = vunpack.c.h.b16 %v3521
  %v3596 = vunpack.c.l.b16 %v3522
  %v3597 = vunpack.c.h.b16 %v3522
  %v3598 = vunpack.c.l.b16 %v3523
  %v3599 = vunpack.c.h.b16 %v3523
  %v3600 = vunpack.c.l.b16 %v3524
  %v3601 = vunpack.c.h.b16 %v3524
  %v3602 = vunpack.c.l.b16 %v3525
  %v3603 = vunpack.c.h.b16 %v3525
  %v3604 = vunpack.c.l.b16 %v3526
  %v3605 = vunpack.c.h.b16 %v3526
  %v3606 = vunpack.c.l.b16 %v3527
  %v3607 = vunpack.c.h.b16 %v3527
  %v3608 = vunpack.c.l.b16 %v3528
  %v3609 = vunpack.c.h.b16 %v3528
  %v3610 = vunpack.c.l.b16 %v3529
  %v3611 = vunpack.c.h.b16 %v3529
  %v3612 = vunpack.c.l.b16 %v3530
  %v3613 = vunpack.c.h.b16 %v3530
  %v3614 = vunpack.c.l.b16 %v3531
  %v3615 = vunpack.c.h.b16 %v3531
  %v3616 = vunpack.c.l.b16 %v3532
  %v3617 = vunpack.c.h.b16 %v3532
  %v3618 = vunpack.c.l.b16 %v3533
  %v3619 = vunpack.c.h.b16 %v3533
  %v3620 = vunpack.c.l.b16 %v3534
  %v3621 = vunpack.c.h.b16 %v3534
  %v3622 = vunpack.c.l.b16 %v3535
  %v3623 = vunpack.c.h.b16 %v3535
  %v3624 = vunpack.c.l.b16 %v3536
  %v3625 = vunpack.c.h.b16 %v3536
  %v3626 = vunpack.c.l.b16 %v3537
  %v3627 = vunpack.c.h.b16 %v3537
  %v3628 = vunpack.c.l.b16 %v3538
  %v3629 = vunpack.c.h.b16 %v3538
  %v3630 = vunpack.c.l.b16 %v3539
  %v3631 = vunpack.c.h.b16 %v3539
  %v3632 = vunpack.c.l.b16 %v3540
  %v3633 = vunpack.c.h.b16 %v3540
  %v3634 = vunpack.c.l.b16 %v3541
  %v3635 = vunpack.c.h.b16 %v3541
  %v3636 = vunpack.c.l.b16 %v3542
  %v3637 = vunpack.c.h.b16 %v3542
  %v3638 = vunpack.c.l.b16 %v3543
  %v3639 = vunpack.c.h.b16 %v3543
  %v3640 = vpack.c.b16 %v3580, %v3576
  %v3641 = vpack.c.b16 %v3581, %v3577
  %v3642 = vpack.c.b16 %v3582, %v3578
  %v3643 = vpack.c.b16 %v3583, %v3579
  %v3644 = vpack.c.b16 %v3588, %v3584
  %v3645 = vpack.c.b16 %v3589, %v3585
  %v3646 = vpack.c.b16 %v3590, %v3586
  %v3647 = vpack.c.b16 %v3591, %v3587
  %v3648 = vpack.c.b16 %v3596, %v3592
  %v3649 = vpack.c.b16 %v3597, %v3593
  %v3650 = vpack.c.b16 %v3598, %v3594
  %v3651 = vpack.c.b16 %v3599, %v3595
  %v3652 = vpack.c.b16 %v3604, %v3600
  %v3653 = vpack.c.b16 %v3605, %v3601
  %v3654 = vpack.c.b16 %v3606, %v3602
  %v3655 = vpack.c.b16 %v3607, %v3603
  %v3656 = vpack.c.b16 %v3612, %v3608
  %v3657 = vpack.c.b16 %v3613, %v3609
  %v3658 = vpack.c.b16 %v3614, %v3610
  %v3659 = vpack.c.b16 %v3615, %v3611
  %v3660 = vpack.c.b16 %v3620, %v3616
  %v3661 = vpack.c.b16 %v3621, %v3617
  %v3662 = vpack.c.b16 %v3622, %v3618
  %v3663 = vpack.c.b16 %v3623, %v3619
  %v3664 = vpack.c.b16 %v3628, %v3624
  %v3665 = vpack.c.b16 %v3629, %v3625
  %v3666 = vpack.c.b16 %v3630, %v3626
  %v3667 = vpack.c.b16 %v3631, %v3627
  %v3668 = vpack.c.b16 %v3636, %v3632
  %v3669 = vpack.c.b16 %v3637, %v3633
  %v3670 = vpack.c.b16 %v3638, %v3634
  %v3671 = vpack.c.b16 %v3639, %v3635
  %3704 = vmatprep.subr.bf16.mxu0 %v3641
  %3705 = vmatpush1.bf16.msra.mxu0 %v3640
  %3706 = vmatprep.subr.bf16.mxu0 %v3645
  %3707 = vmatpush1.bf16.msra.mxu0 %v3644
  %3708 = vmatprep.subr.bf16.mxu0 %v3649
  %3709 = vmatpush1.bf16.msra.mxu0 %v3648
  %3710 = vmatprep.subr.bf16.mxu0 %v3653
  %3711 = vmatpush1.bf16.msra.mxu0 %v3652
  %3712 = vmatprep.subr.bf16.mxu0 %v3657
  %3713 = vmatpush1.bf16.msra.mxu0 %v3656
  %3714 = vmatprep.subr.bf16.mxu0 %v3661
  %3715 = vmatpush1.bf16.msra.mxu0 %v3660
  %3716 = vmatprep.subr.bf16.mxu0 %v3665
  %3717 = vmatpush1.bf16.msra.mxu0 %v3664
  %3718 = vmatprep.subr.bf16.mxu0 %v3669
  %3719 = vmatpush1.bf16.msra.mxu0 %v3668
  %3720 = vmatprep.subr.bf16.mxu0 0
  %3721 = vmatpush1.bf16.msra.mxu0 0
  %3722 = vmatprep.subr.bf16.mxu0 0
  %3723 = vmatpush1.bf16.msra.mxu0 0
  %3724 = vmatprep.subr.bf16.mxu0 0
  %3725 = vmatpush1.bf16.msra.mxu0 0
  %3726 = vmatprep.subr.bf16.mxu0 0
  %3727 = vmatpush1.bf16.msra.mxu0 0
  %3728 = vmatprep.subr.bf16.mxu0 0
  %3729 = vmatpush1.bf16.msra.mxu0 0
  %3730 = vmatprep.subr.bf16.mxu0 0
  %3731 = vmatpush1.bf16.msra.mxu0 0
  %3732 = vmatprep.subr.bf16.mxu0 0
  %3733 = vmatpush1.bf16.msra.mxu0 0
  %3734 = vmatprep.subr.bf16.mxu0 0
  %3735 = vmatpush1.bf16.msra.mxu0 0
  %3736 = vmatprep.mubr.bf16.mxu0 0
  %3737 = vmatmul.mubr.bf16.gmra.mrb[0].mxu0 %v3193
  %v3738 = vpop.f32.mrb[0].mxu0
  %v3739 = vadd.f32 0.0, %v3738
  %v3740 = vpop.f32.mrb[0].mxu0
  %v3741 = vadd.f32 0.0, %v3740
  %v3742 = vpop.f32.mrb[0].mxu0
  %v3743 = vpop.f32.mrb[0].mxu0
  %3744 = vdwg.mxu0
  %3745 = vmatprep.subr.bf16.mxu0 %v3643
  %3746 = vmatpush1.bf16.msra.mxu0 %v3642
  %3747 = vmatprep.subr.bf16.mxu0 %v3647
  %3748 = vmatpush1.bf16.msra.mxu0 %v3646
  %3749 = vmatprep.subr.bf16.mxu0 %v3651
  %3750 = vmatpush1.bf16.msra.mxu0 %v3650
  %3751 = vmatprep.subr.bf16.mxu0 %v3655
  %3752 = vmatpush1.bf16.msra.mxu0 %v3654
  %3753 = vmatprep.subr.bf16.mxu0 %v3659
  %3754 = vmatpush1.bf16.msra.mxu0 %v3658
  %3755 = vmatprep.subr.bf16.mxu0 %v3663
  %3756 = vmatpush1.bf16.msra.mxu0 %v3662
  %3757 = vmatprep.subr.bf16.mxu0 %v3667
  %3758 = vmatpush1.bf16.msra.mxu0 %v3666
  %3759 = vmatprep.subr.bf16.mxu0 %v3671
  %3760 = vmatpush1.bf16.msra.mxu0 %v3670
  %3761 = vmatprep.subr.bf16.mxu0 0
  %3762 = vmatpush1.bf16.msra.mxu0 0
  %3763 = vmatprep.subr.bf16.mxu0 0
  %3764 = vmatpush1.bf16.msra.mxu0 0
  %3765 = vmatprep.subr.bf16.mxu0 0
  %3766 = vmatpush1.bf16.msra.mxu0 0
  %3767 = vmatprep.subr.bf16.mxu0 0
  %3768 = vmatpush1.bf16.msra.mxu0 0
  %3769 = vmatprep.subr.bf16.mxu0 0
  %3770 = vmatpush1.bf16.msra.mxu0 0
  %3771 = vmatprep.subr.bf16.mxu0 0
  %3772 = vmatpush1.bf16.msra.mxu0 0
  %3773 = vmatprep.subr.bf16.mxu0 0
  %3774 = vmatpush1.bf16.msra.mxu0 0
  %3775 = vmatprep.subr.bf16.mxu0 0
  %3776 = vmatpush1.bf16.msra.mxu0 0
  %3777 = vmatprep.mubr.bf16.mxu0 0
  %3778 = vmatmul.mubr.bf16.gmra.mrb[0].mxu0 %v3193
  %v3779 = vpop.f32.mrb[0].mxu0
  %v3780 = vadd.f32 0.0, %v3779
  %v3781 = vpop.f32.mrb[0].mxu0
  %v3782 = vadd.f32 0.0, %v3781
  %v3783 = vpop.f32.mrb[0].mxu0
  %v3784 = vpop.f32.mrb[0].mxu0
  %3785 = vdwg.mxu0
  %v3786 = vadd.f32 %v3508, %v3739
  %v3787 = vadd.f32 %v3509, %v3741
  %v3788 = vadd.f32 %v3510, %v3780
  %v3789 = vadd.f32 %v3511, %v3782
  %v3790 = vxor.u32 %v3786, 2147483648
  %v3791 = vmul.f32 %v3790, 1.442695
  %v3792 = vpow.pop %v3791
  %v3793 = vadd.f32 %v3792, 1.0
  %v3794 = vrcp.pop %v3793
  %v3795 = vmul.f32 1.0, %v3794
  %v3796 = vxor.u32 %v3787, 2147483648
  %v3797 = vmul.f32 %v3796, 1.442695
  %v3798 = vpow.pop %v3797
  %v3799 = vadd.f32 %v3798, 1.0
  %v3800 = vrcp.pop %v3799
  %v3801 = vmul.f32 1.0, %v3800
  %v3802 = vtanh.pop %v3788
  %v3803 = vxor.u32 %v3789, 2147483648
  %v3804 = vmul.f32 %v3803, 1.442695
  %v3805 = vpow.pop %v3804
  %v3806 = vadd.f32 %v3805, 1.0
  %v3807 = vrcp.pop %v3806
  %v3808 = vmul.f32 1.0, %v3807
  %v3809 = vmul.f32 %v3801, %v3187
  %v3810 = vmul.f32 %v3795, %v3802
  %v3811 = vadd.f32 %v3809, %v3810
  %v3812 = vtanh.pop %v3811
  %v3813 = vmul.f32 %v3808, %v3812
  %v3814 = vpack.c.bf16 %v3504, %v3504
  %s3815 = scalar_lea.vmem %s4, 20
  %3816 = vst [vmem:[%s3815] sm:$0xf] %v3814
  %v3817 = vpack.c.bf16 %v3813, %v3813
  %s3818 = scalar_lea.vmem %s60, 8
  %3819 = vst [vmem:[%s3818] sm:$0xf] %v3817
  %s3820 = scalar_lea.vmem %s0, 96
  %v3821 = vld [vmem:[%s3820] sm:$0xff]
  %v3822 = vld [vmem:[%s3820 + $0x8] sm:$0xff]
  %v3823 = vunpack.c.l.bf16 %v3821
  %v3824 = vunpack.c.h.bf16 %v3821
  %v3825 = vunpack.c.l.bf16 %v3822
  %v3826 = vunpack.c.h.bf16 %v3822
  %v3827 = vld [vmem:[%s2] sm:$0xff]
  %v3828 = vld [vmem:[%s2 + $0x8] sm:$0xff]
  %v3829 = vld [vmem:[%s2 + $0x10] sm:$0xff]
  %v3830 = vld [vmem:[%s2 + $0x18] sm:$0xff]
  %v3831 = vld [vmem:[%s2 + $0x20] sm:$0xff]
  %v3832 = vld [vmem:[%s2 + $0x28] sm:$0xff]
  %v3833 = vld [vmem:[%s2 + $0x30] sm:$0xff]
  %v3834 = vld [vmem:[%s2 + $0x38] sm:$0xff]
  %v3835 = vld [vmem:[%s2 + $0x40] sm:$0xff]
  %v3836 = vld [vmem:[%s2 + $0x48] sm:$0xff]
  %v3837 = vld [vmem:[%s2 + $0x50] sm:$0xff]
  %v3838 = vld [vmem:[%s2 + $0x58] sm:$0xff]
  %v3839 = vld [vmem:[%s2 + $0x60] sm:$0xff]
  %v3840 = vld [vmem:[%s2 + $0x68] sm:$0xff]
  %v3841 = vld [vmem:[%s2 + $0x70] sm:$0xff]
  %v3842 = vld [vmem:[%s2 + $0x78] sm:$0xff]
  %v3843 = vld [vmem:[%s2 + $0x80] sm:$0xff]
  %v3844 = vld [vmem:[%s2 + $0x88] sm:$0xff]
  %v3845 = vld [vmem:[%s2 + $0x90] sm:$0xff]
  %v3846 = vld [vmem:[%s2 + $0x98] sm:$0xff]
  %v3847 = vld [vmem:[%s2 + $0xa0] sm:$0xff]
  %v3848 = vld [vmem:[%s2 + $0xa8] sm:$0xff]
  %v3849 = vld [vmem:[%s2 + $0xb0] sm:$0xff]
  %v3850 = vld [vmem:[%s2 + $0xb8] sm:$0xff]
  %v3851 = vld [vmem:[%s2 + $0xc0] sm:$0xff]
  %v3852 = vld [vmem:[%s2 + $0xc8] sm:$0xff]
  %v3853 = vld [vmem:[%s2 + $0xd0] sm:$0xff]
  %v3854 = vld [vmem:[%s2 + $0xd8] sm:$0xff]
  %v3855 = vld [vmem:[%s2 + $0xe0] sm:$0xff]
  %v3856 = vld [vmem:[%s2 + $0xe8] sm:$0xff]
  %v3857 = vld [vmem:[%s2 + $0xf0] sm:$0xff]
  %v3858 = vld [vmem:[%s2 + $0xf8] sm:$0xff]
  %v3891 = vunpack.c.l.b16 %v3827
  %v3892 = vunpack.c.h.b16 %v3827
  %v3893 = vunpack.c.l.b16 %v3828
  %v3894 = vunpack.c.h.b16 %v3828
  %v3895 = vunpack.c.l.b16 %v3829
  %v3896 = vunpack.c.h.b16 %v3829
  %v3897 = vunpack.c.l.b16 %v3830
  %v3898 = vunpack.c.h.b16 %v3830
  %v3899 = vunpack.c.l.b16 %v3831
  %v3900 = vunpack.c.h.b16 %v3831
  %v3901 = vunpack.c.l.b16 %v3832
  %v3902 = vunpack.c.h.b16 %v3832
  %v3903 = vunpack.c.l.b16 %v3833
  %v3904 = vunpack.c.h.b16 %v3833
  %v3905 = vunpack.c.l.b16 %v3834
  %v3906 = vunpack.c.h.b16 %v3834
  %v3907 = vunpack.c.l.b16 %v3835
  %v3908 = vunpack.c.h.b16 %v3835
  %v3909 = vunpack.c.l.b16 %v3836
  %v3910 = vunpack.c.h.b16 %v3836
  %v3911 = vunpack.c.l.b16 %v3837
  %v3912 = vunpack.c.h.b16 %v3837
  %v3913 = vunpack.c.l.b16 %v3838
  %v3914 = vunpack.c.h.b16 %v3838
  %v3915 = vunpack.c.l.b16 %v3839
  %v3916 = vunpack.c.h.b16 %v3839
  %v3917 = vunpack.c.l.b16 %v3840
  %v3918 = vunpack.c.h.b16 %v3840
  %v3919 = vunpack.c.l.b16 %v3841
  %v3920 = vunpack.c.h.b16 %v3841
  %v3921 = vunpack.c.l.b16 %v3842
  %v3922 = vunpack.c.h.b16 %v3842
  %v3923 = vunpack.c.l.b16 %v3843
  %v3924 = vunpack.c.h.b16 %v3843
  %v3925 = vunpack.c.l.b16 %v3844
  %v3926 = vunpack.c.h.b16 %v3844
  %v3927 = vunpack.c.l.b16 %v3845
  %v3928 = vunpack.c.h.b16 %v3845
  %v3929 = vunpack.c.l.b16 %v3846
  %v3930 = vunpack.c.h.b16 %v3846
  %v3931 = vunpack.c.l.b16 %v3847
  %v3932 = vunpack.c.h.b16 %v3847
  %v3933 = vunpack.c.l.b16 %v3848
  %v3934 = vunpack.c.h.b16 %v3848
  %v3935 = vunpack.c.l.b16 %v3849
  %v3936 = vunpack.c.h.b16 %v3849
  %v3937 = vunpack.c.l.b16 %v3850
  %v3938 = vunpack.c.h.b16 %v3850
  %v3939 = vunpack.c.l.b16 %v3851
  %v3940 = vunpack.c.h.b16 %v3851
  %v3941 = vunpack.c.l.b16 %v3852
  %v3942 = vunpack.c.h.b16 %v3852
  %v3943 = vunpack.c.l.b16 %v3853
  %v3944 = vunpack.c.h.b16 %v3853
  %v3945 = vunpack.c.l.b16 %v3854
  %v3946 = vunpack.c.h.b16 %v3854
  %v3947 = vunpack.c.l.b16 %v3855
  %v3948 = vunpack.c.h.b16 %v3855
  %v3949 = vunpack.c.l.b16 %v3856
  %v3950 = vunpack.c.h.b16 %v3856
  %v3951 = vunpack.c.l.b16 %v3857
  %v3952 = vunpack.c.h.b16 %v3857
  %v3953 = vunpack.c.l.b16 %v3858
  %v3954 = vunpack.c.h.b16 %v3858
  %v3955 = vpack.c.b16 %v3895, %v3891
  %v3956 = vpack.c.b16 %v3896, %v3892
  %v3957 = vpack.c.b16 %v3897, %v3893
  %v3958 = vpack.c.b16 %v3898, %v3894
  %v3959 = vpack.c.b16 %v3903, %v3899
  %v3960 = vpack.c.b16 %v3904, %v3900
  %v3961 = vpack.c.b16 %v3905, %v3901
  %v3962 = vpack.c.b16 %v3906, %v3902
  %v3963 = vpack.c.b16 %v3911, %v3907
  %v3964 = vpack.c.b16 %v3912, %v3908
  %v3965 = vpack.c.b16 %v3913, %v3909
  %v3966 = vpack.c.b16 %v3914, %v3910
  %v3967 = vpack.c.b16 %v3919, %v3915
  %v3968 = vpack.c.b16 %v3920, %v3916
  %v3969 = vpack.c.b16 %v3921, %v3917
  %v3970 = vpack.c.b16 %v3922, %v3918
  %v3971 = vpack.c.b16 %v3927, %v3923
  %v3972 = vpack.c.b16 %v3928, %v3924
  %v3973 = vpack.c.b16 %v3929, %v3925
  %v3974 = vpack.c.b16 %v3930, %v3926
  %v3975 = vpack.c.b16 %v3935, %v3931
  %v3976 = vpack.c.b16 %v3936, %v3932
  %v3977 = vpack.c.b16 %v3937, %v3933
  %v3978 = vpack.c.b16 %v3938, %v3934
  %v3979 = vpack.c.b16 %v3943, %v3939
  %v3980 = vpack.c.b16 %v3944, %v3940
  %v3981 = vpack.c.b16 %v3945, %v3941
  %v3982 = vpack.c.b16 %v3946, %v3942
  %v3983 = vpack.c.b16 %v3951, %v3947
  %v3984 = vpack.c.b16 %v3952, %v3948
  %v3985 = vpack.c.b16 %v3953, %v3949
  %v3986 = vpack.c.b16 %v3954, %v3950
  %4019 = vmatprep.subr.bf16.mxu0 %v3956
  %4020 = vmatpush1.bf16.msra.mxu0 %v3955
  %4021 = vmatprep.subr.bf16.mxu0 %v3960
  %4022 = vmatpush1.bf16.msra.mxu0 %v3959
  %4023 = vmatprep.subr.bf16.mxu0 %v3964
  %4024 = vmatpush1.bf16.msra.mxu0 %v3963
  %4025 = vmatprep.subr.bf16.mxu0 %v3968
  %4026 = vmatpush1.bf16.msra.mxu0 %v3967
  %4027 = vmatprep.subr.bf16.mxu0 %v3972
  %4028 = vmatpush1.bf16.msra.mxu0 %v3971
  %4029 = vmatprep.subr.bf16.mxu0 %v3976
  %4030 = vmatpush1.bf16.msra.mxu0 %v3975
  %4031 = vmatprep.subr.bf16.mxu0 %v3980
  %4032 = vmatpush1.bf16.msra.mxu0 %v3979
  %4033 = vmatprep.subr.bf16.mxu0 %v3984
  %4034 = vmatpush1.bf16.msra.mxu0 %v3983
  %4035 = vmatprep.subr.bf16.mxu0 0
  %4036 = vmatpush1.bf16.msra.mxu0 0
  %4037 = vmatprep.subr.bf16.mxu0 0
  %4038 = vmatpush1.bf16.msra.mxu0 0
  %4039 = vmatprep.subr.bf16.mxu0 0
  %4040 = vmatpush1.bf16.msra.mxu0 0
  %4041 = vmatprep.subr.bf16.mxu0 0
  %4042 = vmatpush1.bf16.msra.mxu0 0
  %4043 = vmatprep.subr.bf16.mxu0 0
  %4044 = vmatpush1.bf16.msra.mxu0 0
  %4045 = vmatprep.subr.bf16.mxu0 0
  %4046 = vmatpush1.bf16.msra.mxu0 0
  %4047 = vmatprep.subr.bf16.mxu0 0
  %4048 = vmatpush1.bf16.msra.mxu0 0
  %4049 = vmatprep.subr.bf16.mxu0 0
  %4050 = vmatpush1.bf16.msra.mxu0 0
  %4051 = vmatprep.mubr.bf16.mxu0 0
  %4052 = vmatmul.mubr.bf16.gmra.mrb[0].mxu0 %v3814
  %v4053 = vpop.f32.mrb[0].mxu0
  %v4054 = vadd.f32 0.0, %v4053
  %v4055 = vpop.f32.mrb[0].mxu0
  %v4056 = vadd.f32 0.0, %v4055
  %v4057 = vpop.f32.mrb[0].mxu0
  %v4058 = vpop.f32.mrb[0].mxu0
  %4059 = vdwg.mxu0
  %4060 = vmatprep.subr.bf16.mxu0 %v3958
  %4061 = vmatpush1.bf16.msra.mxu0 %v3957
  %4062 = vmatprep.subr.bf16.mxu0 %v3962
  %4063 = vmatpush1.bf16.msra.mxu0 %v3961
  %4064 = vmatprep.subr.bf16.mxu0 %v3966
  %4065 = vmatpush1.bf16.msra.mxu0 %v3965
  %4066 = vmatprep.subr.bf16.mxu0 %v3970
  %4067 = vmatpush1.bf16.msra.mxu0 %v3969
  %4068 = vmatprep.subr.bf16.mxu0 %v3974
  %4069 = vmatpush1.bf16.msra.mxu0 %v3973
  %4070 = vmatprep.subr.bf16.mxu0 %v3978
  %4071 = vmatpush1.bf16.msra.mxu0 %v3977
  %4072 = vmatprep.subr.bf16.mxu0 %v3982
  %4073 = vmatpush1.bf16.msra.mxu0 %v3981
  %4074 = vmatprep.subr.bf16.mxu0 %v3986
  %4075 = vmatpush1.bf16.msra.mxu0 %v3985
  %4076 = vmatprep.subr.bf16.mxu0 0
  %4077 = vmatpush1.bf16.msra.mxu0 0
  %4078 = vmatprep.subr.bf16.mxu0 0
  %4079 = vmatpush1.bf16.msra.mxu0 0
  %4080 = vmatprep.subr.bf16.mxu0 0
  %4081 = vmatpush1.bf16.msra.mxu0 0
  %4082 = vmatprep.subr.bf16.mxu0 0
  %4083 = vmatpush1.bf16.msra.mxu0 0
  %4084 = vmatprep.subr.bf16.mxu0 0
  %4085 = vmatpush1.bf16.msra.mxu0 0
  %4086 = vmatprep.subr.bf16.mxu0 0
  %4087 = vmatpush1.bf16.msra.mxu0 0
  %4088 = vmatprep.subr.bf16.mxu0 0
  %4089 = vmatpush1.bf16.msra.mxu0 0
  %4090 = vmatprep.subr.bf16.mxu0 0
  %4091 = vmatpush1.bf16.msra.mxu0 0
  %4092 = vmatprep.mubr.bf16.mxu0 0
  %4093 = vmatmul.mubr.bf16.gmra.mrb[0].mxu0 %v3814
  %v4094 = vpop.f32.mrb[0].mxu0
  %v4095 = vadd.f32 0.0, %v4094
  %v4096 = vpop.f32.mrb[0].mxu0
  %v4097 = vadd.f32 0.0, %v4096
  %v4098 = vpop.f32.mrb[0].mxu0
  %v4099 = vpop.f32.mrb[0].mxu0
  %4100 = vdwg.mxu0
  %v4101 = vadd.f32 %v3823, %v4054
  %v4102 = vadd.f32 %v3824, %v4056
  %v4103 = vadd.f32 %v3825, %v4095
  %v4104 = vadd.f32 %v3826, %v4097
  %v4105 = vxor.u32 %v4101, 2147483648
  %v4106 = vmul.f32 %v4105, 1.442695
  %v4107 = vpow.pop %v4106
  %v4108 = vadd.f32 %v4107, 1.0
  %v4109 = vrcp.pop %v4108
  %v4110 = vmul.f32 1.0, %v4109
  %v4111 = vxor.u32 %v4102, 2147483648
  %v4112 = vmul.f32 %v4111, 1.442695
  %v4113 = vpow.pop %v4112
  %v4114 = vadd.f32 %v4113, 1.0
  %v4115 = vrcp.pop %v4114
  %v4116 = vmul.f32 1.0, %v4115
  %v4117 = vtanh.pop %v4103
  %v4118 = vxor.u32 %v4104, 2147483648
  %v4119 = vmul.f32 %v4118, 1.442695
  %v4120 = vpow.pop %v4119
  %v4121 = vadd.f32 %v4120, 1.0
  %v4122 = vrcp.pop %v4121
  %v4123 = vmul.f32 1.0, %v4122
  %v4124 = vmul.f32 %v4116, %v3502
  %v4125 = vmul.f32 %v4110, %v4117
  %v4126 = vadd.f32 %v4124, %v4125
  %v4127 = vtanh.pop %v4126
  %v4128 = vmul.f32 %v4123, %v4127
  %s4129 = scalar_lea.vmem %s52, 16
  %v4130 = vld [vmem:[%s4129] sm:$0xff]
  %v4131 = vld [vmem:[%s4129 + $0x8] sm:$0xff]
  %v4132 = vunpack.c.l.bf16 %v4130
  %v4133 = vunpack.c.h.bf16 %v4130
  %v4134 = vunpack.c.l.bf16 %v4131
  %v4135 = vunpack.c.h.bf16 %v4131
  %v4136 = vld [vmem:[%s3] sm:$0xff]
  %v4137 = vld [vmem:[%s3 + $0x8] sm:$0xff]
  %v4138 = vld [vmem:[%s3 + $0x10] sm:$0xff]
  %v4139 = vld [vmem:[%s3 + $0x18] sm:$0xff]
  %v4140 = vld [vmem:[%s3 + $0x20] sm:$0xff]
  %v4141 = vld [vmem:[%s3 + $0x28] sm:$0xff]
  %v4142 = vld [vmem:[%s3 + $0x30] sm:$0xff]
  %v4143 = vld [vmem:[%s3 + $0x38] sm:$0xff]
  %v4144 = vld [vmem:[%s3 + $0x40] sm:$0xff]
  %v4145 = vld [vmem:[%s3 + $0x48] sm:$0xff]
  %v4146 = vld [vmem:[%s3 + $0x50] sm:$0xff]
  %v4147 = vld [vmem:[%s3 + $0x58] sm:$0xff]
  %v4148 = vld [vmem:[%s3 + $0x60] sm:$0xff]
  %v4149 = vld [vmem:[%s3 + $0x68] sm:$0xff]
  %v4150 = vld [vmem:[%s3 + $0x70] sm:$0xff]
  %v4151 = vld [vmem:[%s3 + $0x78] sm:$0xff]
  %v4152 = vld [vmem:[%s3 + $0x80] sm:$0xff]
  %v4153 = vld [vmem:[%s3 + $0x88] sm:$0xff]
  %v4154 = vld [vmem:[%s3 + $0x90] sm:$0xff]
  %v4155 = vld [vmem:[%s3 + $0x98] sm:$0xff]
  %v4156 = vld [vmem:[%s3 + $0xa0] sm:$0xff]
  %v4157 = vld [vmem:[%s3 + $0xa8] sm:$0xff]
  %v4158 = vld [vmem:[%s3 + $0xb0] sm:$0xff]
  %v4159 = vld [vmem:[%s3 + $0xb8] sm:$0xff]
  %v4160 = vld [vmem:[%s3 + $0xc0] sm:$0xff]
  %v4161 = vld [vmem:[%s3 + $0xc8] sm:$0xff]
  %v4162 = vld [vmem:[%s3 + $0xd0] sm:$0xff]
  %v4163 = vld [vmem:[%s3 + $0xd8] sm:$0xff]
  %v4164 = vld [vmem:[%s3 + $0xe0] sm:$0xff]
  %v4165 = vld [vmem:[%s3 + $0xe8] sm:$0xff]
  %v4166 = vld [vmem:[%s3 + $0xf0] sm:$0xff]
  %v4167 = vld [vmem:[%s3 + $0xf8] sm:$0xff]
  %v4200 = vunpack.c.l.b16 %v4136
  %v4201 = vunpack.c.h.b16 %v4136
  %v4202 = vunpack.c.l.b16 %v4137
  %v4203 = vunpack.c.h.b16 %v4137
  %v4204 = vunpack.c.l.b16 %v4138
  %v4205 = vunpack.c.h.b16 %v4138
  %v4206 = vunpack.c.l.b16 %v4139
  %v4207 = vunpack.c.h.b16 %v4139
  %v4208 = vunpack.c.l.b16 %v4140
  %v4209 = vunpack.c.h.b16 %v4140
  %v4210 = vunpack.c.l.b16 %v4141
  %v4211 = vunpack.c.h.b16 %v4141
  %v4212 = vunpack.c.l.b16 %v4142
  %v4213 = vunpack.c.h.b16 %v4142
  %v4214 = vunpack.c.l.b16 %v4143
  %v4215 = vunpack.c.h.b16 %v4143
  %v4216 = vunpack.c.l.b16 %v4144
  %v4217 = vunpack.c.h.b16 %v4144
  %v4218 = vunpack.c.l.b16 %v4145
  %v4219 = vunpack.c.h.b16 %v4145
  %v4220 = vunpack.c.l.b16 %v4146
  %v4221 = vunpack.c.h.b16 %v4146
  %v4222 = vunpack.c.l.b16 %v4147
  %v4223 = vunpack.c.h.b16 %v4147
  %v4224 = vunpack.c.l.b16 %v4148
  %v4225 = vunpack.c.h.b16 %v4148
  %v4226 = vunpack.c.l.b16 %v4149
  %v4227 = vunpack.c.h.b16 %v4149
  %v4228 = vunpack.c.l.b16 %v4150
  %v4229 = vunpack.c.h.b16 %v4150
  %v4230 = vunpack.c.l.b16 %v4151
  %v4231 = vunpack.c.h.b16 %v4151
  %v4232 = vunpack.c.l.b16 %v4152
  %v4233 = vunpack.c.h.b16 %v4152
  %v4234 = vunpack.c.l.b16 %v4153
  %v4235 = vunpack.c.h.b16 %v4153
  %v4236 = vunpack.c.l.b16 %v4154
  %v4237 = vunpack.c.h.b16 %v4154
  %v4238 = vunpack.c.l.b16 %v4155
  %v4239 = vunpack.c.h.b16 %v4155
  %v4240 = vunpack.c.l.b16 %v4156
  %v4241 = vunpack.c.h.b16 %v4156
  %v4242 = vunpack.c.l.b16 %v4157
  %v4243 = vunpack.c.h.b16 %v4157
  %v4244 = vunpack.c.l.b16 %v4158
  %v4245 = vunpack.c.h.b16 %v4158
  %v4246 = vunpack.c.l.b16 %v4159
  %v4247 = vunpack.c.h.b16 %v4159
  %v4248 = vunpack.c.l.b16 %v4160
  %v4249 = vunpack.c.h.b16 %v4160
  %v4250 = vunpack.c.l.b16 %v4161
  %v4251 = vunpack.c.h.b16 %v4161
  %v4252 = vunpack.c.l.b16 %v4162
  %v4253 = vunpack.c.h.b16 %v4162
  %v4254 = vunpack.c.l.b16 %v4163
  %v4255 = vunpack.c.h.b16 %v4163
  %v4256 = vunpack.c.l.b16 %v4164
  %v4257 = vunpack.c.h.b16 %v4164
  %v4258 = vunpack.c.l.b16 %v4165
  %v4259 = vunpack.c.h.b16 %v4165
  %v4260 = vunpack.c.l.b16 %v4166
  %v4261 = vunpack.c.h.b16 %v4166
  %v4262 = vunpack.c.l.b16 %v4167
  %v4263 = vunpack.c.h.b16 %v4167
  %v4264 = vpack.c.b16 %v4204, %v4200
  %v4265 = vpack.c.b16 %v4205, %v4201
  %v4266 = vpack.c.b16 %v4206, %v4202
  %v4267 = vpack.c.b16 %v4207, %v4203
  %v4268 = vpack.c.b16 %v4212, %v4208
  %v4269 = vpack.c.b16 %v4213, %v4209
  %v4270 = vpack.c.b16 %v4214, %v4210
  %v4271 = vpack.c.b16 %v4215, %v4211
  %v4272 = vpack.c.b16 %v4220, %v4216
  %v4273 = vpack.c.b16 %v4221, %v4217
  %v4274 = vpack.c.b16 %v4222, %v4218
  %v4275 = vpack.c.b16 %v4223, %v4219
  %v4276 = vpack.c.b16 %v4228, %v4224
  %v4277 = vpack.c.b16 %v4229, %v4225
  %v4278 = vpack.c.b16 %v4230, %v4226
  %v4279 = vpack.c.b16 %v4231, %v4227
  %v4280 = vpack.c.b16 %v4236, %v4232
  %v4281 = vpack.c.b16 %v4237, %v4233
  %v4282 = vpack.c.b16 %v4238, %v4234
  %v4283 = vpack.c.b16 %v4239, %v4235
  %v4284 = vpack.c.b16 %v4244, %v4240
  %v4285 = vpack.c.b16 %v4245, %v4241
  %v4286 = vpack.c.b16 %v4246, %v4242
  %v4287 = vpack.c.b16 %v4247, %v4243
  %v4288 = vpack.c.b16 %v4252, %v4248
  %v4289 = vpack.c.b16 %v4253, %v4249
  %v4290 = vpack.c.b16 %v4254, %v4250
  %v4291 = vpack.c.b16 %v4255, %v4251
  %v4292 = vpack.c.b16 %v4260, %v4256
  %v4293 = vpack.c.b16 %v4261, %v4257
  %v4294 = vpack.c.b16 %v4262, %v4258
  %v4295 = vpack.c.b16 %v4263, %v4259
  %4328 = vmatprep.subr.bf16.mxu0 %v4265
  %4329 = vmatpush1.bf16.msra.mxu0 %v4264
  %4330 = vmatprep.subr.bf16.mxu0 %v4269
  %4331 = vmatpush1.bf16.msra.mxu0 %v4268
  %4332 = vmatprep.subr.bf16.mxu0 %v4273
  %4333 = vmatpush1.bf16.msra.mxu0 %v4272
  %4334 = vmatprep.subr.bf16.mxu0 %v4277
  %4335 = vmatpush1.bf16.msra.mxu0 %v4276
  %4336 = vmatprep.subr.bf16.mxu0 %v4281
  %4337 = vmatpush1.bf16.msra.mxu0 %v4280
  %4338 = vmatprep.subr.bf16.mxu0 %v4285
  %4339 = vmatpush1.bf16.msra.mxu0 %v4284
  %4340 = vmatprep.subr.bf16.mxu0 %v4289
  %4341 = vmatpush1.bf16.msra.mxu0 %v4288
  %4342 = vmatprep.subr.bf16.mxu0 %v4293
  %4343 = vmatpush1.bf16.msra.mxu0 %v4292
  %4344 = vmatprep.subr.bf16.mxu0 0
  %4345 = vmatpush1.bf16.msra.mxu0 0
  %4346 = vmatprep.subr.bf16.mxu0 0
  %4347 = vmatpush1.bf16.msra.mxu0 0
  %4348 = vmatprep.subr.bf16.mxu0 0
  %4349 = vmatpush1.bf16.msra.mxu0 0
  %4350 = vmatprep.subr.bf16.mxu0 0
  %4351 = vmatpush1.bf16.msra.mxu0 0
  %4352 = vmatprep.subr.bf16.mxu0 0
  %4353 = vmatpush1.bf16.msra.mxu0 0
  %4354 = vmatprep.subr.bf16.mxu0 0
  %4355 = vmatpush1.bf16.msra.mxu0 0
  %4356 = vmatprep.subr.bf16.mxu0 0
  %4357 = vmatpush1.bf16.msra.mxu0 0
  %4358 = vmatprep.subr.bf16.mxu0 0
  %4359 = vmatpush1.bf16.msra.mxu0 0
  %4360 = vmatprep.mubr.bf16.mxu0 0
  %4361 = vmatmul.mubr.bf16.gmra.mrb[0].mxu0 %v3817
  %v4362 = vpop.f32.mrb[0].mxu0
  %v4363 = vadd.f32 0.0, %v4362
  %v4364 = vpop.f32.mrb[0].mxu0
  %v4365 = vadd.f32 0.0, %v4364
  %v4366 = vpop.f32.mrb[0].mxu0
  %v4367 = vpop.f32.mrb[0].mxu0
  %4368 = vdwg.mxu0
  %4369 = vmatprep.subr.bf16.mxu0 %v4267
  %4370 = vmatpush1.bf16.msra.mxu0 %v4266
  %4371 = vmatprep.subr.bf16.mxu0 %v4271
  %4372 = vmatpush1.bf16.msra.mxu0 %v4270
  %4373 = vmatprep.subr.bf16.mxu0 %v4275
  %4374 = vmatpush1.bf16.msra.mxu0 %v4274
  %4375 = vmatprep.subr.bf16.mxu0 %v4279
  %4376 = vmatpush1.bf16.msra.mxu0 %v4278
  %4377 = vmatprep.subr.bf16.mxu0 %v4283
  %4378 = vmatpush1.bf16.msra.mxu0 %v4282
  %4379 = vmatprep.subr.bf16.mxu0 %v4287
  %4380 = vmatpush1.bf16.msra.mxu0 %v4286
  %4381 = vmatprep.subr.bf16.mxu0 %v4291
  %4382 = vmatpush1.bf16.msra.mxu0 %v4290
  %4383 = vmatprep.subr.bf16.mxu0 %v4295
  %4384 = vmatpush1.bf16.msra.mxu0 %v4294
  %4385 = vmatprep.subr.bf16.mxu0 0
  %4386 = vmatpush1.bf16.msra.mxu0 0
  %4387 = vmatprep.subr.bf16.mxu0 0
  %4388 = vmatpush1.bf16.msra.mxu0 0
  %4389 = vmatprep.subr.bf16.mxu0 0
  %4390 = vmatpush1.bf16.msra.mxu0 0
  %4391 = vmatprep.subr.bf16.mxu0 0
  %4392 = vmatpush1.bf16.msra.mxu0 0
  %4393 = vmatprep.subr.bf16.mxu0 0
  %4394 = vmatpush1.bf16.msra.mxu0 0
  %4395 = vmatprep.subr.bf16.mxu0 0
  %4396 = vmatpush1.bf16.msra.mxu0 0
  %4397 = vmatprep.subr.bf16.mxu0 0
  %4398 = vmatpush1.bf16.msra.mxu0 0
  %4399 = vmatprep.subr.bf16.mxu0 0
  %4400 = vmatpush1.bf16.msra.mxu0 0
  %4401 = vmatprep.mubr.bf16.mxu0 0
  %4402 = vmatmul.mubr.bf16.gmra.mrb[0].mxu0 %v3817
  %v4403 = vpop.f32.mrb[0].mxu0
  %v4404 = vadd.f32 0.0, %v4403
  %v4405 = vpop.f32.mrb[0].mxu0
  %v4406 = vadd.f32 0.0, %v4405
  %v4407 = vpop.f32.mrb[0].mxu0
  %v4408 = vpop.f32.mrb[0].mxu0
  %4409 = vdwg.mxu0
  %v4410 = vadd.f32 %v4132, %v4363
  %v4411 = vadd.f32 %v4133, %v4365
  %v4412 = vadd.f32 %v4134, %v4404
  %v4413 = vadd.f32 %v4135, %v4406
  %v4414 = vxor.u32 %v4410, 2147483648
  %v4415 = vmul.f32 %v4414, 1.442695
  %v4416 = vpow.pop %v4415
  %v4417 = vadd.f32 %v4416, 1.0
  %v4418 = vrcp.pop %v4417
  %v4419 = vmul.f32 1.0, %v4418
  %v4420 = vxor.u32 %v4411, 2147483648
  %v4421 = vmul.f32 %v4420, 1.442695
  %v4422 = vpow.pop %v4421
  %v4423 = vadd.f32 %v4422, 1.0
  %v4424 = vrcp.pop %v4423
  %v4425 = vmul.f32 1.0, %v4424
  %v4426 = vtanh.pop %v4412
  %v4427 = vxor.u32 %v4413, 2147483648
  %v4428 = vmul.f32 %v4427, 1.442695
  %v4429 = vpow.pop %v4428
  %v4430 = vadd.f32 %v4429, 1.0
  %v4431 = vrcp.pop %v4430
  %v4432 = vmul.f32 1.0, %v4431
  %v4433 = vmul.f32 %v4425, %v3811
  %v4434 = vmul.f32 %v4419, %v4426
  %v4435 = vadd.f32 %v4433, %v4434
  %v4436 = vtanh.pop %v4435
  %v4437 = vmul.f32 %v4432, %v4436
  %v4438 = vpack.c.bf16 %v4128, %v4128
  %s4439 = scalar_lea.vmem %s4, 24
  %4440 = vst [vmem:[%s4439] sm:$0xf] %v4438
  %v4441 = vpack.c.bf16 %v4437, %v4437
  %s4442 = scalar_lea.vmem %s60, 4
  %4443 = vst [vmem:[%s4442] sm:$0xf] %v4441
  %s4444 = scalar_lea.vmem %s0, 112
  %v4445 = vld [vmem:[%s4444] sm:$0xff]
  %v4446 = vld [vmem:[%s4444 + $0x8] sm:$0xff]
  %v4447 = vunpack.c.l.bf16 %v4445
  %v4448 = vunpack.c.h.bf16 %v4445
  %v4449 = vunpack.c.l.bf16 %v4446
  %v4450 = vunpack.c.h.bf16 %v4446
  %v4451 = vld [vmem:[%s2] sm:$0xff]
  %v4452 = vld [vmem:[%s2 + $0x8] sm:$0xff]
  %v4453 = vld [vmem:[%s2 + $0x10] sm:$0xff]
  %v4454 = vld [vmem:[%s2 + $0x18] sm:$0xff]
  %v4455 = vld [vmem:[%s2 + $0x20] sm:$0xff]
  %v4456 = vld [vmem:[%s2 + $0x28] sm:$0xff]
  %v4457 = vld [vmem:[%s2 + $0x30] sm:$0xff]
  %v4458 = vld [vmem:[%s2 + $0x38] sm:$0xff]
  %v4459 = vld [vmem:[%s2 + $0x40] sm:$0xff]
  %v4460 = vld [vmem:[%s2 + $0x48] sm:$0xff]
  %v4461 = vld [vmem:[%s2 + $0x50] sm:$0xff]
  %v4462 = vld [vmem:[%s2 + $0x58] sm:$0xff]
  %v4463 = vld [vmem:[%s2 + $0x60] sm:$0xff]
  %v4464 = vld [vmem:[%s2 + $0x68] sm:$0xff]
  %v4465 = vld [vmem:[%s2 + $0x70] sm:$0xff]
  %v4466 = vld [vmem:[%s2 + $0x78] sm:$0xff]
  %v4467 = vld [vmem:[%s2 + $0x80] sm:$0xff]
  %v4468 = vld [vmem:[%s2 + $0x88] sm:$0xff]
  %v4469 = vld [vmem:[%s2 + $0x90] sm:$0xff]
  %v4470 = vld [vmem:[%s2 + $0x98] sm:$0xff]
  %v4471 = vld [vmem:[%s2 + $0xa0] sm:$0xff]
  %v4472 = vld [vmem:[%s2 + $0xa8] sm:$0xff]
  %v4473 = vld [vmem:[%s2 + $0xb0] sm:$0xff]
  %v4474 = vld [vmem:[%s2 + $0xb8] sm:$0xff]
  %v4475 = vld [vmem:[%s2 + $0xc0] sm:$0xff]
  %v4476 = vld [vmem:[%s2 + $0xc8] sm:$0xff]
  %v4477 = vld [vmem:[%s2 + $0xd0] sm:$0xff]
  %v4478 = vld [vmem:[%s2 + $0xd8] sm:$0xff]
  %v4479 = vld [vmem:[%s2 + $0xe0] sm:$0xff]
  %v4480 = vld [vmem:[%s2 + $0xe8] sm:$0xff]
  %v4481 = vld [vmem:[%s2 + $0xf0] sm:$0xff]
  %v4482 = vld [vmem:[%s2 + $0xf8] sm:$0xff]
  %v4515 = vunpack.c.l.b16 %v4451
  %v4516 = vunpack.c.h.b16 %v4451
  %v4517 = vunpack.c.l.b16 %v4452
  %v4518 = vunpack.c.h.b16 %v4452
  %v4519 = vunpack.c.l.b16 %v4453
  %v4520 = vunpack.c.h.b16 %v4453
  %v4521 = vunpack.c.l.b16 %v4454
  %v4522 = vunpack.c.h.b16 %v4454
  %v4523 = vunpack.c.l.b16 %v4455
  %v4524 = vunpack.c.h.b16 %v4455
  %v4525 = vunpack.c.l.b16 %v4456
  %v4526 = vunpack.c.h.b16 %v4456
  %v4527 = vunpack.c.l.b16 %v4457
  %v4528 = vunpack.c.h.b16 %v4457
  %v4529 = vunpack.c.l.b16 %v4458
  %v4530 = vunpack.c.h.b16 %v4458
  %v4531 = vunpack.c.l.b16 %v4459
  %v4532 = vunpack.c.h.b16 %v4459
  %v4533 = vunpack.c.l.b16 %v4460
  %v4534 = vunpack.c.h.b16 %v4460
  %v4535 = vunpack.c.l.b16 %v4461
  %v4536 = vunpack.c.h.b16 %v4461
  %v4537 = vunpack.c.l.b16 %v4462
  %v4538 = vunpack.c.h.b16 %v4462
  %v4539 = vunpack.c.l.b16 %v4463
  %v4540 = vunpack.c.h.b16 %v4463
  %v4541 = vunpack.c.l.b16 %v4464
  %v4542 = vunpack.c.h.b16 %v4464
  %v4543 = vunpack.c.l.b16 %v4465
  %v4544 = vunpack.c.h.b16 %v4465
  %v4545 = vunpack.c.l.b16 %v4466
  %v4546 = vunpack.c.h.b16 %v4466
  %v4547 = vunpack.c.l.b16 %v4467
  %v4548 = vunpack.c.h.b16 %v4467
  %v4549 = vunpack.c.l.b16 %v4468
  %v4550 = vunpack.c.h.b16 %v4468
  %v4551 = vunpack.c.l.b16 %v4469
  %v4552 = vunpack.c.h.b16 %v4469
  %v4553 = vunpack.c.l.b16 %v4470
  %v4554 = vunpack.c.h.b16 %v4470
  %v4555 = vunpack.c.l.b16 %v4471
  %v4556 = vunpack.c.h.b16 %v4471
  %v4557 = vunpack.c.l.b16 %v4472
  %v4558 = vunpack.c.h.b16 %v4472
  %v4559 = vunpack.c.l.b16 %v4473
  %v4560 = vunpack.c.h.b16 %v4473
  %v4561 = vunpack.c.l.b16 %v4474
  %v4562 = vunpack.c.h.b16 %v4474
  %v4563 = vunpack.c.l.b16 %v4475
  %v4564 = vunpack.c.h.b16 %v4475
  %v4565 = vunpack.c.l.b16 %v4476
  %v4566 = vunpack.c.h.b16 %v4476
  %v4567 = vunpack.c.l.b16 %v4477
  %v4568 = vunpack.c.h.b16 %v4477
  %v4569 = vunpack.c.l.b16 %v4478
  %v4570 = vunpack.c.h.b16 %v4478
  %v4571 = vunpack.c.l.b16 %v4479
  %v4572 = vunpack.c.h.b16 %v4479
  %v4573 = vunpack.c.l.b16 %v4480
  %v4574 = vunpack.c.h.b16 %v4480
  %v4575 = vunpack.c.l.b16 %v4481
  %v4576 = vunpack.c.h.b16 %v4481
  %v4577 = vunpack.c.l.b16 %v4482
  %v4578 = vunpack.c.h.b16 %v4482
  %v4579 = vpack.c.b16 %v4519, %v4515
  %v4580 = vpack.c.b16 %v4520, %v4516
  %v4581 = vpack.c.b16 %v4521, %v4517
  %v4582 = vpack.c.b16 %v4522, %v4518
  %v4583 = vpack.c.b16 %v4527, %v4523
  %v4584 = vpack.c.b16 %v4528, %v4524
  %v4585 = vpack.c.b16 %v4529, %v4525
  %v4586 = vpack.c.b16 %v4530, %v4526
  %v4587 = vpack.c.b16 %v4535, %v4531
  %v4588 = vpack.c.b16 %v4536, %v4532
  %v4589 = vpack.c.b16 %v4537, %v4533
  %v4590 = vpack.c.b16 %v4538, %v4534
  %v4591 = vpack.c.b16 %v4543, %v4539
  %v4592 = vpack.c.b16 %v4544, %v4540
  %v4593 = vpack.c.b16 %v4545, %v4541
  %v4594 = vpack.c.b16 %v4546, %v4542
  %v4595 = vpack.c.b16 %v4551, %v4547
  %v4596 = vpack.c.b16 %v4552, %v4548
  %v4597 = vpack.c.b16 %v4553, %v4549
  %v4598 = vpack.c.b16 %v4554, %v4550
  %v4599 = vpack.c.b16 %v4559, %v4555
  %v4600 = vpack.c.b16 %v4560, %v4556
  %v4601 = vpack.c.b16 %v4561, %v4557
  %v4602 = vpack.c.b16 %v4562, %v4558
  %v4603 = vpack.c.b16 %v4567, %v4563
  %v4604 = vpack.c.b16 %v4568, %v4564
  %v4605 = vpack.c.b16 %v4569, %v4565
  %v4606 = vpack.c.b16 %v4570, %v4566
  %v4607 = vpack.c.b16 %v4575, %v4571
  %v4608 = vpack.c.b16 %v4576, %v4572
  %v4609 = vpack.c.b16 %v4577, %v4573
  %v4610 = vpack.c.b16 %v4578, %v4574
  %4643 = vmatprep.subr.bf16.mxu0 %v4580
  %4644 = vmatpush1.bf16.msra.mxu0 %v4579
  %4645 = vmatprep.subr.bf16.mxu0 %v4584
  %4646 = vmatpush1.bf16.msra.mxu0 %v4583
  %4647 = vmatprep.subr.bf16.mxu0 %v4588
  %4648 = vmatpush1.bf16.msra.mxu0 %v4587
  %4649 = vmatprep.subr.bf16.mxu0 %v4592
  %4650 = vmatpush1.bf16.msra.mxu0 %v4591
  %4651 = vmatprep.subr.bf16.mxu0 %v4596
  %4652 = vmatpush1.bf16.msra.mxu0 %v4595
  %4653 = vmatprep.subr.bf16.mxu0 %v4600
  %4654 = vmatpush1.bf16.msra.mxu0 %v4599
  %4655 = vmatprep.subr.bf16.mxu0 %v4604
  %4656 = vmatpush1.bf16.msra.mxu0 %v4603
  %4657 = vmatprep.subr.bf16.mxu0 %v4608
  %4658 = vmatpush1.bf16.msra.mxu0 %v4607
  %4659 = vmatprep.subr.bf16.mxu0 0
  %4660 = vmatpush1.bf16.msra.mxu0 0
  %4661 = vmatprep.subr.bf16.mxu0 0
  %4662 = vmatpush1.bf16.msra.mxu0 0
  %4663 = vmatprep.subr.bf16.mxu0 0
  %4664 = vmatpush1.bf16.msra.mxu0 0
  %4665 = vmatprep.subr.bf16.mxu0 0
  %4666 = vmatpush1.bf16.msra.mxu0 0
  %4667 = vmatprep.subr.bf16.mxu0 0
  %4668 = vmatpush1.bf16.msra.mxu0 0
  %4669 = vmatprep.subr.bf16.mxu0 0
  %4670 = vmatpush1.bf16.msra.mxu0 0
  %4671 = vmatprep.subr.bf16.mxu0 0
  %4672 = vmatpush1.bf16.msra.mxu0 0
  %4673 = vmatprep.subr.bf16.mxu0 0
  %4674 = vmatpush1.bf16.msra.mxu0 0
  %4675 = vmatprep.mubr.bf16.mxu0 0
  %4676 = vmatmul.mubr.bf16.gmra.mrb[0].mxu0 %v4438
  %v4677 = vpop.f32.mrb[0].mxu0
  %v4678 = vadd.f32 0.0, %v4677
  %v4679 = vpop.f32.mrb[0].mxu0
  %v4680 = vadd.f32 0.0, %v4679
  %v4681 = vpop.f32.mrb[0].mxu0
  %v4682 = vpop.f32.mrb[0].mxu0
  %4683 = vdwg.mxu0
  %4684 = vmatprep.subr.bf16.mxu0 %v4582
  %4685 = vmatpush1.bf16.msra.mxu0 %v4581
  %4686 = vmatprep.subr.bf16.mxu0 %v4586
  %4687 = vmatpush1.bf16.msra.mxu0 %v4585
  %4688 = vmatprep.subr.bf16.mxu0 %v4590
  %4689 = vmatpush1.bf16.msra.mxu0 %v4589
  %4690 = vmatprep.subr.bf16.mxu0 %v4594
  %4691 = vmatpush1.bf16.msra.mxu0 %v4593
  %4692 = vmatprep.subr.bf16.mxu0 %v4598
  %4693 = vmatpush1.bf16.msra.mxu0 %v4597
  %4694 = vmatprep.subr.bf16.mxu0 %v4602
  %4695 = vmatpush1.bf16.msra.mxu0 %v4601
  %4696 = vmatprep.subr.bf16.mxu0 %v4606
  %4697 = vmatpush1.bf16.msra.mxu0 %v4605
  %4698 = vmatprep.subr.bf16.mxu0 %v4610
  %4699 = vmatpush1.bf16.msra.mxu0 %v4609
  %4700 = vmatprep.subr.bf16.mxu0 0
  %4701 = vmatpush1.bf16.msra.mxu0 0
  %4702 = vmatprep.subr.bf16.mxu0 0
  %4703 = vmatpush1.bf16.msra.mxu0 0
  %4704 = vmatprep.subr.bf16.mxu0 0
  %4705 = vmatpush1.bf16.msra.mxu0 0
  %4706 = vmatprep.subr.bf16.mxu0 0
  %4707 = vmatpush1.bf16.msra.mxu0 0
  %4708 = vmatprep.subr.bf16.mxu0 0
  %4709 = vmatpush1.bf16.msra.mxu0 0
  %4710 = vmatprep.subr.bf16.mxu0 0
  %4711 = vmatpush1.bf16.msra.mxu0 0
  %4712 = vmatprep.subr.bf16.mxu0 0
  %4713 = vmatpush1.bf16.msra.mxu0 0
  %4714 = vmatprep.subr.bf16.mxu0 0
  %4715 = vmatpush1.bf16.msra.mxu0 0
  %4716 = vmatprep.mubr.bf16.mxu0 0
  %4717 = vmatmul.mubr.bf16.gmra.mrb[0].mxu0 %v4438
  %v4718 = vpop.f32.mrb[0].mxu0
  %v4719 = vadd.f32 0.0, %v4718
  %v4720 = vpop.f32.mrb[0].mxu0
  %v4721 = vadd.f32 0.0, %v4720
  %v4722 = vpop.f32.mrb[0].mxu0
  %v4723 = vpop.f32.mrb[0].mxu0
  %4724 = vdwg.mxu0
  %v4725 = vadd.f32 %v4447, %v4678
  %v4726 = vadd.f32 %v4448, %v4680
  %v4727 = vadd.f32 %v4449, %v4719
  %v4728 = vadd.f32 %v4450, %v4721
  %v4729 = vxor.u32 %v4725, 2147483648
  %v4730 = vmul.f32 %v4729, 1.442695
  %v4731 = vpow.pop %v4730
  %v4732 = vadd.f32 %v4731, 1.0
  %v4733 = vrcp.pop %v4732
  %v4734 = vmul.f32 1.0, %v4733
  %v4735 = vxor.u32 %v4726, 2147483648
  %v4736 = vmul.f32 %v4735, 1.442695
  %v4737 = vpow.pop %v4736
  %v4738 = vadd.f32 %v4737, 1.0
  %v4739 = vrcp.pop %v4738
  %v4740 = vmul.f32 1.0, %v4739
  %v4741 = vtanh.pop %v4727
  %v4742 = vxor.u32 %v4728, 2147483648
  %v4743 = vmul.f32 %v4742, 1.442695
  %v4744 = vpow.pop %v4743
  %v4745 = vadd.f32 %v4744, 1.0
  %v4746 = vrcp.pop %v4745
  %v4747 = vmul.f32 1.0, %v4746
  %v4748 = vmul.f32 %v4740, %v4126
  %v4749 = vmul.f32 %v4734, %v4741
  %v4750 = vadd.f32 %v4748, %v4749
  %v4751 = vtanh.pop %v4750
  %v4752 = vmul.f32 %v4747, %v4751
  %v4753 = vld [vmem:[%s52] sm:$0xff]
  %v4754 = vld [vmem:[%s52 + $0x8] sm:$0xff]
  %v4755 = vunpack.c.l.bf16 %v4753
  %v4756 = vunpack.c.h.bf16 %v4753
  %v4757 = vunpack.c.l.bf16 %v4754
  %v4758 = vunpack.c.h.bf16 %v4754
  %v4759 = vld [vmem:[%s3] sm:$0xff]
  %v4760 = vld [vmem:[%s3 + $0x8] sm:$0xff]
  %v4761 = vld [vmem:[%s3 + $0x10] sm:$0xff]
  %v4762 = vld [vmem:[%s3 + $0x18] sm:$0xff]
  %v4763 = vld [vmem:[%s3 + $0x20] sm:$0xff]
  %v4764 = vld [vmem:[%s3 + $0x28] sm:$0xff]
  %v4765 = vld [vmem:[%s3 + $0x30] sm:$0xff]
  %v4766 = vld [vmem:[%s3 + $0x38] sm:$0xff]
  %v4767 = vld [vmem:[%s3 + $0x40] sm:$0xff]
  %v4768 = vld [vmem:[%s3 + $0x48] sm:$0xff]
  %v4769 = vld [vmem:[%s3 + $0x50] sm:$0xff]
  %v4770 = vld [vmem:[%s3 + $0x58] sm:$0xff]
  %v4771 = vld [vmem:[%s3 + $0x60] sm:$0xff]
  %v4772 = vld [vmem:[%s3 + $0x68] sm:$0xff]
  %v4773 = vld [vmem:[%s3 + $0x70] sm:$0xff]
  %v4774 = vld [vmem:[%s3 + $0x78] sm:$0xff]
  %v4775 = vld [vmem:[%s3 + $0x80] sm:$0xff]
  %v4776 = vld [vmem:[%s3 + $0x88] sm:$0xff]
  %v4777 = vld [vmem:[%s3 + $0x90] sm:$0xff]
  %v4778 = vld [vmem:[%s3 + $0x98] sm:$0xff]
  %v4779 = vld [vmem:[%s3 + $0xa0] sm:$0xff]
  %v4780 = vld [vmem:[%s3 + $0xa8] sm:$0xff]
  %v4781 = vld [vmem:[%s3 + $0xb0] sm:$0xff]
  %v4782 = vld [vmem:[%s3 + $0xb8] sm:$0xff]
  %v4783 = vld [vmem:[%s3 + $0xc0] sm:$0xff]
  %v4784 = vld [vmem:[%s3 + $0xc8] sm:$0xff]
  %v4785 = vld [vmem:[%s3 + $0xd0] sm:$0xff]
  %v4786 = vld [vmem:[%s3 + $0xd8] sm:$0xff]
  %v4787 = vld [vmem:[%s3 + $0xe0] sm:$0xff]
  %v4788 = vld [vmem:[%s3 + $0xe8] sm:$0xff]
  %v4789 = vld [vmem:[%s3 + $0xf0] sm:$0xff]
  %v4790 = vld [vmem:[%s3 + $0xf8] sm:$0xff]
  %v4823 = vunpack.c.l.b16 %v4759
  %v4824 = vunpack.c.h.b16 %v4759
  %v4825 = vunpack.c.l.b16 %v4760
  %v4826 = vunpack.c.h.b16 %v4760
  %v4827 = vunpack.c.l.b16 %v4761
  %v4828 = vunpack.c.h.b16 %v4761
  %v4829 = vunpack.c.l.b16 %v4762
  %v4830 = vunpack.c.h.b16 %v4762
  %v4831 = vunpack.c.l.b16 %v4763
  %v4832 = vunpack.c.h.b16 %v4763
  %v4833 = vunpack.c.l.b16 %v4764
  %v4834 = vunpack.c.h.b16 %v4764
  %v4835 = vunpack.c.l.b16 %v4765
  %v4836 = vunpack.c.h.b16 %v4765
  %v4837 = vunpack.c.l.b16 %v4766
  %v4838 = vunpack.c.h.b16 %v4766
  %v4839 = vunpack.c.l.b16 %v4767
  %v4840 = vunpack.c.h.b16 %v4767
  %v4841 = vunpack.c.l.b16 %v4768
  %v4842 = vunpack.c.h.b16 %v4768
  %v4843 = vunpack.c.l.b16 %v4769
  %v4844 = vunpack.c.h.b16 %v4769
  %v4845 = vunpack.c.l.b16 %v4770
  %v4846 = vunpack.c.h.b16 %v4770
  %v4847 = vunpack.c.l.b16 %v4771
  %v4848 = vunpack.c.h.b16 %v4771
  %v4849 = vunpack.c.l.b16 %v4772
  %v4850 = vunpack.c.h.b16 %v4772
  %v4851 = vunpack.c.l.b16 %v4773
  %v4852 = vunpack.c.h.b16 %v4773
  %v4853 = vunpack.c.l.b16 %v4774
  %v4854 = vunpack.c.h.b16 %v4774
  %v4855 = vunpack.c.l.b16 %v4775
  %v4856 = vunpack.c.h.b16 %v4775
  %v4857 = vunpack.c.l.b16 %v4776
  %v4858 = vunpack.c.h.b16 %v4776
  %v4859 = vunpack.c.l.b16 %v4777
  %v4860 = vunpack.c.h.b16 %v4777
  %v4861 = vunpack.c.l.b16 %v4778
  %v4862 = vunpack.c.h.b16 %v4778
  %v4863 = vunpack.c.l.b16 %v4779
  %v4864 = vunpack.c.h.b16 %v4779
  %v4865 = vunpack.c.l.b16 %v4780
  %v4866 = vunpack.c.h.b16 %v4780
  %v4867 = vunpack.c.l.b16 %v4781
  %v4868 = vunpack.c.h.b16 %v4781
  %v4869 = vunpack.c.l.b16 %v4782
  %v4870 = vunpack.c.h.b16 %v4782
  %v4871 = vunpack.c.l.b16 %v4783
  %v4872 = vunpack.c.h.b16 %v4783
  %v4873 = vunpack.c.l.b16 %v4784
  %v4874 = vunpack.c.h.b16 %v4784
  %v4875 = vunpack.c.l.b16 %v4785
  %v4876 = vunpack.c.h.b16 %v4785
  %v4877 = vunpack.c.l.b16 %v4786
  %v4878 = vunpack.c.h.b16 %v4786
  %v4879 = vunpack.c.l.b16 %v4787
  %v4880 = vunpack.c.h.b16 %v4787
  %v4881 = vunpack.c.l.b16 %v4788
  %v4882 = vunpack.c.h.b16 %v4788
  %v4883 = vunpack.c.l.b16 %v4789
  %v4884 = vunpack.c.h.b16 %v4789
  %v4885 = vunpack.c.l.b16 %v4790
  %v4886 = vunpack.c.h.b16 %v4790
  %v4887 = vpack.c.b16 %v4827, %v4823
  %v4888 = vpack.c.b16 %v4828, %v4824
  %v4889 = vpack.c.b16 %v4829, %v4825
  %v4890 = vpack.c.b16 %v4830, %v4826
  %v4891 = vpack.c.b16 %v4835, %v4831
  %v4892 = vpack.c.b16 %v4836, %v4832
  %v4893 = vpack.c.b16 %v4837, %v4833
  %v4894 = vpack.c.b16 %v4838, %v4834
  %v4895 = vpack.c.b16 %v4843, %v4839
  %v4896 = vpack.c.b16 %v4844, %v4840
  %v4897 = vpack.c.b16 %v4845, %v4841
  %v4898 = vpack.c.b16 %v4846, %v4842
  %v4899 = vpack.c.b16 %v4851, %v4847
  %v4900 = vpack.c.b16 %v4852, %v4848
  %v4901 = vpack.c.b16 %v4853, %v4849
  %v4902 = vpack.c.b16 %v4854, %v4850
  %v4903 = vpack.c.b16 %v4859, %v4855
  %v4904 = vpack.c.b16 %v4860, %v4856
  %v4905 = vpack.c.b16 %v4861, %v4857
  %v4906 = vpack.c.b16 %v4862, %v4858
  %v4907 = vpack.c.b16 %v4867, %v4863
  %v4908 = vpack.c.b16 %v4868, %v4864
  %v4909 = vpack.c.b16 %v4869, %v4865
  %v4910 = vpack.c.b16 %v4870, %v4866
  %v4911 = vpack.c.b16 %v4875, %v4871
  %v4912 = vpack.c.b16 %v4876, %v4872
  %v4913 = vpack.c.b16 %v4877, %v4873
  %v4914 = vpack.c.b16 %v4878, %v4874
  %v4915 = vpack.c.b16 %v4883, %v4879
  %v4916 = vpack.c.b16 %v4884, %v4880
  %v4917 = vpack.c.b16 %v4885, %v4881
  %v4918 = vpack.c.b16 %v4886, %v4882
  %4951 = vmatprep.subr.bf16.mxu0 %v4888
  %4952 = vmatpush1.bf16.msra.mxu0 %v4887
  %4953 = vmatprep.subr.bf16.mxu0 %v4892
  %4954 = vmatpush1.bf16.msra.mxu0 %v4891
  %4955 = vmatprep.subr.bf16.mxu0 %v4896
  %4956 = vmatpush1.bf16.msra.mxu0 %v4895
  %4957 = vmatprep.subr.bf16.mxu0 %v4900
  %4958 = vmatpush1.bf16.msra.mxu0 %v4899
  %4959 = vmatprep.subr.bf16.mxu0 %v4904
  %4960 = vmatpush1.bf16.msra.mxu0 %v4903
  %4961 = vmatprep.subr.bf16.mxu0 %v4908
  %4962 = vmatpush1.bf16.msra.mxu0 %v4907
  %4963 = vmatprep.subr.bf16.mxu0 %v4912
  %4964 = vmatpush1.bf16.msra.mxu0 %v4911
  %4965 = vmatprep.subr.bf16.mxu0 %v4916
  %4966 = vmatpush1.bf16.msra.mxu0 %v4915
  %4967 = vmatprep.subr.bf16.mxu0 0
  %4968 = vmatpush1.bf16.msra.mxu0 0
  %4969 = vmatprep.subr.bf16.mxu0 0
  %4970 = vmatpush1.bf16.msra.mxu0 0
  %4971 = vmatprep.subr.bf16.mxu0 0
  %4972 = vmatpush1.bf16.msra.mxu0 0
  %4973 = vmatprep.subr.bf16.mxu0 0
  %4974 = vmatpush1.bf16.msra.mxu0 0
  %4975 = vmatprep.subr.bf16.mxu0 0
  %4976 = vmatpush1.bf16.msra.mxu0 0
  %4977 = vmatprep.subr.bf16.mxu0 0
  %4978 = vmatpush1.bf16.msra.mxu0 0
  %4979 = vmatprep.subr.bf16.mxu0 0
  %4980 = vmatpush1.bf16.msra.mxu0 0
  %4981 = vmatprep.subr.bf16.mxu0 0
  %4982 = vmatpush1.bf16.msra.mxu0 0
  %4983 = vmatprep.mubr.bf16.mxu0 0
  %4984 = vmatmul.mubr.bf16.gmra.mrb[0].mxu0 %v4441
  %v4985 = vpop.f32.mrb[0].mxu0
  %v4986 = vadd.f32 0.0, %v4985
  %v4987 = vpop.f32.mrb[0].mxu0
  %v4988 = vadd.f32 0.0, %v4987
  %v4989 = vpop.f32.mrb[0].mxu0
  %v4990 = vpop.f32.mrb[0].mxu0
  %4991 = vdwg.mxu0
  %4992 = vmatprep.subr.bf16.mxu0 %v4890
  %4993 = vmatpush1.bf16.msra.mxu0 %v4889
  %4994 = vmatprep.subr.bf16.mxu0 %v4894
  %4995 = vmatpush1.bf16.msra.mxu0 %v4893
  %4996 = vmatprep.subr.bf16.mxu0 %v4898
  %4997 = vmatpush1.bf16.msra.mxu0 %v4897
  %4998 = vmatprep.subr.bf16.mxu0 %v4902
  %4999 = vmatpush1.bf16.msra.mxu0 %v4901
  %5000 = vmatprep.subr.bf16.mxu0 %v4906
  %5001 = vmatpush1.bf16.msra.mxu0 %v4905
  %5002 = vmatprep.subr.bf16.mxu0 %v4910
  %5003 = vmatpush1.bf16.msra.mxu0 %v4909
  %5004 = vmatprep.subr.bf16.mxu0 %v4914
  %5005 = vmatpush1.bf16.msra.mxu0 %v4913
  %5006 = vmatprep.subr.bf16.mxu0 %v4918
  %5007 = vmatpush1.bf16.msra.mxu0 %v4917
  %5008 = vmatprep.subr.bf16.mxu0 0
  %5009 = vmatpush1.bf16.msra.mxu0 0
  %5010 = vmatprep.subr.bf16.mxu0 0
  %5011 = vmatpush1.bf16.msra.mxu0 0
  %5012 = vmatprep.subr.bf16.mxu0 0
  %5013 = vmatpush1.bf16.msra.mxu0 0
  %5014 = vmatprep.subr.bf16.mxu0 0
  %5015 = vmatpush1.bf16.msra.mxu0 0
  %5016 = vmatprep.subr.bf16.mxu0 0
  %5017 = vmatpush1.bf16.msra.mxu0 0
  %5018 = vmatprep.subr.bf16.mxu0 0
  %5019 = vmatpush1.bf16.msra.mxu0 0
  %5020 = vmatprep.subr.bf16.mxu0 0
  %5021 = vmatpush1.bf16.msra.mxu0 0
  %5022 = vmatprep.subr.bf16.mxu0 0
  %5023 = vmatpush1.bf16.msra.mxu0 0
  %5024 = vmatprep.mubr.bf16.mxu0 0
  %5025 = vmatmul.mubr.bf16.gmra.mrb[0].mxu0 %v4441
  %v5026 = vpop.f32.mrb[0].mxu0
  %v5027 = vadd.f32 0.0, %v5026
  %v5028 = vpop.f32.mrb[0].mxu0
  %v5029 = vadd.f32 0.0, %v5028
  %v5030 = vpop.f32.mrb[0].mxu0
  %v5031 = vpop.f32.mrb[0].mxu0
  %5032 = vdwg.mxu0
  %v5033 = vadd.f32 %v4755, %v4986
  %v5034 = vadd.f32 %v4756, %v4988
  %v5035 = vadd.f32 %v4757, %v5027
  %v5036 = vadd.f32 %v4758, %v5029
  %v5037 = vxor.u32 %v5033, 2147483648
  %v5038 = vmul.f32 %v5037, 1.442695
  %v5039 = vpow.pop %v5038
  %v5040 = vadd.f32 %v5039, 1.0
  %v5041 = vrcp.pop %v5040
  %v5042 = vmul.f32 1.0, %v5041
  %v5043 = vxor.u32 %v5034, 2147483648
  %v5044 = vmul.f32 %v5043, 1.442695
  %v5045 = vpow.pop %v5044
  %v5046 = vadd.f32 %v5045, 1.0
  %v5047 = vrcp.pop %v5046
  %v5048 = vmul.f32 1.0, %v5047
  %v5049 = vtanh.pop %v5035
  %v5050 = vxor.u32 %v5036, 2147483648
  %v5051 = vmul.f32 %v5050, 1.442695
  %v5052 = vpow.pop %v5051
  %v5053 = vadd.f32 %v5052, 1.0
  %v5054 = vrcp.pop %v5053
  %v5055 = vmul.f32 1.0, %v5054
  %v5056 = vmul.f32 %v5048, %v4435
  %v5057 = vmul.f32 %v5042, %v5049
  %v5058 = vadd.f32 %v5056, %v5057
  %v5059 = vtanh.pop %v5058
  %v5060 = vmul.f32 %v5055, %v5059
  %v5061 = vpack.c.bf16 %v4752, %v4752
  %s5062 = scalar_lea.vmem %s4, 28
  %5063 = vst [vmem:[%s5062] sm:$0xf] %v5061
  %v5064 = vpack.c.bf16 %v5060, %v5060
  %5065 = vst [vmem:[%s60] sm:$0xf] %v5064
  %5066 = vst [vmem:[#allocation2] sm:$0xff] %v4752
  %5067 = vst [vmem:[#allocation3] sm:$0xff] %v4750
  %5068 = vst [vmem:[#allocation4] sm:$0xff] %v5060
  %5069 = vst [vmem:[#allocation5] sm:$0xff] %v5058
  // Predicated region
  $region22: #{encoder_forward.3} parent=0 // pred_check
    %p5070 = pneg %p64
  $region23: #{encoder_forward.3} parent=0 // pred_check_branch
    %5072 = sbr.rel (%p5070) target = $region25
  $region24: #{encoder_forward.3} parent=0 // pred_region
    %5073 = vst [vmem:[%s6] sm:$0xff] %v4750
    %5074 = vst [vmem:[%s7] sm:$0xff] %v5058
  $region25: #{encoder_forward.3} parent=0 // pred_fallthru
    _
  %s5075 = ssub.s32 0, 0
  %s5076 = smul.u32 8, %s5075
  %p5077 = scmp.lt.s32.totalorder %s5076, 7
  %s5078 = scalar_select %p5077, %s5076, 7
  %s5079 = smul.addr %s5078, 4
  %s5080 = scalar_lea.vmem %s5, %s5079
  // Predicated region
  $region26: #{encoder_forward.3} parent=0 // pred_check
    _
  $region27: #{encoder_forward.3} parent=0 // pred_check_branch
    %5082 = sbr.rel (0) target = $region29
  $region28: #{encoder_forward.3} parent=0 // pred_region
    _
  $region29: #{encoder_forward.3} parent=0 // pred_fallthru
    _
  // Predicated region
  $region30: #{encoder_forward.3} parent=0 // pred_check
    _
  $region31: #{encoder_forward.3} parent=0 // pred_check_branch
    %5084 = sbr.rel (0) target = $region33
  $region32: #{encoder_forward.3} parent=0 // pred_region
    %s5085 = ssub.s32 0, 0
    %s5086 = smul.u32 8, %s5085
  $region33: #{encoder_forward.3} parent=0 // pred_fallthru
    _
  // Predicated region
  $region34: #{encoder_forward.3} parent=0 // pred_check
    _
  $region35: #{encoder_forward.3} parent=0 // pred_check_branch
    %5088 = sbr.rel (0) target = $region37
  $region36: #{encoder_forward.3} parent=0 // pred_region
    _
  $region37: #{encoder_forward.3} parent=0 // pred_fallthru
    _
  // Predicated region
  $region38: #{encoder_forward.3} parent=0 // pred_check
    _
  $region39: #{encoder_forward.3} parent=0 // pred_check_branch
    %5090 = sbr.rel (0) target = $region41
  $region40: #{encoder_forward.3} parent=0 // pred_region
    _
  $region41: #{encoder_forward.3} parent=0 // pred_fallthru
    _
  // Predicated region
  $region42: #{encoder_forward.3} parent=0 // pred_check
    _
  $region43: #{encoder_forward.3} parent=0 // pred_check_branch
    %5092 = sbr.rel (0) target = $region45
  $region44: #{encoder_forward.3} parent=0 // pred_region
    _
  $region45: #{encoder_forward.3} parent=0 // pred_fallthru
    _
  // Predicated region
  $region46: #{encoder_forward.3} parent=0 // pred_check
    _
  $region47: #{encoder_forward.3} parent=0 // pred_check_branch
    %5094 = sbr.rel (0) target = $region49
  $region48: #{encoder_forward.3} parent=0 // pred_region
    %s5095 = ssub.s32 0, 0
    %s5096 = smul.u32 8, %s5095
    %p5097 = scmp.lt.s32.totalorder %s5096, 7
    %s5098 = scalar_select %p5097, %s5096, 7
    %s5099 = smul.addr %s5098, 4
    %s5100 = scalar_lea.vmem %s5, %s5099
  $region49: #{encoder_forward.3} parent=0 // pred_fallthru
    _
  // Predicated region
  $region50: #{encoder_forward.3} parent=0 // pred_check
    _
  $region51: #{encoder_forward.3} parent=0 // pred_check_branch
    %5102 = sbr.rel (0) target = $region53
  $region52: #{encoder_forward.3} parent=0 // pred_region
    _
  $region53: #{encoder_forward.3} parent=0 // pred_fallthru
    _
  // Predicated region
  $region54: #{encoder_forward.3} parent=0 // pred_check
    _
  $region55: #{encoder_forward.3} parent=0 // pred_check_branch
    %5104 = sbr.rel (0) target = $region57
  $region56: #{encoder_forward.3} parent=0 // pred_region
    _
  $region57: #{encoder_forward.3} parent=0 // pred_fallthru
    _

</llo_original>
